<compile_context>
chip_gen: v6e
topology: v6e:2x2x1
jax: 0.10.0
libtpu: 0.0.40
codegen_flags: <defaults>
</compile_context>

<pallas_src>
import functools

import jax
import jax.numpy as jnp
from jax.experimental import pallas as pl
from jax.experimental.pallas import tpu as pltpu


# ----------------------------------------------------------------------------
# Pallas kernel: whole decoder chain, fused, for one (batch, point-tile).
# All activations are (channels, tn): channels on sublanes, points on lanes.
# ----------------------------------------------------------------------------
def naive_decoder_kernel(
    x_ref, bp_ref, bm_ref, bo_ref,
    wp_x_ref, wm_net_ref,
    wr1_ref, br1_ref, wr2_ref, br2_ref,
    wo_net_ref,
    o_ref,
    *, n_blocks, mm_dtype):
  f32 = jnp.float32

  def mm(w, a):
    # Weights are already stored in mm_dtype; cast activations only at the
    # matmul input (elementwise work stays f32), accumulate in f32 on the MXU.
    return jnp.dot(w, a.astype(mm_dtype), preferred_element_type=f32)

  xb = x_ref[0]                                      # (dim, TN)

  # conv_p(cat([x, latent])) -- latent part pre-folded into bp_ref.
  net = mm(wp_x_ref[...], xb) + bp_ref[0]            # (hidden, TN)

  bm_all = bm_ref[0]                                 # (n_blocks, hidden, 1)
  # Static unroll: n_blocks is small.
  # TODO(synk): switch to lax.fori_loop(..., unroll=True) over the stacked
  # weight leading axis if n_blocks grows beyond ~4 (bounds vreg live ranges).
  for i in range(n_blocks):
    # map_blocks[i](cat([net, latent])) ; ReLU   (latent folded into bm)
    net = mm(wm_net_ref[i], net) + bm_all[i]
    net = jnp.maximum(net, 0.0)

    # ResNetLayers: conv1+bn1 (folded) -> relu -> conv2+bn2 (folded); residual
    h = mm(wr1_ref[i], net) + br1_ref[i]
    h = jnp.maximum(h, 0.0)
    h = mm(wr2_ref[i], h) + br2_ref[i]
    net = jnp.maximum(net + h, 0.0)

  # conv_out(cat([net, latent])) -- same channel-major pattern, lane-dense out.
  out = mm(wo_net_ref[...], net) + bo_ref[0]         # (out_dim, TN)
  o_ref[0] = out.astype(o_ref.dtype)


# ----------------------------------------------------------------------------
# Wrapper
# ----------------------------------------------------------------------------
def naive_decoder_pallas(x, latent, p, *, tn=1024, weight_dtype=jnp.bfloat16):
  """x: (B, N, dim) point-major (pre-transpose PyTorch input).

  weight_dtype: jnp.bfloat16 for v6e/v7x (MXU-native, halves weight traffic);
  use jnp.float32 on v5e or when tight numerics vs. the reference are needed.
  """
  B, N, dim = x.shape
  if latent.ndim == 3:                     # (B, c_dim, 1) -> (B, c_dim)
    latent = latent[:, :, 0]
  lat = latent.astype(jnp.float32)

  hidden = p["wp_x"].shape[0]
  out_dim = p["wo_net"].shape[0]
  n_blocks = p["wm_net"].shape[0]

  tn = min(tn, N)
  assert N % tn == 0, (N, tn)
  assert tn % 128 == 0 or tn == N, (N, tn)   # lane-dense point tile

  # One cheap XLA transpose to NCL so the kernel x tile is (dim, tn) lane-dense.
  x_ncl = jnp.transpose(x.astype(jnp.float32), (0, 2, 1))      # (B, dim, N)

  # Per-batch-constant latent contributions folded into effective biases
  # (tiny XLA einsums, once per call instead of once per grid step).
  bp_eff = (jnp.einsum("hc,bc->bh", p["wp_l"], lat)
            + p["bp"]).reshape(B, hidden, 1)
  bm_eff = (jnp.einsum("khc,bc->bkh", p["wm_lat"], lat)
            + p["bm"][None]).reshape(B, n_blocks, hidden, 1)
  bo_eff = (jnp.einsum("oc,bc->bo", p["wo_lat"], lat)
            + p["bo"]).reshape(B, out_dim, 1)

  br1 = p["br1"].reshape(n_blocks, hidden, 1)
  br2 = p["br2"].reshape(n_blocks, hidden, 1)

  wd = jnp.dtype(weight_dtype)
  weights = [p["wp_x"].astype(wd), p["wm_net"].astype(wd),
             p["wr1"].astype(wd), br1,               # biases stay f32
             p["wr2"].astype(wd), br2,
             p["wo_net"].astype(wd)]

  def full_spec(a):
    nd = a.ndim
    # Grid-invariant weights; default double-buffering kept (they are tiny).
    return pl.BlockSpec(a.shape, lambda b, n, _nd=nd: (0,) * _nd)

  in_specs = [
      pl.BlockSpec((1, dim, tn), lambda b, n: (b, 0, n)),            # x NCL
      pl.BlockSpec((1, hidden, 1), lambda b, n: (b, 0, 0)),          # bp_eff
      pl.BlockSpec((1, n_blocks, hidden, 1), lambda b, n: (b, 0, 0, 0)),
      pl.BlockSpec((1, out_dim, 1), lambda b, n: (b, 0, 0)),         # bo_eff
  ] + [full_spec(w) for w in weights]

  # VMEM budget from the actual tile/activation footprint (+ headroom),
  # capped at 64 MiB so it is also valid on v7x.
  def _pad8(c):
    return -(-c // 8) * 8
  act_bytes = (2 * _pad8(dim) + 2 * _pad8(out_dim) + 4 * _pad8(hidden)) * tn * 4
  w_bytes = sum(int(w.size) * w.dtype.itemsize for w in weights)
  b_bytes = (hidden * (1 + n_blocks) + out_dim) * 128 * 4
  vmem_limit = int(min(64 << 20,
                       max(4 * (act_bytes + w_bytes + b_bytes) + (8 << 20),
                           32 << 20)))

  # grid=(B, N//tn): both axes parallel; choose tn so B*(N//tn) is even for
  # v7x's 2 TensorCores (the test uses (2, 2)).
  grid = (B, N // tn)
  out = pl.pallas_call(
      functools.partial(naive_decoder_kernel, n_blocks=n_blocks, mm_dtype=wd),
      out_shape=jax.ShapeDtypeStruct((B, out_dim, N), jnp.float32),
      grid=grid,
      in_specs=in_specs,
      out_specs=pl.BlockSpec((1, out_dim, tn), lambda b, n: (b, 0, n)),
      compiler_params=pltpu.CompilerParams(
          dimension_semantics=("parallel", "parallel"),
          vmem_limit_bytes=vmem_limit),
  )(x_ncl, bp_eff, bm_eff, bo_eff, *weights)
  return out                                # (B, out_dim, N)


# ----------------------------------------------------------------------------
# Deterministic parameter construction (raw = PyTorch-style, kern = folded,
# channel-major: every weight stays in PyTorch's (out_ch, in_ch) layout).
# ----------------------------------------------------------------------------
def init_params(key, dim, c_dim, hidden, out_dim, n_blocks, eps=1e-5):
  keys = iter(jax.random.split(key, 32))

  def w(shape, scale=0.1):
    return scale * jax.random.normal(next(keys), shape, dtype=jnp.float32)

  raw = dict(
      Wp=w((hidden, dim + c_dim)), bp=w((hidden,)),
      Wm=w((n_blocks, hidden, hidden + c_dim)), bm=w((n_blocks, hidden)),
      Wr1=w((n_blocks, hidden, hidden)), br1=w((n_blocks, hidden)),
      Wr2=w((n_blocks, hidden, hidden)), br2=w((n_blocks, hidden)),
      g1=1.0 + w((n_blocks, hidden)), be1=w((n_blocks, hidden)),
      m1=w((n_blocks, hidden)), v1=jnp.abs(w((n_blocks, hidden))) + 0.5,
      g2=1.0 + w((n_blocks, hidden)), be2=w((n_blocks, hidden)),
      m2=w((n_blocks, hidden)), v2=jnp.abs(w((n_blocks, hidden))) + 0.5,
      Wo=w((out_dim, hidden + c_dim)), bo=w((out_dim,)),
  )

  # Eval-mode BN folded into the preceding conv (per output channel).
  s1 = raw["g1"] / jnp.sqrt(raw["v1"] + eps)
  t1 = raw["be1"] - raw["m1"] * s1
  s2 = raw["g2"] / jnp.sqrt(raw["v2"] + eps)
  t2 = raw["be2"] - raw["m2"] * s2

  kern = dict(
      wp_x=raw["Wp"][:, :dim],                              # (hidden, dim)
      wp_l=raw["Wp"][:, dim:],                              # (hidden, c_dim)
      bp=raw["bp"],                                         # (hidden,)
      wm_net=raw["Wm"][:, :, :hidden],                      # (nb, hidden, hidden)
      wm_lat=raw["Wm"][:, :, hidden:],                      # (nb, hidden, c_dim)
      bm=raw["bm"],                                         # (nb, hidden)
      wr1=raw["Wr1"] * s1[:, :, None],                      # BN1 folded
      br1=raw["br1"] * s1 + t1,
      wr2=raw["Wr2"] * s2[:, :, None],                      # BN2 folded
      br2=raw["br2"] * s2 + t2,
      wo_net=raw["Wo"][:, :hidden],                         # (out_dim, hidden)
      wo_lat=raw["Wo"][:, hidden:],                         # (out_dim, c_dim)
      bo=raw["bo"],                                         # (out_dim,)
  )
  return raw, kern


# ----------------------------------------------------------------------------
# Pure-JAX reference mirroring the PyTorch forward (NCL layout, eval-mode BN)
# ----------------------------------------------------------------------------
def naive_decoder_ref(x, latent3, raw, eps=1e-5):
  B, N, _ = x.shape
  c_dim = latent3.shape[1]
  xt = jnp.transpose(x, (0, 2, 1))                      # (B, dim, N)
  lat = jnp.broadcast_to(latent3, (B, c_dim, N))        # latent.repeat(1,1,N)

  def conv(wt, b, z):
    return jnp.einsum("oc,bcn->bon", wt, z) + b[None, :, None]

  def bn(g, be, m, v, z):
    return (z - m[None, :, None]) / jnp.sqrt(v[None, :, None] + eps) \
        * g[None, :, None] + be[None, :, None]

  net = conv(raw["Wp"], raw["bp"], jnp.concatenate([xt, lat], axis=1))
  n_blocks = raw["Wm"].shape[0]
  for i in range(n_blocks):
    net = conv(raw["Wm"][i], raw["bm"][i],
               jnp.concatenate([net, lat], axis=1))
    net = jax.nn.relu(net)
    h = conv(raw["Wr1"][i], raw["br1"][i], net)
    h = bn(raw["g1"][i], raw["be1"][i], raw["m1"][i], raw["v1"][i], h)
    h = jax.nn.relu(h)
    h = conv(raw["Wr2"][i], raw["br2"][i], h)
    h = bn(raw["g2"][i], raw["be2"][i], raw["m2"][i], raw["v2"][i], h)
    net = net + h
    net = jax.nn.relu(net)
  return conv(raw["Wo"], raw["bo"], jnp.concatenate([net, lat], axis=1))


if __name__ == "__main__":
  # NaiveDecoder(dim, c_dim, output_dim, hidden, n_blocks) at small shapes.
  # tn=512 -> grid (B, N//tn) = (2, 2): even split across v7x's 2 TensorCores.
  B, N = 2, 1024
  dim, c_dim, hidden, out_dim, n_blocks = 3, 32, 64, 1, 2

  key = jax.random.PRNGKey(0)
  kx, kl, kp = jax.random.split(key, 3)
  x = jax.random.normal(kx, (B, N, dim), dtype=jnp.float32)      # PyTorch x
  latent3 = jax.random.normal(kl, (B, c_dim, 1), dtype=jnp.float32)

  raw, kern = init_params(kp, dim, c_dim, hidden, out_dim, n_blocks)
  ref = jax.block_until_ready(naive_decoder_ref(x, latent3, raw))

  # f32 path: tight check against the PyTorch-style reference.
  out_f32 = jax.block_until_ready(
      naive_decoder_pallas(x, latent3, kern, tn=512, weight_dtype=jnp.float32))
  assert out_f32.shape == (B, out_dim, N), out_f32.shape
  assert jnp.allclose(out_f32, ref, atol=1e-3, rtol=1e-3), \
      float(jnp.max(jnp.abs(out_f32 - ref)))

  # bf16-weight path (v6e/v7x MXU-native), f32 accumulation: looser tolerance.
  out_bf16 = jax.block_until_ready(
      naive_decoder_pallas(x, latent3, kern, tn=512, weight_dtype=jnp.bfloat16))
  assert out_bf16.shape == (B, out_dim, N), out_bf16.shape
  assert jnp.allclose(out_bf16, ref, atol=5e-2, rtol=5e-2), \
      float(jnp.max(jnp.abs(out_bf16 - ref)))

  print("KERNEL_OK")
</pallas_src>

<mosaic_0001>
module attributes {stable_mosaic.version = 11 : i64} {
  func.func @naive_decoder_kernel(%arg0: i32, %arg1: i32, %arg2: memref<1x3x512xf32, #tpu.memory_space<vmem>>, %arg3: memref<1x64x1xf32, #tpu.memory_space<vmem>>, %arg4: memref<1x2x64x1xf32, #tpu.memory_space<vmem>>, %arg5: memref<1x1x1xf32, #tpu.memory_space<vmem>>, %arg6: memref<64x3xf32, #tpu.memory_space<vmem>>, %arg7: memref<2x64x64xf32, #tpu.memory_space<vmem>>, %arg8: memref<2x64x64xf32, #tpu.memory_space<vmem>>, %arg9: memref<2x64x1xf32, #tpu.memory_space<vmem>>, %arg10: memref<2x64x64xf32, #tpu.memory_space<vmem>>, %arg11: memref<2x64x1xf32, #tpu.memory_space<vmem>>, %arg12: memref<1x64xf32, #tpu.memory_space<vmem>>, %arg13: memref<1x1x512xf32, #tpu.memory_space<vmem>>) attributes {dimension_semantics = [#tpu.dimension_semantics<parallel>, #tpu.dimension_semantics<parallel>], iteration_bounds = array<i64: 2, 2>, scalar_prefetch = 0 : i64, scratch_operands = 0 : i64, tpu.core_type = #tpu.core_type<tc>, window_params = [{transform_indices = @transform_0, window_bounds = array<i64: 1, 3, 512>}, {transform_indices = @transform_1, window_bounds = array<i64: 1, 64, 1>}, {transform_indices = @transform_2, window_bounds = array<i64: 1, 2, 64, 1>}, {transform_indices = @transform_3, window_bounds = array<i64: 1, 1, 1>}, {pipeline_mode = #tpu.pipeline_mode<synchronous>, transform_indices = @transform_4, window_bounds = array<i64: 64, 3>}, {pipeline_mode = #tpu.pipeline_mode<synchronous>, transform_indices = @transform_5, window_bounds = array<i64: 2, 64, 64>}, {pipeline_mode = #tpu.pipeline_mode<synchronous>, transform_indices = @transform_6, window_bounds = array<i64: 2, 64, 64>}, {pipeline_mode = #tpu.pipeline_mode<synchronous>, transform_indices = @transform_7, window_bounds = array<i64: 2, 64, 1>}, {pipeline_mode = #tpu.pipeline_mode<synchronous>, transform_indices = @transform_8, window_bounds = array<i64: 2, 64, 64>}, {pipeline_mode = #tpu.pipeline_mode<synchronous>, transform_indices = @transform_9, window_bounds = array<i64: 2, 64, 1>}, {pipeline_mode = #tpu.pipeline_mode<synchronous>, transform_indices = @transform_10, window_bounds = array<i64: 1, 64>}, {transform_indices = @transform_11, window_bounds = array<i64: 1, 1, 512>}]} {
    %c0 = arith.constant 0 : index
    %c0_0 = arith.constant 0 : index
    %c0_1 = arith.constant 0 : index
    %0 = vector.load %arg2[%c0, %c0_0, %c0_1] : memref<1x3x512xf32, #tpu.memory_space<vmem>>, vector<1x3x512xf32>
    %1 = vector.shape_cast %0 : vector<1x3x512xf32> to vector<3x512xf32>
    %c0_2 = arith.constant 0 : index
    %c0_3 = arith.constant 0 : index
    %2 = vector.load %arg6[%c0_2, %c0_3] : memref<64x3xf32, #tpu.memory_space<vmem>>, vector<64x3xf32>
    %cst = arith.constant dense<0.000000e+00> : vector<64x512xf32>
    %3 = tpu.matmul %2, %1, %cst {dimension_numbers = #tpu.dot_dimension_numbers<[1], [0], [0], [1], [0, 0, 1, 1], [], []>} : vector<64x3xf32>, vector<3x512xf32>, vector<64x512xf32> -> vector<64x512xf32>
    %c0_4 = arith.constant 0 : index
    %c0_5 = arith.constant 0 : index
    %c0_6 = arith.constant 0 : index
    %4 = vector.load %arg3[%c0_4, %c0_5, %c0_6] : memref<1x64x1xf32, #tpu.memory_space<vmem>>, vector<1x64x1xf32>
    %5 = vector.shape_cast %4 : vector<1x64x1xf32> to vector<64x1xf32>
    %6 = vector.broadcast %5 : vector<64x1xf32> to vector<64x512xf32>
    %7 = arith.addf %3, %6 : vector<64x512xf32>
    %c0_7 = arith.constant 0 : index
    %c0_8 = arith.constant 0 : index
    %c0_9 = arith.constant 0 : index
    %c0_10 = arith.constant 0 : index
    %8 = vector.load %arg4[%c0_7, %c0_8, %c0_9, %c0_10] : memref<1x2x64x1xf32, #tpu.memory_space<vmem>>, vector<1x2x64x1xf32>
    %9 = vector.shape_cast %8 : vector<1x2x64x1xf32> to vector<2x64x1xf32>
    %c0_11 = arith.constant 0 : index
    %c0_12 = arith.constant 0 : index
    %c0_13 = arith.constant 0 : index
    %10 = vector.load %arg7[%c0_11, %c0_12, %c0_13] : memref<2x64x64xf32, #tpu.memory_space<vmem>>, vector<1x64x64xf32>
    %11 = vector.shape_cast %10 : vector<1x64x64xf32> to vector<64x64xf32>
    %cst_14 = arith.constant dense<0.000000e+00> : vector<64x512xf32>
    %12 = tpu.matmul %11, %7, %cst_14 {dimension_numbers = #tpu.dot_dimension_numbers<[1], [0], [0], [1], [0, 0, 1, 1], [], []>} : vector<64x64xf32>, vector<64x512xf32>, vector<64x512xf32> -> vector<64x512xf32>
    %13 = vector.extract_strided_slice %9 {offsets = [0, 0, 0], sizes = [1, 64, 1], strides = [1, 1, 1]} : vector<2x64x1xf32> to vector<1x64x1xf32>
    %14 = vector.shape_cast %13 : vector<1x64x1xf32> to vector<64x1xf32>
    %15 = vector.broadcast %14 : vector<64x1xf32> to vector<64x512xf32>
    %16 = arith.addf %12, %15 : vector<64x512xf32>
    %cst_15 = arith.constant 0.000000e+00 : f32
    %17 = vector.broadcast %cst_15 : f32 to vector<64x512xf32>
    %18 = arith.maximumf %16, %17 : vector<64x512xf32>
    %c0_16 = arith.constant 0 : index
    %c0_17 = arith.constant 0 : index
    %c0_18 = arith.constant 0 : index
    %19 = vector.load %arg8[%c0_16, %c0_17, %c0_18] : memref<2x64x64xf32, #tpu.memory_space<vmem>>, vector<1x64x64xf32>
    %20 = vector.shape_cast %19 : vector<1x64x64xf32> to vector<64x64xf32>
    %cst_19 = arith.constant dense<0.000000e+00> : vector<64x512xf32>
    %21 = tpu.matmul %20, %18, %cst_19 {dimension_numbers = #tpu.dot_dimension_numbers<[1], [0], [0], [1], [0, 0, 1, 1], [], []>} : vector<64x64xf32>, vector<64x512xf32>, vector<64x512xf32> -> vector<64x512xf32>
    %c0_20 = arith.constant 0 : index
    %c0_21 = arith.constant 0 : index
    %c0_22 = arith.constant 0 : index
    %22 = vector.load %arg9[%c0_20, %c0_21, %c0_22] : memref<2x64x1xf32, #tpu.memory_space<vmem>>, vector<1x64x1xf32>
    %23 = vector.shape_cast %22 : vector<1x64x1xf32> to vector<64x1xf32>
    %24 = vector.broadcast %23 : vector<64x1xf32> to vector<64x512xf32>
    %25 = arith.addf %21, %24 : vector<64x512xf32>
    %cst_23 = arith.constant 0.000000e+00 : f32
    %26 = vector.broadcast %cst_23 : f32 to vector<64x512xf32>
    %27 = arith.maximumf %25, %26 : vector<64x512xf32>
    %c0_24 = arith.constant 0 : index
    %c0_25 = arith.constant 0 : index
    %c0_26 = arith.constant 0 : index
    %28 = vector.load %arg10[%c0_24, %c0_25, %c0_26] : memref<2x64x64xf32, #tpu.memory_space<vmem>>, vector<1x64x64xf32>
    %29 = vector.shape_cast %28 : vector<1x64x64xf32> to vector<64x64xf32>
    %cst_27 = arith.constant dense<0.000000e+00> : vector<64x512xf32>
    %30 = tpu.matmul %29, %27, %cst_27 {dimension_numbers = #tpu.dot_dimension_numbers<[1], [0], [0], [1], [0, 0, 1, 1], [], []>} : vector<64x64xf32>, vector<64x512xf32>, vector<64x512xf32> -> vector<64x512xf32>
    %c0_28 = arith.constant 0 : index
    %c0_29 = arith.constant 0 : index
    %c0_30 = arith.constant 0 : index
    %31 = vector.load %arg11[%c0_28, %c0_29, %c0_30] : memref<2x64x1xf32, #tpu.memory_space<vmem>>, vector<1x64x1xf32>
    %32 = vector.shape_cast %31 : vector<1x64x1xf32> to vector<64x1xf32>
    %33 = vector.broadcast %32 : vector<64x1xf32> to vector<64x512xf32>
    %34 = arith.addf %30, %33 : vector<64x512xf32>
    %35 = arith.addf %18, %34 : vector<64x512xf32>
    %cst_31 = arith.constant 0.000000e+00 : f32
    %36 = vector.broadcast %cst_31 : f32 to vector<64x512xf32>
    %37 = arith.maximumf %35, %36 : vector<64x512xf32>
    %c1 = arith.constant 1 : index
    %c0_32 = arith.constant 0 : index
    %c0_33 = arith.constant 0 : index
    %38 = vector.load %arg7[%c1, %c0_32, %c0_33] : memref<2x64x64xf32, #tpu.memory_space<vmem>>, vector<1x64x64xf32>
    %39 = vector.shape_cast %38 : vector<1x64x64xf32> to vector<64x64xf32>
    %cst_34 = arith.constant dense<0.000000e+00> : vector<64x512xf32>
    %40 = tpu.matmul %39, %37, %cst_34 {dimension_numbers = #tpu.dot_dimension_numbers<[1], [0], [0], [1], [0, 0, 1, 1], [], []>} : vector<64x64xf32>, vector<64x512xf32>, vector<64x512xf32> -> vector<64x512xf32>
    %41 = vector.extract_strided_slice %9 {offsets = [1, 0, 0], sizes = [1, 64, 1], strides = [1, 1, 1]} : vector<2x64x1xf32> to vector<1x64x1xf32>
    %42 = vector.shape_cast %41 : vector<1x64x1xf32> to vector<64x1xf32>
    %43 = vector.broadcast %42 : vector<64x1xf32> to vector<64x512xf32>
    %44 = arith.addf %40, %43 : vector<64x512xf32>
    %cst_35 = arith.constant 0.000000e+00 : f32
    %45 = vector.broadcast %cst_35 : f32 to vector<64x512xf32>
    %46 = arith.maximumf %44, %45 : vector<64x512xf32>
    %c1_36 = arith.constant 1 : index
    %c0_37 = arith.constant 0 : index
    %c0_38 = arith.constant 0 : index
    %47 = vector.load %arg8[%c1_36, %c0_37, %c0_38] : memref<2x64x64xf32, #tpu.memory_space<vmem>>, vector<1x64x64xf32>
    %48 = vector.shape_cast %47 : vector<1x64x64xf32> to vector<64x64xf32>
    %cst_39 = arith.constant dense<0.000000e+00> : vector<64x512xf32>
    %49 = tpu.matmul %48, %46, %cst_39 {dimension_numbers = #tpu.dot_dimension_numbers<[1], [0], [0], [1], [0, 0, 1, 1], [], []>} : vector<64x64xf32>, vector<64x512xf32>, vector<64x512xf32> -> vector<64x512xf32>
    %c1_40 = arith.constant 1 : index
    %c0_41 = arith.constant 0 : index
    %c0_42 = arith.constant 0 : index
    %50 = vector.load %arg9[%c1_40, %c0_41, %c0_42] : memref<2x64x1xf32, #tpu.memory_space<vmem>>, vector<1x64x1xf32>
    %51 = vector.shape_cast %50 : vector<1x64x1xf32> to vector<64x1xf32>
    %52 = vector.broadcast %51 : vector<64x1xf32> to vector<64x512xf32>
    %53 = arith.addf %49, %52 : vector<64x512xf32>
    %cst_43 = arith.constant 0.000000e+00 : f32
    %54 = vector.broadcast %cst_43 : f32 to vector<64x512xf32>
    %55 = arith.maximumf %53, %54 : vector<64x512xf32>
    %c1_44 = arith.constant 1 : index
    %c0_45 = arith.constant 0 : index
    %c0_46 = arith.constant 0 : index
    %56 = vector.load %arg10[%c1_44, %c0_45, %c0_46] : memref<2x64x64xf32, #tpu.memory_space<vmem>>, vector<1x64x64xf32>
    %57 = vector.shape_cast %56 : vector<1x64x64xf32> to vector<64x64xf32>
    %cst_47 = arith.constant dense<0.000000e+00> : vector<64x512xf32>
    %58 = tpu.matmul %57, %55, %cst_47 {dimension_numbers = #tpu.dot_dimension_numbers<[1], [0], [0], [1], [0, 0, 1, 1], [], []>} : vector<64x64xf32>, vector<64x512xf32>, vector<64x512xf32> -> vector<64x512xf32>
    %c1_48 = arith.constant 1 : index
    %c0_49 = arith.constant 0 : index
    %c0_50 = arith.constant 0 : index
    %59 = vector.load %arg11[%c1_48, %c0_49, %c0_50] : memref<2x64x1xf32, #tpu.memory_space<vmem>>, vector<1x64x1xf32>
    %60 = vector.shape_cast %59 : vector<1x64x1xf32> to vector<64x1xf32>
    %61 = vector.broadcast %60 : vector<64x1xf32> to vector<64x512xf32>
    %62 = arith.addf %58, %61 : vector<64x512xf32>
    %63 = arith.addf %46, %62 : vector<64x512xf32>
    %cst_51 = arith.constant 0.000000e+00 : f32
    %64 = vector.broadcast %cst_51 : f32 to vector<64x512xf32>
    %65 = arith.maximumf %63, %64 : vector<64x512xf32>
    %c0_52 = arith.constant 0 : index
    %c0_53 = arith.constant 0 : index
    %66 = vector.load %arg12[%c0_52, %c0_53] : memref<1x64xf32, #tpu.memory_space<vmem>>, vector<1x64xf32>
    %cst_54 = arith.constant dense<0.000000e+00> : vector<1x512xf32>
    %67 = tpu.matmul %66, %65, %cst_54 {dimension_numbers = #tpu.dot_dimension_numbers<[1], [0], [0], [1], [0, 0, 1, 1], [], []>} : vector<1x64xf32>, vector<64x512xf32>, vector<1x512xf32> -> vector<1x512xf32>
    %c0_55 = arith.constant 0 : index
    %c0_56 = arith.constant 0 : index
    %c0_57 = arith.constant 0 : index
    %68 = vector.load %arg5[%c0_55, %c0_56, %c0_57] : memref<1x1x1xf32, #tpu.memory_space<vmem>>, vector<1x1x1xf32>
    %69 = vector.shape_cast %68 : vector<1x1x1xf32> to vector<1x1xf32>
    %70 = vector.broadcast %69 : vector<1x1xf32> to vector<1x512xf32>
    %71 = arith.addf %67, %70 : vector<1x512xf32>
    %c0_58 = arith.constant 0 : index
    %c0_59 = arith.constant 0 : index
    %c0_60 = arith.constant 0 : index
    %72 = vector.load %arg13[%c0_58, %c0_59, %c0_60] : memref<1x1x512xf32, #tpu.memory_space<vmem>>, vector<1x1x512xf32>
    %73 = vector.shape_cast %72 : vector<1x1x512xf32> to vector<1x512xf32>
    %74 = vector.shape_cast %71 : vector<1x512xf32> to vector<1x1x512xf32>
    tpu.vector_store %arg13[%c0_58, %c0_59, %c0_60], %74 {strides = array<i32>} : memref<1x1x512xf32, #tpu.memory_space<vmem>>, vector<1x1x512xf32>,
    return
  }
  func.func @transform_0(%arg0: i32, %arg1: i32) -> (i32, i32, i32) {
    %c0_i32 = arith.constant 0 : i32
    %c0_i32_0 = arith.constant 0 : i32
    return %arg0, %c0_i32, %arg1 : i32, i32, i32
  }
  func.func @transform_1(%arg0: i32, %arg1: i32) -> (i32, i32, i32) {
    %c0_i32 = arith.constant 0 : i32
    %c0_i32_0 = arith.constant 0 : i32
    %c0_i32_1 = arith.constant 0 : i32
    return %arg0, %c0_i32, %c0_i32_0 : i32, i32, i32
  }
  func.func @transform_2(%arg0: i32, %arg1: i32) -> (i32, i32, i32, i32) {
    %c0_i32 = arith.constant 0 : i32
    %c0_i32_0 = arith.constant 0 : i32
    %c0_i32_1 = arith.constant 0 : i32
    %c0_i32_2 = arith.constant 0 : i32
    return %arg0, %c0_i32, %c0_i32_0, %c0_i32_1 : i32, i32, i32, i32
  }
  func.func @transform_3(%arg0: i32, %arg1: i32) -> (i32, i32, i32) {
    %c0_i32 = arith.constant 0 : i32
    %c0_i32_0 = arith.constant 0 : i32
    %c0_i32_1 = arith.constant 0 : i32
    return %arg0, %c0_i32, %c0_i32_0 : i32, i32, i32
  }
  func.func @transform_4(%arg0: i32, %arg1: i32) -> (i32, i32) {
    %c0_i32 = arith.constant 0 : i32
    %c0_i32_0 = arith.constant 0 : i32
    %c0_i32_1 = arith.constant 0 : i32
    return %c0_i32, %c0_i32_0 : i32, i32
  }
  func.func @transform_5(%arg0: i32, %arg1: i32) -> (i32, i32, i32) {
    %c0_i32 = arith.constant 0 : i32
    %c0_i32_0 = arith.constant 0 : i32
    %c0_i32_1 = arith.constant 0 : i32
    %c0_i32_2 = arith.constant 0 : i32
    return %c0_i32, %c0_i32_0, %c0_i32_1 : i32, i32, i32
  }
  func.func @transform_6(%arg0: i32, %arg1: i32) -> (i32, i32, i32) {
    %c0_i32 = arith.constant 0 : i32
    %c0_i32_0 = arith.constant 0 : i32
    %c0_i32_1 = arith.constant 0 : i32
    %c0_i32_2 = arith.constant 0 : i32
    return %c0_i32, %c0_i32_0, %c0_i32_1 : i32, i32, i32
  }
  func.func @transform_7(%arg0: i32, %arg1: i32) -> (i32, i32, i32) {
    %c0_i32 = arith.constant 0 : i32
    %c0_i32_0 = arith.constant 0 : i32
    %c0_i32_1 = arith.constant 0 : i32
    %c0_i32_2 = arith.constant 0 : i32
    return %c0_i32, %c0_i32_0, %c0_i32_1 : i32, i32, i32
  }
  func.func @transform_8(%arg0: i32, %arg1: i32) -> (i32, i32, i32) {
    %c0_i32 = arith.constant 0 : i32
    %c0_i32_0 = arith.constant 0 : i32
    %c0_i32_1 = arith.constant 0 : i32
    %c0_i32_2 = arith.constant 0 : i32
    return %c0_i32, %c0_i32_0, %c0_i32_1 : i32, i32, i32
  }
  func.func @transform_9(%arg0: i32, %arg1: i32) -> (i32, i32, i32) {
    %c0_i32 = arith.constant 0 : i32
    %c0_i32_0 = arith.constant 0 : i32
    %c0_i32_1 = arith.constant 0 : i32
    %c0_i32_2 = arith.constant 0 : i32
    return %c0_i32, %c0_i32_0, %c0_i32_1 : i32, i32, i32
  }
  func.func @transform_10(%arg0: i32, %arg1: i32) -> (i32, i32) {
    %c0_i32 = arith.constant 0 : i32
    %c0_i32_0 = arith.constant 0 : i32
    %c0_i32_1 = arith.constant 0 : i32
    return %c0_i32, %c0_i32_0 : i32, i32
  }
  func.func @transform_11(%arg0: i32, %arg1: i32) -> (i32, i32, i32) {
    %c0_i32 = arith.constant 0 : i32
    %c0_i32_0 = arith.constant 0 : i32
    return %arg0, %c0_i32, %arg1 : i32, i32, i32
  }
}

</mosaic_0001>

<llo_original>
// kernel: tpu_custom_call.1
$region0: #{tpu_custom_call.1}
  #allocation0 [shape = 'u32[]', space=smem, size = 0x4, offset = 0x4, fixed_abs, tag = 'smem constant byte address 0x4 - core index']
  #allocation1 [shape = 'u32[144,128]{1,0:T(1,128)}', space=vmem, size = 0x12000, scoped, tag = 'internal scratch']
  %s0 = inlined_call_operand.vmem [shape: f32[2,3,1024], index: 0, kind: input, shape index: {}]
  %s1 = inlined_call_operand.vmem [shape: f32[2,64,1], index: 1, kind: input, shape index: {}]
  %s2 = inlined_call_operand.vmem [shape: f32[2,2,64,1], index: 2, kind: input, shape index: {}]
  %s3 = inlined_call_operand.vmem [shape: f32[2,1,1], index: 3, kind: input, shape index: {}]
  %s4 = inlined_call_operand.vmem [shape: f32[64,3], index: 4, kind: input, shape index: {}]
  %s5 = inlined_call_operand.vmem [shape: f32[2,64,64], index: 5, kind: input, shape index: {}]
  %s6 = inlined_call_operand.vmem [shape: f32[2,64,64], index: 6, kind: input, shape index: {}]
  %s7 = inlined_call_operand.vmem [shape: f32[2,64,1], index: 7, kind: input, shape index: {}]
  %s8 = inlined_call_operand.vmem [shape: f32[2,64,64], index: 8, kind: input, shape index: {}]
  %s9 = inlined_call_operand.vmem [shape: f32[2,64,1], index: 9, kind: input, shape index: {}]
  %s10 = inlined_call_operand.vmem [shape: f32[1,64], index: 10, kind: input, shape index: {}]
  %s11 = inlined_call_operand.hbm [shape: f32[2,1,1024], index: 11, kind: output, shape index: {}]
  %s12 = sld [smem:[#allocation0]]
  $region77: #{tpu_custom_call.1} parent=0
    _
  %s14 = ssub.s32 1, %s12
  %s15 = scalar_select 0, %s14, %s12
  $region1: #{tpu_custom_call.1} parent=0
    #allocation2 [shape = 'u8[4096]{0}', space=vmem, size = 0x1000, scoped, tag = 'output window, operand 0']
    #allocation3 [shape = 's32[2]{0}', space=sflag, size = 0x8, scoped, tag = 'scoped memory for tpu_custom_call.1']
    %16 = vsyncpa [#allocation3], 0
    %s17 = scalar_lea.sflag [#allocation3], 1
    %18 = vsyncpa %s17, 0
    loop: start=0, step=1, limit=6
    $region2: #{tpu_custom_call.1} parent=1 // loop_pre_header
      _
    $region3: #{tpu_custom_call.1} parent=1 // loop_header
      %s20 = sphi 0, %s24
      %p21 = scmp.ge.s32.totalorder %s20, 6
      %s27 = sphi 0, %s39
      %s28 = sphi 0, %s35
      %s29 = sphi 0, %s27
      %s30 = sphi 0, %s28
      %s31 = sphi 0, %s29
      %s32 = sphi 0, %s30
      %s44 = sphi 0, %s46
      %s47 = sphi 0, %s44
      %s48 = sphi 0, %s47
      %s64 = sphi 0, %s48
      %s70 = sphi 0, %s72
      %s73 = sphi 0, %s70
      %s74 = sphi 0, %s73
      %s90 = sphi 0, %s74
      %s96 = sphi 0, %s98
      %s99 = sphi 0, %s96
      %s100 = sphi 0, %s99
      %s116 = sphi 0, %s100
      %s122 = sphi 0, %s124
      %s125 = sphi 0, %s122
      %s126 = sphi 0, %s125
      %s142 = sphi 0, %s126
      %s146 = sphi 0, %s146
      %s148 = sphi 0, %s146
      %s149 = sphi 0, %s148
      %s163 = sphi 0, %s149
      %s167 = sphi 0, %s167
      %s169 = sphi 0, %s167
      %s170 = sphi 0, %s169
      %s184 = sphi 0, %s170
      %s188 = sphi 0, %s188
      %s190 = sphi 0, %s188
      %s191 = sphi 0, %s190
      %s205 = sphi 0, %s191
      %s209 = sphi 0, %s209
      %s211 = sphi 0, %s209
      %s212 = sphi 0, %s211
      %s226 = sphi 0, %s212
      %s230 = sphi 0, %s230
      %s232 = sphi 0, %s230
      %s233 = sphi 0, %s232
      %s247 = sphi 0, %s233
      %s251 = sphi 0, %s251
      %s253 = sphi 0, %s251
      %s254 = sphi 0, %s253
      %s268 = sphi 0, %s254
      %s272 = sphi 0, %s272
      %s274 = sphi 0, %s272
      %s275 = sphi 0, %s274
      %s289 = sphi 0, %s275
      %s297 = sphi 0, %s299
      %s300 = sphi 0, %s297
      %s301 = sphi 0, %s300
      %s317 = sphi 0, %s301
    $region4: #{tpu_custom_call.1} parent=1 // loop_header_branch
      %23 = sbr.rel (%p21) target = $region8
    $region5: #{tpu_custom_call.1} parent=1 // loop_body
      %s25 = ssub.s32 %s20, 1
      %s26 = ssub.s32 %s20, 2
      %s33 = sadd.s32 1, %s28
      %p34 = scmp.ge.s32.totalorder %s33, 2
      %s35 = scalar_select %p34, 0, %s33
      %s36 = sadd.s32 1, %s27
      %s37 = scalar_select %p34, %s36, %s27
      %p38 = scmp.ge.s32.totalorder %s37, 2
      %s39 = scalar_select %p38, 0, %s37
      %s40 = ssub.s32 %s27, %s39
      %s41 = ssub.s32 %s28, %s35
      %s42 = sor.u32 %s40, %s41
      %p43 = scmp.eq.s32.totalorder %s42, 0
      %s45 = sadd.s32 %s44, 1
      %s46 = scalar_select %p43, %s44, %s45
      %p49 = pneg %p43
      %p50 = scmp.eq.s32.totalorder %s20, 3
      %p51 = por %p49, %p50
      %p52 = scmp.ne.s32.totalorder %s44, %s47
      %p53 = scmp.eq.s32.totalorder %s20, 0
      %p54 = por %p52, %p53
      %p55 = scmp.ne.s32.totalorder %s44, %s47
      %p56 = scmp.eq.s32.totalorder %s25, 3
      %p57 = por %p55, %p56
      %p58 = scmp.ne.s32.totalorder %s47, %s48
      %p59 = scmp.eq.s32.totalorder %s25, 0
      %p60 = por %p58, %p59
      %p61 = scmp.ne.s32.totalorder %s47, %s48
      %p62 = scmp.eq.s32.totalorder %s26, 3
      %p63 = por %p61, %p62
      %p65 = scmp.ne.s32.totalorder %s48, %s64
      %p66 = scmp.eq.s32.totalorder %s26, 0
      %p67 = por %p65, %p66
      %s68 = ssub.s32 %s27, %s39
      %p69 = scmp.eq.s32.totalorder %s68, 0
      %s71 = sadd.s32 %s70, 1
      %s72 = scalar_select %p69, %s70, %s71
      %p75 = pneg %p69
      %p76 = scmp.eq.s32.totalorder %s20, 3
      %p77 = por %p75, %p76
      %p78 = scmp.ne.s32.totalorder %s70, %s73
      %p79 = scmp.eq.s32.totalorder %s20, 0
      %p80 = por %p78, %p79
      %p81 = scmp.ne.s32.totalorder %s70, %s73
      %p82 = scmp.eq.s32.totalorder %s25, 3
      %p83 = por %p81, %p82
      %p84 = scmp.ne.s32.totalorder %s73, %s74
      %p85 = scmp.eq.s32.totalorder %s25, 0
      %p86 = por %p84, %p85
      %p87 = scmp.ne.s32.totalorder %s73, %s74
      %p88 = scmp.eq.s32.totalorder %s26, 3
      %p89 = por %p87, %p88
      %p91 = scmp.ne.s32.totalorder %s74, %s90
      %p92 = scmp.eq.s32.totalorder %s26, 0
      %p93 = por %p91, %p92
      %s94 = ssub.s32 %s27, %s39
      %p95 = scmp.eq.s32.totalorder %s94, 0
      %s97 = sadd.s32 %s96, 1
      %s98 = scalar_select %p95, %s96, %s97
      %p101 = pneg %p95
      %p102 = scmp.eq.s32.totalorder %s20, 3
      %p103 = por %p101, %p102
      %p104 = scmp.ne.s32.totalorder %s96, %s99
      %p105 = scmp.eq.s32.totalorder %s20, 0
      %p106 = por %p104, %p105
      %p107 = scmp.ne.s32.totalorder %s96, %s99
      %p108 = scmp.eq.s32.totalorder %s25, 3
      %p109 = por %p107, %p108
      %p110 = scmp.ne.s32.totalorder %s99, %s100
      %p111 = scmp.eq.s32.totalorder %s25, 0
      %p112 = por %p110, %p111
      %p113 = scmp.ne.s32.totalorder %s99, %s100
      %p114 = scmp.eq.s32.totalorder %s26, 3
      %p115 = por %p113, %p114
      %p117 = scmp.ne.s32.totalorder %s100, %s116
      %p118 = scmp.eq.s32.totalorder %s26, 0
      %p119 = por %p117, %p118
      %s120 = ssub.s32 %s27, %s39
      %p121 = scmp.eq.s32.totalorder %s120, 0
      %s123 = sadd.s32 %s122, 1
      %s124 = scalar_select %p121, %s122, %s123
      %p127 = pneg %p121
      %p128 = scmp.eq.s32.totalorder %s20, 3
      %p129 = por %p127, %p128
      %p130 = scmp.ne.s32.totalorder %s122, %s125
      %p131 = scmp.eq.s32.totalorder %s20, 0
      %p132 = por %p130, %p131
      %p133 = scmp.ne.s32.totalorder %s122, %s125
      %p134 = scmp.eq.s32.totalorder %s25, 3
      %p135 = por %p133, %p134
      %p136 = scmp.ne.s32.totalorder %s125, %s126
      %p137 = scmp.eq.s32.totalorder %s25, 0
      %p138 = por %p136, %p137
      %p139 = scmp.ne.s32.totalorder %s125, %s126
      %p140 = scmp.eq.s32.totalorder %s26, 3
      %p141 = por %p139, %p140
      %p143 = scmp.ne.s32.totalorder %s126, %s142
      %p144 = scmp.eq.s32.totalorder %s26, 0
      %p145 = por %p143, %p144
      %s147 = sadd.s32 %s146, 1
      %p150 = scmp.eq.s32.totalorder %s20, 3
      %p151 = scmp.ne.s32.totalorder %s146, %s148
      %p152 = scmp.eq.s32.totalorder %s20, 0
      %p153 = por %p151, %p152
      %p154 = scmp.ne.s32.totalorder %s146, %s148
      %p155 = scmp.eq.s32.totalorder %s25, 3
      %p156 = por %p154, %p155
      %p157 = scmp.ne.s32.totalorder %s148, %s149
      %p158 = scmp.eq.s32.totalorder %s25, 0
      %p159 = por %p157, %p158
      %p160 = scmp.ne.s32.totalorder %s148, %s149
      %p161 = scmp.eq.s32.totalorder %s26, 3
      %p162 = por %p160, %p161
      %p164 = scmp.ne.s32.totalorder %s149, %s163
      %p165 = scmp.eq.s32.totalorder %s26, 0
      %p166 = por %p164, %p165
      %s168 = sadd.s32 %s167, 1
      %p171 = scmp.eq.s32.totalorder %s20, 3
      %p172 = scmp.ne.s32.totalorder %s167, %s169
      %p173 = scmp.eq.s32.totalorder %s20, 0
      %p174 = por %p172, %p173
      %p175 = scmp.ne.s32.totalorder %s167, %s169
      %p176 = scmp.eq.s32.totalorder %s25, 3
      %p177 = por %p175, %p176
      %p178 = scmp.ne.s32.totalorder %s169, %s170
      %p179 = scmp.eq.s32.totalorder %s25, 0
      %p180 = por %p178, %p179
      %p181 = scmp.ne.s32.totalorder %s169, %s170
      %p182 = scmp.eq.s32.totalorder %s26, 3
      %p183 = por %p181, %p182
      %p185 = scmp.ne.s32.totalorder %s170, %s184
      %p186 = scmp.eq.s32.totalorder %s26, 0
      %p187 = por %p185, %p186
      %s189 = sadd.s32 %s188, 1
      %p192 = scmp.eq.s32.totalorder %s20, 3
      %p193 = scmp.ne.s32.totalorder %s188, %s190
      %p194 = scmp.eq.s32.totalorder %s20, 0
      %p195 = por %p193, %p194
      %p196 = scmp.ne.s32.totalorder %s188, %s190
      %p197 = scmp.eq.s32.totalorder %s25, 3
      %p198 = por %p196, %p197
      %p199 = scmp.ne.s32.totalorder %s190, %s191
      %p200 = scmp.eq.s32.totalorder %s25, 0
      %p201 = por %p199, %p200
      %p202 = scmp.ne.s32.totalorder %s190, %s191
      %p203 = scmp.eq.s32.totalorder %s26, 3
      %p204 = por %p202, %p203
      %p206 = scmp.ne.s32.totalorder %s191, %s205
      %p207 = scmp.eq.s32.totalorder %s26, 0
      %p208 = por %p206, %p207
      %s210 = sadd.s32 %s209, 1
      %p213 = scmp.eq.s32.totalorder %s20, 3
      %p214 = scmp.ne.s32.totalorder %s209, %s211
      %p215 = scmp.eq.s32.totalorder %s20, 0
      %p216 = por %p214, %p215
      %p217 = scmp.ne.s32.totalorder %s209, %s211
      %p218 = scmp.eq.s32.totalorder %s25, 3
      %p219 = por %p217, %p218
      %p220 = scmp.ne.s32.totalorder %s211, %s212
      %p221 = scmp.eq.s32.totalorder %s25, 0
      %p222 = por %p220, %p221
      %p223 = scmp.ne.s32.totalorder %s211, %s212
      %p224 = scmp.eq.s32.totalorder %s26, 3
      %p225 = por %p223, %p224
      %p227 = scmp.ne.s32.totalorder %s212, %s226
      %p228 = scmp.eq.s32.totalorder %s26, 0
      %p229 = por %p227, %p228
      %s231 = sadd.s32 %s230, 1
      %p234 = scmp.eq.s32.totalorder %s20, 3
      %p235 = scmp.ne.s32.totalorder %s230, %s232
      %p236 = scmp.eq.s32.totalorder %s20, 0
      %p237 = por %p235, %p236
      %p238 = scmp.ne.s32.totalorder %s230, %s232
      %p239 = scmp.eq.s32.totalorder %s25, 3
      %p240 = por %p238, %p239
      %p241 = scmp.ne.s32.totalorder %s232, %s233
      %p242 = scmp.eq.s32.totalorder %s25, 0
      %p243 = por %p241, %p242
      %p244 = scmp.ne.s32.totalorder %s232, %s233
      %p245 = scmp.eq.s32.totalorder %s26, 3
      %p246 = por %p244, %p245
      %p248 = scmp.ne.s32.totalorder %s233, %s247
      %p249 = scmp.eq.s32.totalorder %s26, 0
      %p250 = por %p248, %p249
      %s252 = sadd.s32 %s251, 1
      %p255 = scmp.eq.s32.totalorder %s20, 3
      %p256 = scmp.ne.s32.totalorder %s251, %s253
      %p257 = scmp.eq.s32.totalorder %s20, 0
      %p258 = por %p256, %p257
      %p259 = scmp.ne.s32.totalorder %s251, %s253
      %p260 = scmp.eq.s32.totalorder %s25, 3
      %p261 = por %p259, %p260
      %p262 = scmp.ne.s32.totalorder %s253, %s254
      %p263 = scmp.eq.s32.totalorder %s25, 0
      %p264 = por %p262, %p263
      %p265 = scmp.ne.s32.totalorder %s253, %s254
      %p266 = scmp.eq.s32.totalorder %s26, 3
      %p267 = por %p265, %p266
      %p269 = scmp.ne.s32.totalorder %s254, %s268
      %p270 = scmp.eq.s32.totalorder %s26, 0
      %p271 = por %p269, %p270
      %s273 = sadd.s32 %s272, 1
      %p276 = scmp.eq.s32.totalorder %s20, 3
      %p277 = scmp.ne.s32.totalorder %s272, %s274
      %p278 = scmp.eq.s32.totalorder %s20, 0
      %p279 = por %p277, %p278
      %p280 = scmp.ne.s32.totalorder %s272, %s274
      %p281 = scmp.eq.s32.totalorder %s25, 3
      %p282 = por %p280, %p281
      %p283 = scmp.ne.s32.totalorder %s274, %s275
      %p284 = scmp.eq.s32.totalorder %s25, 0
      %p285 = por %p283, %p284
      %p286 = scmp.ne.s32.totalorder %s274, %s275
      %p287 = scmp.eq.s32.totalorder %s26, 3
      %p288 = por %p286, %p287
      %p290 = scmp.ne.s32.totalorder %s275, %s289
      %p291 = scmp.eq.s32.totalorder %s26, 0
      %p292 = por %p290, %p291
      %s293 = ssub.s32 %s27, %s39
      %s294 = ssub.s32 %s28, %s35
      %s295 = sor.u32 %s293, %s294
      %p296 = scmp.eq.s32.totalorder %s295, 0
      %s298 = sadd.s32 %s297, 1
      %s299 = scalar_select %p296, %s297, %s298
      %p302 = pneg %p296
      %p303 = scmp.eq.s32.totalorder %s20, 3
      %p304 = por %p302, %p303
      %p305 = scmp.ne.s32.totalorder %s297, %s300
      %p306 = scmp.eq.s32.totalorder %s20, 0
      %p307 = por %p305, %p306
      %p308 = scmp.ne.s32.totalorder %s297, %s300
      %p309 = scmp.eq.s32.totalorder %s25, 3
      %p310 = por %p308, %p309
      %p311 = scmp.ne.s32.totalorder %s300, %s301
      %p312 = scmp.eq.s32.totalorder %s25, 0
      %p313 = por %p311, %p312
      %p314 = scmp.ne.s32.totalorder %s300, %s301
      %p315 = scmp.eq.s32.totalorder %s26, 3
      %p316 = por %p314, %p315
      %p318 = scmp.ne.s32.totalorder %s301, %s317
      %p319 = scmp.eq.s32.totalorder %s26, 0
      %p320 = por %p318, %p319
      %p321 = scmp.le.s32.totalorder 1, %s20
      %p322 = scmp.lt.s32.totalorder %s20, 5
      %p323 = pnand %p321, %p322
      %p324 = pneg %p323
      // Predicated region
      $region9: #{tpu_custom_call.1} parent=5 // pred_check
        _
      $region10: #{tpu_custom_call.1} parent=5 // pred_check_branch
        %326 = sbr.rel (%p323) target = $region12
      $region11: #{tpu_custom_call.1} parent=5 // pred_region
        %s327 = ssub.s32 %s20, 1
        // Predicated region
        $region13: #{tpu_custom_call.1} parent=11 // pred_check
          %p328 = pneg %p159
        $region14: #{tpu_custom_call.1} parent=11 // pred_check_branch
          %330 = sbr.rel (%p328) target = $region16
        $region15: #{tpu_custom_call.1} parent=11 // pred_region
          _
        $region16: #{tpu_custom_call.1} parent=11 // pred_fallthru
          _
        // Predicated region
        $region17: #{tpu_custom_call.1} parent=11 // pred_check
          %p331 = pneg %p180
        $region18: #{tpu_custom_call.1} parent=11 // pred_check_branch
          %333 = sbr.rel (%p331) target = $region20
        $region19: #{tpu_custom_call.1} parent=11 // pred_region
          _
        $region20: #{tpu_custom_call.1} parent=11 // pred_fallthru
          _
        // Predicated region
        $region21: #{tpu_custom_call.1} parent=11 // pred_check
          %p334 = pneg %p201
        $region22: #{tpu_custom_call.1} parent=11 // pred_check_branch
          %336 = sbr.rel (%p334) target = $region24
        $region23: #{tpu_custom_call.1} parent=11 // pred_region
          _
        $region24: #{tpu_custom_call.1} parent=11 // pred_fallthru
          _
        // Predicated region
        $region25: #{tpu_custom_call.1} parent=11 // pred_check
          %p337 = pneg %p222
        $region26: #{tpu_custom_call.1} parent=11 // pred_check_branch
          %339 = sbr.rel (%p337) target = $region28
        $region27: #{tpu_custom_call.1} parent=11 // pred_region
          _
        $region28: #{tpu_custom_call.1} parent=11 // pred_fallthru
          _
        // Predicated region
        $region29: #{tpu_custom_call.1} parent=11 // pred_check
          %p340 = pneg %p243
        $region30: #{tpu_custom_call.1} parent=11 // pred_check_branch
          %342 = sbr.rel (%p340) target = $region32
        $region31: #{tpu_custom_call.1} parent=11 // pred_region
          _
        $region32: #{tpu_custom_call.1} parent=11 // pred_fallthru
          _
        // Predicated region
        $region33: #{tpu_custom_call.1} parent=11 // pred_check
          %p343 = pneg %p264
        $region34: #{tpu_custom_call.1} parent=11 // pred_check_branch
          %345 = sbr.rel (%p343) target = $region36
        $region35: #{tpu_custom_call.1} parent=11 // pred_region
          _
        $region36: #{tpu_custom_call.1} parent=11 // pred_fallthru
          _
        // Predicated region
        $region37: #{tpu_custom_call.1} parent=11 // pred_check
          %p346 = pneg %p285
        $region38: #{tpu_custom_call.1} parent=11 // pred_check_branch
          %348 = sbr.rel (%p346) target = $region40
        $region39: #{tpu_custom_call.1} parent=11 // pred_region
          _
        $region40: #{tpu_custom_call.1} parent=11 // pred_fallthru
          _
      $region12: #{tpu_custom_call.1} parent=5 // pred_fallthru
        _
      %p349 = scmp.lt.s32.totalorder %s20, 4
      // Predicated region
      $region41: #{tpu_custom_call.1} parent=5 // pred_check
        %p350 = pneg %p349
      $region42: #{tpu_custom_call.1} parent=5 // pred_check_branch
        %352 = sbr.rel (%p350) target = $region44
      $region43: #{tpu_custom_call.1} parent=5 // pred_region
        // Predicated region
        $region45: #{tpu_custom_call.1} parent=43 // pred_check
          %p353 = pneg %p54
        $region46: #{tpu_custom_call.1} parent=43 // pred_check_branch
          %355 = sbr.rel (%p353) target = $region48
        $region47: #{tpu_custom_call.1} parent=43 // pred_region
          %s356 = smul.u32 4, %s28
          %p357 = scmp.lt.s32.totalorder %s27, 1
          %s358 = scalar_select %p357, %s27, 1
          %p359 = scmp.lt.s32.totalorder %s356, 7
          %s360 = scalar_select %p359, %s356, 7
          %s361 = smul.addr %s358, 8
          %s362 = sadd.s32 %s360, %s361
          %s363 = smul.addr %s362, 4
          %s364 = scalar_lea.vmem %s0, %s363
          %s365 = smul.u32 4, %s28
        $region48: #{tpu_custom_call.1} parent=43 // pred_fallthru
          _
        // Predicated region
        $region49: #{tpu_custom_call.1} parent=43 // pred_check
          %p366 = pneg %p80
        $region50: #{tpu_custom_call.1} parent=43 // pred_check_branch
          %368 = sbr.rel (%p366) target = $region52
        $region51: #{tpu_custom_call.1} parent=43 // pred_region
          %p369 = scmp.lt.s32.totalorder %s27, 1
          %s370 = scalar_select %p369, %s27, 1
          %s371 = smul.addr %s370, 8
          %s372 = smul.addr %s371, 8
          %s373 = scalar_lea.vmem %s1, %s372
        $region52: #{tpu_custom_call.1} parent=43 // pred_fallthru
          _
        // Predicated region
        $region53: #{tpu_custom_call.1} parent=43 // pred_check
          %p374 = pneg %p106
        $region54: #{tpu_custom_call.1} parent=43 // pred_check_branch
          %376 = sbr.rel (%p374) target = $region56
        $region55: #{tpu_custom_call.1} parent=43 // pred_region
          %p377 = scmp.lt.s32.totalorder %s27, 1
          %s378 = scalar_select %p377, %s27, 1
          %s379 = smul.addr %s378, 16
          %s380 = smul.addr %s379, 8
          %s381 = scalar_lea.vmem %s2, %s380
        $region56: #{tpu_custom_call.1} parent=43 // pred_fallthru
          _
        // Predicated region
        $region57: #{tpu_custom_call.1} parent=43 // pred_check
          %p382 = pneg %p132
        $region58: #{tpu_custom_call.1} parent=43 // pred_check_branch
          %384 = sbr.rel (%p382) target = $region60
        $region59: #{tpu_custom_call.1} parent=43 // pred_region
          %p385 = scmp.lt.s32.totalorder %s27, 1
          %s386 = scalar_select %p385, %s27, 1
          %s387 = scalar_lea.vmem %s3, %s386
        $region60: #{tpu_custom_call.1} parent=43 // pred_fallthru
          _
      $region44: #{tpu_custom_call.1} parent=5 // pred_fallthru
        _
      %p388 = scmp.le.s32.totalorder 1, %s20
      %p389 = scmp.lt.s32.totalorder %s20, 5
      %p390 = pnand %p388, %p389
      %p391 = pneg %p390
      // Predicated region
      $region61: #{tpu_custom_call.1} parent=5 // pred_check
        _
      $region62: #{tpu_custom_call.1} parent=5 // pred_check_branch
        %393 = sbr.rel (%p390) target = $region64
      $region63: #{tpu_custom_call.1} parent=5 // pred_region
        %s394 = ssub.s32 %s20, 1
        %s395 = smul.u32 4, %s30
        %p396 = scmp.lt.s32.totalorder %s29, 1
        %s397 = scalar_select %p396, %s29, 1
        %p398 = scmp.lt.s32.totalorder %s395, 7
        %s399 = scalar_select %p398, %s395, 7
        %s400 = smul.addr %s397, 8
        %s401 = sadd.s32 %s399, %s400
        %s402 = smul.addr %s401, 4
        %s403 = scalar_lea.vmem %s0, %s402
        %p404 = pneg %p60
        %p405 = pneg %p57
        %p406 = scmp.lt.s32.totalorder %s29, 1
        %s407 = scalar_select %p406, %s29, 1
        %s408 = smul.addr %s407, 8
        %s409 = smul.addr %s408, 8
        %s410 = scalar_lea.vmem %s1, %s409
        %p411 = pneg %p86
        %p412 = pneg %p83
        %p413 = scmp.lt.s32.totalorder %s29, 1
        %s414 = scalar_select %p413, %s29, 1
        %s415 = smul.addr %s414, 16
        %s416 = smul.addr %s415, 8
        %s417 = scalar_lea.vmem %s2, %s416
        %p418 = pneg %p112
        %p419 = pneg %p109
        %p420 = scmp.lt.s32.totalorder %s29, 1
        %s421 = scalar_select %p420, %s29, 1
        %s422 = scalar_lea.vmem %s3, %s421
        %p423 = pneg %p138
        %p424 = pneg %p135
        %p425 = pneg %p159
        %p426 = pneg %p156
        %p427 = pneg %p180
        %p428 = pneg %p177
        %p429 = pneg %p201
        %p430 = pneg %p198
        %p431 = pneg %p222
        %p432 = pneg %p219
        %p433 = pneg %p243
        %p434 = pneg %p240
        %p435 = pneg %p264
        %p436 = pneg %p261
        %p437 = pneg %p285
        %p438 = pneg %p282
        %p439 = pneg %p313
        %p440 = pneg %p310
        %s441 = sand.u32 %s300, 1
        %s442 = scalar_lea.sflag [#allocation3], %s441
        %s443 = sand.u32 %s300, 1
        %s444 = smul.addr %s443, 4
        %s445 = scalar_lea.vmem [#allocation2], %s444
        %s446 = smul.u32 4, %s30
        %p447 = scmp.lt.s32.totalorder %s29, 1
        %s448 = scalar_select %p447, %s29, 1
        %p449 = scmp.lt.s32.totalorder %s446, 7
        %s450 = scalar_select %p449, %s446, 7
        %s451 = smul.addr %s448, 8
        %s452 = sadd.s32 %s450, %s451
        %s453 = smul.addr %s452, 4
        %s454 = scalar_lea.vmem %s0, %s453
        %s455 = smul.u32 4, %s30
        %p456 = scmp.lt.s32.totalorder %s29, 1
        %s457 = scalar_select %p456, %s29, 1
        %s458 = smul.addr %s457, 8
        %s459 = smul.addr %s458, 8
        %s460 = scalar_lea.vmem %s1, %s459
        %p461 = scmp.lt.s32.totalorder %s29, 1
        %s462 = scalar_select %p461, %s29, 1
        %s463 = smul.addr %s462, 16
        %s464 = smul.addr %s463, 8
        %s465 = scalar_lea.vmem %s2, %s464
        %p466 = scmp.lt.s32.totalorder %s29, 1
        %s467 = scalar_select %p466, %s29, 1
        %s468 = scalar_lea.vmem %s3, %s467
        %s469 = smul.u32 4, %s30
        %v470 = vld [vmem:[%s454] sm:$0x77]
        %v471 = vld [vmem:[%s454 + $0x8] sm:$0x77]
        %v472 = vld [vmem:[%s4] sm:$0xff]
        %v473 = vld [vmem:[%s4 + $0x8] sm:$0xff]
        %v474 = vld [vmem:[%s4 + $0x10] sm:$0xff]
        %v475 = vld [vmem:[%s4 + $0x18] sm:$0xff]
        %v476 = vld [vmem:[%s4 + $0x20] sm:$0xff]
        %v477 = vld [vmem:[%s4 + $0x28] sm:$0xff]
        %v478 = vld [vmem:[%s4 + $0x30] sm:$0xff]
        %v479 = vld [vmem:[%s4 + $0x38] sm:$0xff]
        %v480 = vld [vmem:[%s460] sm:$0xff]
        %v481 = vld [vmem:[%s460 + $0x8] sm:$0xff]
        %v482 = vld [vmem:[%s460 + $0x10] sm:$0xff]
        %v483 = vld [vmem:[%s460 + $0x18] sm:$0xff]
        %v484 = vld [vmem:[%s460 + $0x20] sm:$0xff]
        %v485 = vld [vmem:[%s460 + $0x28] sm:$0xff]
        %v486 = vld [vmem:[%s460 + $0x30] sm:$0xff]
        %v487 = vld [vmem:[%s460 + $0x38] sm:$0xff]
        %489 = vset.pattern.permute.xlu0 0
        %490 = vperm.xlu0 %489, %v480
        %v491 = vpop.permute.xlu0 %490
        %494 = vset.pattern.permute.xlu0 0
        %495 = vperm.xlu0 %494, %v481
        %v496 = vpop.permute.xlu0 %495
        %499 = vset.pattern.permute.xlu0 0
        %500 = vperm.xlu0 %499, %v482
        %v501 = vpop.permute.xlu0 %500
        %504 = vset.pattern.permute.xlu0 0
        %505 = vperm.xlu0 %504, %v483
        %v506 = vpop.permute.xlu0 %505
        %509 = vset.pattern.permute.xlu0 0
        %510 = vperm.xlu0 %509, %v484
        %v511 = vpop.permute.xlu0 %510
        %514 = vset.pattern.permute.xlu0 0
        %515 = vperm.xlu0 %514, %v485
        %v516 = vpop.permute.xlu0 %515
        %519 = vset.pattern.permute.xlu0 0
        %520 = vperm.xlu0 %519, %v486
        %v521 = vpop.permute.xlu0 %520
        %524 = vset.pattern.permute.xlu0 0
        %525 = vperm.xlu0 %524, %v487
        %v526 = vpop.permute.xlu0 %525
        %v530 = vcombine.high %v470, %v470
        %v531 = vcombine.high %v471, %v471
        %vm532 = vcmask 23552
        %v534 = vsel %vm532, %v472, 0
        %v537 = vsel %vm532, %v473, 0
        %v540 = vsel %vm532, %v474, 0
        %v543 = vsel %vm532, %v475, 0
        %v546 = vsel %vm532, %v476, 0
        %v549 = vsel %vm532, %v477, 0
        %v552 = vsel %vm532, %v478, 0
        %v555 = vsel %vm532, %v479, 0
        %vm557 = vcmask 1042432
        %v558 = vsel %vm557, %v470, 0
        %v560 = vsel %vm557, %v530, 0
        %v562 = vsel %vm557, %v471, 0
        %v564 = vsel %vm557, %v531, 0
        %566 = vmatprep.subr.mxu0 0.0
        %567 = vmatpush1.msra.mxu0 0.0
        %568 = vmatprep.subr.mxu0 0.0
        %569 = vmatpush1.msra.mxu0 0.0
        %570 = vmatprep.subr.mxu0 0.0
        %571 = vmatpush1.msra.mxu0 0.0
        %572 = vmatprep.subr.mxu0 0.0
        %573 = vmatpush1.msra.mxu0 0.0
        %574 = vmatprep.subr.mxu0 0.0
        %575 = vmatpush1.msra.mxu0 0.0
        %576 = vmatprep.subr.mxu0 0.0
        %577 = vmatpush1.msra.mxu0 0.0
        %578 = vmatprep.subr.mxu0 0.0
        %579 = vmatpush1.msra.mxu0 0.0
        %580 = vmatprep.subr.mxu0 0.0
        %581 = vmatpush1.msra.mxu0 0.0
        %582 = vmatprep.subr.mxu0 0.0
        %583 = vmatpush1.msra.mxu0 0.0
        %584 = vmatprep.subr.mxu0 0.0
        %585 = vmatpush1.msra.mxu0 0.0
        %586 = vmatprep.subr.mxu0 0.0
        %587 = vmatpush1.msra.mxu0 0.0
        %588 = vmatprep.subr.mxu0 0.0
        %589 = vmatpush1.msra.mxu0 0.0
        %590 = vmatprep.subr.mxu0 0.0
        %591 = vmatpush1.msra.mxu0 0.0
        %592 = vmatprep.subr.mxu0 0.0
        %593 = vmatpush1.msra.mxu0 0.0
        %594 = vmatprep.subr.mxu0 0.0
        %595 = vmatpush1.msra.mxu0 0.0
        %596 = vmatprep.subr.mxu0 %v560
        %597 = vmatpush1.msra.mxu0 %v558
        %598 = vmatprep.subr.mxu0 0.0
        %599 = vmatpush2.msra.mxu0 0.0
        %600 = vmatprep.subr.mxu0 0.0
        %601 = vmatpush2.msra.mxu0 0.0
        %602 = vmatprep.subr.mxu0 0.0
        %603 = vmatpush2.msra.mxu0 0.0
        %604 = vmatprep.subr.mxu0 0.0
        %605 = vmatpush2.msra.mxu0 0.0
        %606 = vmatprep.subr.mxu0 0.0
        %607 = vmatpush2.msra.mxu0 0.0
        %608 = vmatprep.subr.mxu0 0.0
        %609 = vmatpush2.msra.mxu0 0.0
        %610 = vmatprep.subr.mxu0 0.0
        %611 = vmatpush2.msra.mxu0 0.0
        %612 = vmatprep.subr.mxu0 0.0
        %613 = vmatpush2.msra.mxu0 0.0
        %614 = vmatprep.subr.mxu0 0.0
        %615 = vmatpush2.msra.mxu0 0.0
        %616 = vmatprep.subr.mxu0 0.0
        %617 = vmatpush2.msra.mxu0 0.0
        %618 = vmatprep.subr.mxu0 0.0
        %619 = vmatpush2.msra.mxu0 0.0
        %620 = vmatprep.subr.mxu0 0.0
        %621 = vmatpush2.msra.mxu0 0.0
        %622 = vmatprep.subr.mxu0 0.0
        %623 = vmatpush2.msra.mxu0 0.0
        %624 = vmatprep.subr.mxu0 0.0
        %625 = vmatpush2.msra.mxu0 0.0
        %626 = vmatprep.subr.mxu0 0.0
        %627 = vmatpush2.msra.mxu0 0.0
        %628 = vmatprep.subr.mxu0 0.0
        %629 = vmatpush2.msra.mxu0 0.0
        %630 = vmatprep.mubr.f32.mxu0 0.0
        %631 = vmatmul.mubr.f32.gmra.mxu0 %v534
        %v632 = vpop.f32.mrf.mxu0
        %v633 = vadd.f32 %v491, %v632
        %v634 = vpop.f32.mrf.mxu0
        %v635 = vadd.f32 %v491, %v634
        %636 = vmatprep.mubr.f32.mxu0 0.0
        %637 = vmatmul.mubr.f32.gmra.mxu0 %v537
        %v638 = vpop.f32.mrf.mxu0
        %v639 = vadd.f32 %v496, %v638
        %v640 = vpop.f32.mrf.mxu0
        %v641 = vadd.f32 %v496, %v640
        %642 = vmatprep.mubr.f32.mxu0 0.0
        %643 = vmatmul.mubr.f32.gmra.mxu0 %v540
        %v644 = vpop.f32.mrf.mxu0
        %v645 = vadd.f32 %v501, %v644
        %v646 = vpop.f32.mrf.mxu0
        %v647 = vadd.f32 %v501, %v646
        %648 = vmatprep.mubr.f32.mxu0 0.0
        %649 = vmatmul.mubr.f32.gmra.mxu0 %v543
        %v650 = vpop.f32.mrf.mxu0
        %v651 = vadd.f32 %v506, %v650
        %v652 = vpop.f32.mrf.mxu0
        %v653 = vadd.f32 %v506, %v652
        %654 = vmatprep.mubr.f32.mxu0 0.0
        %655 = vmatmul.mubr.f32.gmra.mxu0 %v546
        %v656 = vpop.f32.mrf.mxu0
        %v657 = vadd.f32 %v511, %v656
        %v658 = vpop.f32.mrf.mxu0
        %v659 = vadd.f32 %v511, %v658
        %660 = vmatprep.mubr.f32.mxu0 0.0
        %661 = vmatmul.mubr.f32.gmra.mxu0 %v549
        %v662 = vpop.f32.mrf.mxu0
        %v663 = vadd.f32 %v516, %v662
        %v664 = vpop.f32.mrf.mxu0
        %v665 = vadd.f32 %v516, %v664
        %666 = vmatprep.mubr.f32.mxu0 0.0
        %667 = vmatmul.mubr.f32.gmra.mxu0 %v552
        %v668 = vpop.f32.mrf.mxu0
        %v669 = vadd.f32 %v521, %v668
        %v670 = vpop.f32.mrf.mxu0
        %v671 = vadd.f32 %v521, %v670
        %672 = vmatprep.mubr.f32.mxu0 0.0
        %673 = vmatmul.mubr.f32.gmra.mxu0 %v555
        %v674 = vpop.f32.mrf.mxu0
        %v675 = vadd.f32 %v526, %v674
        %v676 = vpop.f32.mrf.mxu0
        %v677 = vadd.f32 %v526, %v676
        %678 = vdwg.mxu0
        %679 = vmatprep.subr.mxu0 0.0
        %680 = vmatpush1.msra.mxu0 0.0
        %681 = vmatprep.subr.mxu0 0.0
        %682 = vmatpush1.msra.mxu0 0.0
        %683 = vmatprep.subr.mxu0 0.0
        %684 = vmatpush1.msra.mxu0 0.0
        %685 = vmatprep.subr.mxu0 0.0
        %686 = vmatpush1.msra.mxu0 0.0
        %687 = vmatprep.subr.mxu0 0.0
        %688 = vmatpush1.msra.mxu0 0.0
        %689 = vmatprep.subr.mxu0 0.0
        %690 = vmatpush1.msra.mxu0 0.0
        %691 = vmatprep.subr.mxu0 0.0
        %692 = vmatpush1.msra.mxu0 0.0
        %693 = vmatprep.subr.mxu0 0.0
        %694 = vmatpush1.msra.mxu0 0.0
        %695 = vmatprep.subr.mxu0 0.0
        %696 = vmatpush1.msra.mxu0 0.0
        %697 = vmatprep.subr.mxu0 0.0
        %698 = vmatpush1.msra.mxu0 0.0
        %699 = vmatprep.subr.mxu0 0.0
        %700 = vmatpush1.msra.mxu0 0.0
        %701 = vmatprep.subr.mxu0 0.0
        %702 = vmatpush1.msra.mxu0 0.0
        %703 = vmatprep.subr.mxu0 0.0
        %704 = vmatpush1.msra.mxu0 0.0
        %705 = vmatprep.subr.mxu0 0.0
        %706 = vmatpush1.msra.mxu0 0.0
        %707 = vmatprep.subr.mxu0 0.0
        %708 = vmatpush1.msra.mxu0 0.0
        %709 = vmatprep.subr.mxu0 %v564
        %710 = vmatpush1.msra.mxu0 %v562
        %711 = vmatprep.subr.mxu0 0.0
        %712 = vmatpush2.msra.mxu0 0.0
        %713 = vmatprep.subr.mxu0 0.0
        %714 = vmatpush2.msra.mxu0 0.0
        %715 = vmatprep.subr.mxu0 0.0
        %716 = vmatpush2.msra.mxu0 0.0
        %717 = vmatprep.subr.mxu0 0.0
        %718 = vmatpush2.msra.mxu0 0.0
        %719 = vmatprep.subr.mxu0 0.0
        %720 = vmatpush2.msra.mxu0 0.0
        %721 = vmatprep.subr.mxu0 0.0
        %722 = vmatpush2.msra.mxu0 0.0
        %723 = vmatprep.subr.mxu0 0.0
        %724 = vmatpush2.msra.mxu0 0.0
        %725 = vmatprep.subr.mxu0 0.0
        %726 = vmatpush2.msra.mxu0 0.0
        %727 = vmatprep.subr.mxu0 0.0
        %728 = vmatpush2.msra.mxu0 0.0
        %729 = vmatprep.subr.mxu0 0.0
        %730 = vmatpush2.msra.mxu0 0.0
        %731 = vmatprep.subr.mxu0 0.0
        %732 = vmatpush2.msra.mxu0 0.0
        %733 = vmatprep.subr.mxu0 0.0
        %734 = vmatpush2.msra.mxu0 0.0
        %735 = vmatprep.subr.mxu0 0.0
        %736 = vmatpush2.msra.mxu0 0.0
        %737 = vmatprep.subr.mxu0 0.0
        %738 = vmatpush2.msra.mxu0 0.0
        %739 = vmatprep.subr.mxu0 0.0
        %740 = vmatpush2.msra.mxu0 0.0
        %741 = vmatprep.subr.mxu0 0.0
        %742 = vmatpush2.msra.mxu0 0.0
        %743 = vmatprep.mubr.f32.mxu0 0.0
        %744 = vmatmul.mubr.f32.gmra.mxu0 %v534
        %v745 = vpop.f32.mrf.mxu0
        %v746 = vadd.f32 %v491, %v745
        %v747 = vpop.f32.mrf.mxu0
        %v748 = vadd.f32 %v491, %v747
        %749 = vmatprep.mubr.f32.mxu0 0.0
        %750 = vmatmul.mubr.f32.gmra.mxu0 %v537
        %v751 = vpop.f32.mrf.mxu0
        %v752 = vadd.f32 %v496, %v751
        %v753 = vpop.f32.mrf.mxu0
        %v754 = vadd.f32 %v496, %v753
        %755 = vmatprep.mubr.f32.mxu0 0.0
        %756 = vmatmul.mubr.f32.gmra.mxu0 %v540
        %v757 = vpop.f32.mrf.mxu0
        %v758 = vadd.f32 %v501, %v757
        %v759 = vpop.f32.mrf.mxu0
        %v760 = vadd.f32 %v501, %v759
        %761 = vmatprep.mubr.f32.mxu0 0.0
        %762 = vmatmul.mubr.f32.gmra.mxu0 %v543
        %v763 = vpop.f32.mrf.mxu0
        %v764 = vadd.f32 %v506, %v763
        %v765 = vpop.f32.mrf.mxu0
        %v766 = vadd.f32 %v506, %v765
        %767 = vmatprep.mubr.f32.mxu0 0.0
        %768 = vmatmul.mubr.f32.gmra.mxu0 %v546
        %v769 = vpop.f32.mrf.mxu0
        %v770 = vadd.f32 %v511, %v769
        %v771 = vpop.f32.mrf.mxu0
        %v772 = vadd.f32 %v511, %v771
        %773 = vmatprep.mubr.f32.mxu0 0.0
        %774 = vmatmul.mubr.f32.gmra.mxu0 %v549
        %v775 = vpop.f32.mrf.mxu0
        %v776 = vadd.f32 %v516, %v775
        %v777 = vpop.f32.mrf.mxu0
        %v778 = vadd.f32 %v516, %v777
        %779 = vmatprep.mubr.f32.mxu0 0.0
        %780 = vmatmul.mubr.f32.gmra.mxu0 %v552
        %v781 = vpop.f32.mrf.mxu0
        %v782 = vadd.f32 %v521, %v781
        %v783 = vpop.f32.mrf.mxu0
        %v784 = vadd.f32 %v521, %v783
        %785 = vmatprep.mubr.f32.mxu0 0.0
        %786 = vmatmul.mubr.f32.gmra.mxu0 %v555
        %v787 = vpop.f32.mrf.mxu0
        %v788 = vadd.f32 %v526, %v787
        %v789 = vpop.f32.mrf.mxu0
        %v790 = vadd.f32 %v526, %v789
        %791 = vdwg.mxu0
        %v792 = vld [vmem:[%s465] sm:$0xff]
        %v793 = vld [vmem:[%s465 + $0x8] sm:$0xff]
        %v794 = vld [vmem:[%s465 + $0x10] sm:$0xff]
        %v795 = vld [vmem:[%s465 + $0x18] sm:$0xff]
        %v796 = vld [vmem:[%s465 + $0x20] sm:$0xff]
        %v797 = vld [vmem:[%s465 + $0x28] sm:$0xff]
        %v798 = vld [vmem:[%s465 + $0x30] sm:$0xff]
        %v799 = vld [vmem:[%s465 + $0x38] sm:$0xff]
        %v800 = vld [vmem:[%s465 + $0x40] sm:$0xff]
        %v801 = vld [vmem:[%s465 + $0x48] sm:$0xff]
        %v802 = vld [vmem:[%s465 + $0x50] sm:$0xff]
        %v803 = vld [vmem:[%s465 + $0x58] sm:$0xff]
        %v804 = vld [vmem:[%s465 + $0x60] sm:$0xff]
        %v805 = vld [vmem:[%s465 + $0x68] sm:$0xff]
        %v806 = vld [vmem:[%s465 + $0x70] sm:$0xff]
        %v807 = vld [vmem:[%s465 + $0x78] sm:$0xff]
        %v808 = vld [vmem:[%s5] sm:$0xff]
        %v809 = vld [vmem:[%s5 + $0x8] sm:$0xff]
        %v810 = vld [vmem:[%s5 + $0x10] sm:$0xff]
        %v811 = vld [vmem:[%s5 + $0x18] sm:$0xff]
        %v812 = vld [vmem:[%s5 + $0x20] sm:$0xff]
        %v813 = vld [vmem:[%s5 + $0x28] sm:$0xff]
        %v814 = vld [vmem:[%s5 + $0x30] sm:$0xff]
        %v815 = vld [vmem:[%s5 + $0x38] sm:$0xff]
        %817 = vset.pattern.permute.xlu0 0
        %818 = vperm.xlu0 %817, %v792
        %v819 = vpop.permute.xlu0 %818
        %822 = vset.pattern.permute.xlu0 0
        %823 = vperm.xlu0 %822, %v793
        %v824 = vpop.permute.xlu0 %823
        %827 = vset.pattern.permute.xlu0 0
        %828 = vperm.xlu0 %827, %v794
        %v829 = vpop.permute.xlu0 %828
        %832 = vset.pattern.permute.xlu0 0
        %833 = vperm.xlu0 %832, %v795
        %v834 = vpop.permute.xlu0 %833
        %837 = vset.pattern.permute.xlu0 0
        %838 = vperm.xlu0 %837, %v796
        %v839 = vpop.permute.xlu0 %838
        %842 = vset.pattern.permute.xlu0 0
        %843 = vperm.xlu0 %842, %v797
        %v844 = vpop.permute.xlu0 %843
        %847 = vset.pattern.permute.xlu0 0
        %848 = vperm.xlu0 %847, %v798
        %v849 = vpop.permute.xlu0 %848
        %852 = vset.pattern.permute.xlu0 0
        %853 = vperm.xlu0 %852, %v799
        %v854 = vpop.permute.xlu0 %853
        %vm856 = vcmask 523264
        %v858 = vsel %vm856, %v808, 0
        %v861 = vsel %vm856, %v809, 0
        %v864 = vsel %vm856, %v810, 0
        %v867 = vsel %vm856, %v811, 0
        %v870 = vsel %vm856, %v812, 0
        %v873 = vsel %vm856, %v813, 0
        %v876 = vsel %vm856, %v814, 0
        %v879 = vsel %vm856, %v815, 0
        %881 = vmatprep.subr.mxu0 0.0
        %882 = vmatpush1.msra.mxu0 0.0
        %883 = vmatprep.subr.mxu0 0.0
        %884 = vmatpush1.msra.mxu0 0.0
        %885 = vmatprep.subr.mxu0 0.0
        %886 = vmatpush1.msra.mxu0 0.0
        %887 = vmatprep.subr.mxu0 0.0
        %888 = vmatpush1.msra.mxu0 0.0
        %889 = vmatprep.subr.mxu0 0.0
        %890 = vmatpush1.msra.mxu0 0.0
        %891 = vmatprep.subr.mxu0 0.0
        %892 = vmatpush1.msra.mxu0 0.0
        %893 = vmatprep.subr.mxu0 0.0
        %894 = vmatpush1.msra.mxu0 0.0
        %895 = vmatprep.subr.mxu0 0.0
        %896 = vmatpush1.msra.mxu0 0.0
        %897 = vmatprep.subr.mxu0 %v677
        %898 = vmatpush1.msra.mxu0 %v675
        %899 = vmatprep.subr.mxu0 %v671
        %900 = vmatpush1.msra.mxu0 %v669
        %901 = vmatprep.subr.mxu0 %v665
        %902 = vmatpush1.msra.mxu0 %v663
        %903 = vmatprep.subr.mxu0 %v659
        %904 = vmatpush1.msra.mxu0 %v657
        %905 = vmatprep.subr.mxu0 %v653
        %906 = vmatpush1.msra.mxu0 %v651
        %907 = vmatprep.subr.mxu0 %v647
        %908 = vmatpush1.msra.mxu0 %v645
        %909 = vmatprep.subr.mxu0 %v641
        %910 = vmatpush1.msra.mxu0 %v639
        %911 = vmatprep.subr.mxu0 %v635
        %912 = vmatpush1.msra.mxu0 %v633
        %913 = vmatprep.subr.mxu0 0.0
        %914 = vmatpush2.msra.mxu0 0.0
        %915 = vmatprep.subr.mxu0 0.0
        %916 = vmatpush2.msra.mxu0 0.0
        %917 = vmatprep.subr.mxu0 0.0
        %918 = vmatpush2.msra.mxu0 0.0
        %919 = vmatprep.subr.mxu0 0.0
        %920 = vmatpush2.msra.mxu0 0.0
        %921 = vmatprep.subr.mxu0 0.0
        %922 = vmatpush2.msra.mxu0 0.0
        %923 = vmatprep.subr.mxu0 0.0
        %924 = vmatpush2.msra.mxu0 0.0
        %925 = vmatprep.subr.mxu0 0.0
        %926 = vmatpush2.msra.mxu0 0.0
        %927 = vmatprep.subr.mxu0 0.0
        %928 = vmatpush2.msra.mxu0 0.0
        %929 = vmatprep.subr.mxu0 0.0
        %930 = vmatpush2.msra.mxu0 0.0
        %931 = vmatprep.subr.mxu0 0.0
        %932 = vmatpush2.msra.mxu0 0.0
        %933 = vmatprep.subr.mxu0 0.0
        %934 = vmatpush2.msra.mxu0 0.0
        %935 = vmatprep.subr.mxu0 0.0
        %936 = vmatpush2.msra.mxu0 0.0
        %937 = vmatprep.subr.mxu0 0.0
        %938 = vmatpush2.msra.mxu0 0.0
        %939 = vmatprep.subr.mxu0 0.0
        %940 = vmatpush2.msra.mxu0 0.0
        %941 = vmatprep.subr.mxu0 0.0
        %942 = vmatpush2.msra.mxu0 0.0
        %943 = vmatprep.subr.mxu0 0.0
        %944 = vmatpush2.msra.mxu0 0.0
        %945 = vmatprep.mubr.f32.mxu0 0.0
        %946 = vmatmul.mubr.f32.gmra.mxu0 %v858
        %v947 = vpop.f32.mrf.mxu0
        %v948 = vadd.f32 %v819, %v947
        %v949 = vpop.f32.mrf.mxu0
        %v950 = vadd.f32 %v819, %v949
        %951 = vmatprep.mubr.f32.mxu0 0.0
        %952 = vmatmul.mubr.f32.gmra.mxu0 %v861
        %v953 = vpop.f32.mrf.mxu0
        %v954 = vadd.f32 %v824, %v953
        %v955 = vpop.f32.mrf.mxu0
        %v956 = vadd.f32 %v824, %v955
        %957 = vmatprep.mubr.f32.mxu0 0.0
        %958 = vmatmul.mubr.f32.gmra.mxu0 %v864
        %v959 = vpop.f32.mrf.mxu0
        %v960 = vadd.f32 %v829, %v959
        %v961 = vpop.f32.mrf.mxu0
        %v962 = vadd.f32 %v829, %v961
        %963 = vmatprep.mubr.f32.mxu0 0.0
        %964 = vmatmul.mubr.f32.gmra.mxu0 %v867
        %v965 = vpop.f32.mrf.mxu0
        %v966 = vadd.f32 %v834, %v965
        %v967 = vpop.f32.mrf.mxu0
        %v968 = vadd.f32 %v834, %v967
        %969 = vmatprep.mubr.f32.mxu0 0.0
        %970 = vmatmul.mubr.f32.gmra.mxu0 %v870
        %v971 = vpop.f32.mrf.mxu0
        %v972 = vadd.f32 %v839, %v971
        %v973 = vpop.f32.mrf.mxu0
        %v974 = vadd.f32 %v839, %v973
        %975 = vmatprep.mubr.f32.mxu0 0.0
        %976 = vmatmul.mubr.f32.gmra.mxu0 %v873
        %v977 = vpop.f32.mrf.mxu0
        %v978 = vadd.f32 %v844, %v977
        %v979 = vpop.f32.mrf.mxu0
        %v980 = vadd.f32 %v844, %v979
        %981 = vmatprep.mubr.f32.mxu0 0.0
        %982 = vmatmul.mubr.f32.gmra.mxu0 %v876
        %v983 = vpop.f32.mrf.mxu0
        %v984 = vadd.f32 %v849, %v983
        %v985 = vpop.f32.mrf.mxu0
        %v986 = vadd.f32 %v849, %v985
        %987 = vmatprep.mubr.f32.mxu0 0.0
        %988 = vmatmul.mubr.f32.gmra.mxu0 %v879
        %v989 = vpop.f32.mrf.mxu0
        %v990 = vadd.f32 %v854, %v989
        %v991 = vpop.f32.mrf.mxu0
        %v992 = vadd.f32 %v854, %v991
        %993 = vdwg.mxu0
        %994 = vmatprep.subr.mxu0 0.0
        %995 = vmatpush1.msra.mxu0 0.0
        %996 = vmatprep.subr.mxu0 0.0
        %997 = vmatpush1.msra.mxu0 0.0
        %998 = vmatprep.subr.mxu0 0.0
        %999 = vmatpush1.msra.mxu0 0.0
        %1000 = vmatprep.subr.mxu0 0.0
        %1001 = vmatpush1.msra.mxu0 0.0
        %1002 = vmatprep.subr.mxu0 0.0
        %1003 = vmatpush1.msra.mxu0 0.0
        %1004 = vmatprep.subr.mxu0 0.0
        %1005 = vmatpush1.msra.mxu0 0.0
        %1006 = vmatprep.subr.mxu0 0.0
        %1007 = vmatpush1.msra.mxu0 0.0
        %1008 = vmatprep.subr.mxu0 0.0
        %1009 = vmatpush1.msra.mxu0 0.0
        %1010 = vmatprep.subr.mxu0 %v790
        %1011 = vmatpush1.msra.mxu0 %v788
        %1012 = vmatprep.subr.mxu0 %v784
        %1013 = vmatpush1.msra.mxu0 %v782
        %1014 = vmatprep.subr.mxu0 %v778
        %1015 = vmatpush1.msra.mxu0 %v776
        %1016 = vmatprep.subr.mxu0 %v772
        %1017 = vmatpush1.msra.mxu0 %v770
        %1018 = vmatprep.subr.mxu0 %v766
        %1019 = vmatpush1.msra.mxu0 %v764
        %1020 = vmatprep.subr.mxu0 %v760
        %1021 = vmatpush1.msra.mxu0 %v758
        %1022 = vmatprep.subr.mxu0 %v754
        %1023 = vmatpush1.msra.mxu0 %v752
        %1024 = vmatprep.subr.mxu0 %v748
        %1025 = vmatpush1.msra.mxu0 %v746
        %1026 = vmatprep.subr.mxu0 0.0
        %1027 = vmatpush2.msra.mxu0 0.0
        %1028 = vmatprep.subr.mxu0 0.0
        %1029 = vmatpush2.msra.mxu0 0.0
        %1030 = vmatprep.subr.mxu0 0.0
        %1031 = vmatpush2.msra.mxu0 0.0
        %1032 = vmatprep.subr.mxu0 0.0
        %1033 = vmatpush2.msra.mxu0 0.0
        %1034 = vmatprep.subr.mxu0 0.0
        %1035 = vmatpush2.msra.mxu0 0.0
        %1036 = vmatprep.subr.mxu0 0.0
        %1037 = vmatpush2.msra.mxu0 0.0
        %1038 = vmatprep.subr.mxu0 0.0
        %1039 = vmatpush2.msra.mxu0 0.0
        %1040 = vmatprep.subr.mxu0 0.0
        %1041 = vmatpush2.msra.mxu0 0.0
        %1042 = vmatprep.subr.mxu0 0.0
        %1043 = vmatpush2.msra.mxu0 0.0
        %1044 = vmatprep.subr.mxu0 0.0
        %1045 = vmatpush2.msra.mxu0 0.0
        %1046 = vmatprep.subr.mxu0 0.0
        %1047 = vmatpush2.msra.mxu0 0.0
        %1048 = vmatprep.subr.mxu0 0.0
        %1049 = vmatpush2.msra.mxu0 0.0
        %1050 = vmatprep.subr.mxu0 0.0
        %1051 = vmatpush2.msra.mxu0 0.0
        %1052 = vmatprep.subr.mxu0 0.0
        %1053 = vmatpush2.msra.mxu0 0.0
        %1054 = vmatprep.subr.mxu0 0.0
        %1055 = vmatpush2.msra.mxu0 0.0
        %1056 = vmatprep.subr.mxu0 0.0
        %1057 = vmatpush2.msra.mxu0 0.0
        %1058 = vmatprep.mubr.f32.mxu0 0.0
        %1059 = vmatmul.mubr.f32.gmra.mxu0 %v858
        %v1060 = vpop.f32.mrf.mxu0
        %v1061 = vadd.f32 %v819, %v1060
        %v1062 = vpop.f32.mrf.mxu0
        %v1063 = vadd.f32 %v819, %v1062
        %1064 = vmatprep.mubr.f32.mxu0 0.0
        %1065 = vmatmul.mubr.f32.gmra.mxu0 %v861
        %v1066 = vpop.f32.mrf.mxu0
        %v1067 = vadd.f32 %v824, %v1066
        %v1068 = vpop.f32.mrf.mxu0
        %v1069 = vadd.f32 %v824, %v1068
        %1070 = vmatprep.mubr.f32.mxu0 0.0
        %1071 = vmatmul.mubr.f32.gmra.mxu0 %v864
        %v1072 = vpop.f32.mrf.mxu0
        %v1073 = vadd.f32 %v829, %v1072
        %v1074 = vpop.f32.mrf.mxu0
        %v1075 = vadd.f32 %v829, %v1074
        %1076 = vmatprep.mubr.f32.mxu0 0.0
        %1077 = vmatmul.mubr.f32.gmra.mxu0 %v867
        %v1078 = vpop.f32.mrf.mxu0
        %v1079 = vadd.f32 %v834, %v1078
        %v1080 = vpop.f32.mrf.mxu0
        %v1081 = vadd.f32 %v834, %v1080
        %1082 = vmatprep.mubr.f32.mxu0 0.0
        %1083 = vmatmul.mubr.f32.gmra.mxu0 %v870
        %v1084 = vpop.f32.mrf.mxu0
        %v1085 = vadd.f32 %v839, %v1084
        %v1086 = vpop.f32.mrf.mxu0
        %v1087 = vadd.f32 %v839, %v1086
        %1088 = vmatprep.mubr.f32.mxu0 0.0
        %1089 = vmatmul.mubr.f32.gmra.mxu0 %v873
        %v1090 = vpop.f32.mrf.mxu0
        %v1091 = vadd.f32 %v844, %v1090
        %v1092 = vpop.f32.mrf.mxu0
        %v1093 = vadd.f32 %v844, %v1092
        %1094 = vmatprep.mubr.f32.mxu0 0.0
        %1095 = vmatmul.mubr.f32.gmra.mxu0 %v876
        %v1096 = vpop.f32.mrf.mxu0
        %v1097 = vadd.f32 %v849, %v1096
        %v1098 = vpop.f32.mrf.mxu0
        %v1099 = vadd.f32 %v849, %v1098
        %1100 = vmatprep.mubr.f32.mxu0 0.0
        %1101 = vmatmul.mubr.f32.gmra.mxu0 %v879
        %v1102 = vpop.f32.mrf.mxu0
        %v1103 = vadd.f32 %v854, %v1102
        %v1104 = vpop.f32.mrf.mxu0
        %v1105 = vadd.f32 %v854, %v1104
        %1106 = vdwg.mxu0
        %v1107 = vmax.f32 %v948, 0.0
        %v1108 = vmax.f32 %v950, 0.0
        %v1109 = vmax.f32 %v1061, 0.0
        %v1110 = vmax.f32 %v1063, 0.0
        %v1111 = vmax.f32 %v954, 0.0
        %v1112 = vmax.f32 %v956, 0.0
        %v1113 = vmax.f32 %v1067, 0.0
        %v1114 = vmax.f32 %v1069, 0.0
        %v1115 = vmax.f32 %v960, 0.0
        %v1116 = vmax.f32 %v962, 0.0
        %v1117 = vmax.f32 %v1073, 0.0
        %v1118 = vmax.f32 %v1075, 0.0
        %v1119 = vmax.f32 %v966, 0.0
        %v1120 = vmax.f32 %v968, 0.0
        %v1121 = vmax.f32 %v1079, 0.0
        %v1122 = vmax.f32 %v1081, 0.0
        %v1123 = vmax.f32 %v972, 0.0
        %v1124 = vmax.f32 %v974, 0.0
        %v1125 = vmax.f32 %v1085, 0.0
        %v1126 = vmax.f32 %v1087, 0.0
        %v1127 = vmax.f32 %v978, 0.0
        %v1128 = vmax.f32 %v980, 0.0
        %v1129 = vmax.f32 %v1091, 0.0
        %v1130 = vmax.f32 %v1093, 0.0
        %v1131 = vmax.f32 %v984, 0.0
        %v1132 = vmax.f32 %v986, 0.0
        %v1133 = vmax.f32 %v1097, 0.0
        %v1134 = vmax.f32 %v1099, 0.0
        %v1135 = vmax.f32 %v990, 0.0
        %v1136 = vmax.f32 %v992, 0.0
        %v1137 = vmax.f32 %v1103, 0.0
        %v1138 = vmax.f32 %v1105, 0.0
        %v1139 = vld [vmem:[%s6] sm:$0xff]
        %v1140 = vld [vmem:[%s6 + $0x8] sm:$0xff]
        %v1141 = vld [vmem:[%s6 + $0x10] sm:$0xff]
        %v1142 = vld [vmem:[%s6 + $0x18] sm:$0xff]
        %v1143 = vld [vmem:[%s6 + $0x20] sm:$0xff]
        %v1144 = vld [vmem:[%s6 + $0x28] sm:$0xff]
        %v1145 = vld [vmem:[%s6 + $0x30] sm:$0xff]
        %v1146 = vld [vmem:[%s6 + $0x38] sm:$0xff]
        %v1147 = vld [vmem:[%s7] sm:$0xff]
        %v1148 = vld [vmem:[%s7 + $0x8] sm:$0xff]
        %v1149 = vld [vmem:[%s7 + $0x10] sm:$0xff]
        %v1150 = vld [vmem:[%s7 + $0x18] sm:$0xff]
        %v1151 = vld [vmem:[%s7 + $0x20] sm:$0xff]
        %v1152 = vld [vmem:[%s7 + $0x28] sm:$0xff]
        %v1153 = vld [vmem:[%s7 + $0x30] sm:$0xff]
        %v1154 = vld [vmem:[%s7 + $0x38] sm:$0xff]
        %1156 = vset.pattern.permute.xlu0 0
        %1157 = vperm.xlu0 %1156, %v1147
        %v1158 = vpop.permute.xlu0 %1157
        %1161 = vset.pattern.permute.xlu0 0
        %1162 = vperm.xlu0 %1161, %v1148
        %v1163 = vpop.permute.xlu0 %1162
        %1166 = vset.pattern.permute.xlu0 0
        %1167 = vperm.xlu0 %1166, %v1149
        %v1168 = vpop.permute.xlu0 %1167
        %1171 = vset.pattern.permute.xlu0 0
        %1172 = vperm.xlu0 %1171, %v1150
        %v1173 = vpop.permute.xlu0 %1172
        %1176 = vset.pattern.permute.xlu0 0
        %1177 = vperm.xlu0 %1176, %v1151
        %v1178 = vpop.permute.xlu0 %1177
        %1181 = vset.pattern.permute.xlu0 0
        %1182 = vperm.xlu0 %1181, %v1152
        %v1183 = vpop.permute.xlu0 %1182
        %1186 = vset.pattern.permute.xlu0 0
        %1187 = vperm.xlu0 %1186, %v1153
        %v1188 = vpop.permute.xlu0 %1187
        %1191 = vset.pattern.permute.xlu0 0
        %1192 = vperm.xlu0 %1191, %v1154
        %v1193 = vpop.permute.xlu0 %1192
        %v1196 = vsel %vm856, %v1139, 0
        %v1199 = vsel %vm856, %v1140, 0
        %v1202 = vsel %vm856, %v1141, 0
        %v1205 = vsel %vm856, %v1142, 0
        %v1208 = vsel %vm856, %v1143, 0
        %v1211 = vsel %vm856, %v1144, 0
        %v1214 = vsel %vm856, %v1145, 0
        %v1217 = vsel %vm856, %v1146, 0
        %1219 = vmatprep.subr.mxu0 0.0
        %1220 = vmatpush1.msra.mxu0 0.0
        %1221 = vmatprep.subr.mxu0 0.0
        %1222 = vmatpush1.msra.mxu0 0.0
        %1223 = vmatprep.subr.mxu0 0.0
        %1224 = vmatpush1.msra.mxu0 0.0
        %1225 = vmatprep.subr.mxu0 0.0
        %1226 = vmatpush1.msra.mxu0 0.0
        %1227 = vmatprep.subr.mxu0 0.0
        %1228 = vmatpush1.msra.mxu0 0.0
        %1229 = vmatprep.subr.mxu0 0.0
        %1230 = vmatpush1.msra.mxu0 0.0
        %1231 = vmatprep.subr.mxu0 0.0
        %1232 = vmatpush1.msra.mxu0 0.0
        %1233 = vmatprep.subr.mxu0 0.0
        %1234 = vmatpush1.msra.mxu0 0.0
        %1235 = vmatprep.subr.mxu0 %v1136
        %1236 = vmatpush1.msra.mxu0 %v1135
        %1237 = vmatprep.subr.mxu0 %v1132
        %1238 = vmatpush1.msra.mxu0 %v1131
        %1239 = vmatprep.subr.mxu0 %v1128
        %1240 = vmatpush1.msra.mxu0 %v1127
        %1241 = vmatprep.subr.mxu0 %v1124
        %1242 = vmatpush1.msra.mxu0 %v1123
        %1243 = vmatprep.subr.mxu0 %v1120
        %1244 = vmatpush1.msra.mxu0 %v1119
        %1245 = vmatprep.subr.mxu0 %v1116
        %1246 = vmatpush1.msra.mxu0 %v1115
        %1247 = vmatprep.subr.mxu0 %v1112
        %1248 = vmatpush1.msra.mxu0 %v1111
        %1249 = vmatprep.subr.mxu0 %v1108
        %1250 = vmatpush1.msra.mxu0 %v1107
        %1251 = vmatprep.subr.mxu0 0.0
        %1252 = vmatpush2.msra.mxu0 0.0
        %1253 = vmatprep.subr.mxu0 0.0
        %1254 = vmatpush2.msra.mxu0 0.0
        %1255 = vmatprep.subr.mxu0 0.0
        %1256 = vmatpush2.msra.mxu0 0.0
        %1257 = vmatprep.subr.mxu0 0.0
        %1258 = vmatpush2.msra.mxu0 0.0
        %1259 = vmatprep.subr.mxu0 0.0
        %1260 = vmatpush2.msra.mxu0 0.0
        %1261 = vmatprep.subr.mxu0 0.0
        %1262 = vmatpush2.msra.mxu0 0.0
        %1263 = vmatprep.subr.mxu0 0.0
        %1264 = vmatpush2.msra.mxu0 0.0
        %1265 = vmatprep.subr.mxu0 0.0
        %1266 = vmatpush2.msra.mxu0 0.0
        %1267 = vmatprep.subr.mxu0 0.0
        %1268 = vmatpush2.msra.mxu0 0.0
        %1269 = vmatprep.subr.mxu0 0.0
        %1270 = vmatpush2.msra.mxu0 0.0
        %1271 = vmatprep.subr.mxu0 0.0
        %1272 = vmatpush2.msra.mxu0 0.0
        %1273 = vmatprep.subr.mxu0 0.0
        %1274 = vmatpush2.msra.mxu0 0.0
        %1275 = vmatprep.subr.mxu0 0.0
        %1276 = vmatpush2.msra.mxu0 0.0
        %1277 = vmatprep.subr.mxu0 0.0
        %1278 = vmatpush2.msra.mxu0 0.0
        %1279 = vmatprep.subr.mxu0 0.0
        %1280 = vmatpush2.msra.mxu0 0.0
        %1281 = vmatprep.subr.mxu0 0.0
        %1282 = vmatpush2.msra.mxu0 0.0
        %1283 = vmatprep.mubr.f32.mxu0 0.0
        %1284 = vmatmul.mubr.f32.gmra.mxu0 %v1196
        %v1285 = vpop.f32.mrf.mxu0
        %v1286 = vadd.f32 %v1158, %v1285
        %v1287 = vpop.f32.mrf.mxu0
        %v1288 = vadd.f32 %v1158, %v1287
        %1289 = vmatprep.mubr.f32.mxu0 0.0
        %1290 = vmatmul.mubr.f32.gmra.mxu0 %v1199
        %v1291 = vpop.f32.mrf.mxu0
        %v1292 = vadd.f32 %v1163, %v1291
        %v1293 = vpop.f32.mrf.mxu0
        %v1294 = vadd.f32 %v1163, %v1293
        %1295 = vmatprep.mubr.f32.mxu0 0.0
        %1296 = vmatmul.mubr.f32.gmra.mxu0 %v1202
        %v1297 = vpop.f32.mrf.mxu0
        %v1298 = vadd.f32 %v1168, %v1297
        %v1299 = vpop.f32.mrf.mxu0
        %v1300 = vadd.f32 %v1168, %v1299
        %1301 = vmatprep.mubr.f32.mxu0 0.0
        %1302 = vmatmul.mubr.f32.gmra.mxu0 %v1205
        %v1303 = vpop.f32.mrf.mxu0
        %v1304 = vadd.f32 %v1173, %v1303
        %v1305 = vpop.f32.mrf.mxu0
        %v1306 = vadd.f32 %v1173, %v1305
        %1307 = vmatprep.mubr.f32.mxu0 0.0
        %1308 = vmatmul.mubr.f32.gmra.mxu0 %v1208
        %v1309 = vpop.f32.mrf.mxu0
        %v1310 = vadd.f32 %v1178, %v1309
        %v1311 = vpop.f32.mrf.mxu0
        %v1312 = vadd.f32 %v1178, %v1311
        %1313 = vmatprep.mubr.f32.mxu0 0.0
        %1314 = vmatmul.mubr.f32.gmra.mxu0 %v1211
        %v1315 = vpop.f32.mrf.mxu0
        %v1316 = vadd.f32 %v1183, %v1315
        %v1317 = vpop.f32.mrf.mxu0
        %v1318 = vadd.f32 %v1183, %v1317
        %1319 = vmatprep.mubr.f32.mxu0 0.0
        %1320 = vmatmul.mubr.f32.gmra.mxu0 %v1214
        %v1321 = vpop.f32.mrf.mxu0
        %v1322 = vadd.f32 %v1188, %v1321
        %v1323 = vpop.f32.mrf.mxu0
        %v1324 = vadd.f32 %v1188, %v1323
        %1325 = vmatprep.mubr.f32.mxu0 0.0
        %1326 = vmatmul.mubr.f32.gmra.mxu0 %v1217
        %v1327 = vpop.f32.mrf.mxu0
        %v1328 = vadd.f32 %v1193, %v1327
        %v1329 = vpop.f32.mrf.mxu0
        %v1330 = vadd.f32 %v1193, %v1329
        %1331 = vdwg.mxu0
        %1332 = vmatprep.subr.mxu0 0.0
        %1333 = vmatpush1.msra.mxu0 0.0
        %1334 = vmatprep.subr.mxu0 0.0
        %1335 = vmatpush1.msra.mxu0 0.0
        %1336 = vmatprep.subr.mxu0 0.0
        %1337 = vmatpush1.msra.mxu0 0.0
        %1338 = vmatprep.subr.mxu0 0.0
        %1339 = vmatpush1.msra.mxu0 0.0
        %1340 = vmatprep.subr.mxu0 0.0
        %1341 = vmatpush1.msra.mxu0 0.0
        %1342 = vmatprep.subr.mxu0 0.0
        %1343 = vmatpush1.msra.mxu0 0.0
        %1344 = vmatprep.subr.mxu0 0.0
        %1345 = vmatpush1.msra.mxu0 0.0
        %1346 = vmatprep.subr.mxu0 0.0
        %1347 = vmatpush1.msra.mxu0 0.0
        %1348 = vmatprep.subr.mxu0 %v1138
        %1349 = vmatpush1.msra.mxu0 %v1137
        %1350 = vmatprep.subr.mxu0 %v1134
        %1351 = vmatpush1.msra.mxu0 %v1133
        %1352 = vmatprep.subr.mxu0 %v1130
        %1353 = vmatpush1.msra.mxu0 %v1129
        %1354 = vmatprep.subr.mxu0 %v1126
        %1355 = vmatpush1.msra.mxu0 %v1125
        %1356 = vmatprep.subr.mxu0 %v1122
        %1357 = vmatpush1.msra.mxu0 %v1121
        %1358 = vmatprep.subr.mxu0 %v1118
        %1359 = vmatpush1.msra.mxu0 %v1117
        %1360 = vmatprep.subr.mxu0 %v1114
        %1361 = vmatpush1.msra.mxu0 %v1113
        %1362 = vmatprep.subr.mxu0 %v1110
        %1363 = vmatpush1.msra.mxu0 %v1109
        %1364 = vmatprep.subr.mxu0 0.0
        %1365 = vmatpush2.msra.mxu0 0.0
        %1366 = vmatprep.subr.mxu0 0.0
        %1367 = vmatpush2.msra.mxu0 0.0
        %1368 = vmatprep.subr.mxu0 0.0
        %1369 = vmatpush2.msra.mxu0 0.0
        %1370 = vmatprep.subr.mxu0 0.0
        %1371 = vmatpush2.msra.mxu0 0.0
        %1372 = vmatprep.subr.mxu0 0.0
        %1373 = vmatpush2.msra.mxu0 0.0
        %1374 = vmatprep.subr.mxu0 0.0
        %1375 = vmatpush2.msra.mxu0 0.0
        %1376 = vmatprep.subr.mxu0 0.0
        %1377 = vmatpush2.msra.mxu0 0.0
        %1378 = vmatprep.subr.mxu0 0.0
        %1379 = vmatpush2.msra.mxu0 0.0
        %1380 = vmatprep.subr.mxu0 0.0
        %1381 = vmatpush2.msra.mxu0 0.0
        %1382 = vmatprep.subr.mxu0 0.0
        %1383 = vmatpush2.msra.mxu0 0.0
        %1384 = vmatprep.subr.mxu0 0.0
        %1385 = vmatpush2.msra.mxu0 0.0
        %1386 = vmatprep.subr.mxu0 0.0
        %1387 = vmatpush2.msra.mxu0 0.0
        %1388 = vmatprep.subr.mxu0 0.0
        %1389 = vmatpush2.msra.mxu0 0.0
        %1390 = vmatprep.subr.mxu0 0.0
        %1391 = vmatpush2.msra.mxu0 0.0
        %1392 = vmatprep.subr.mxu0 0.0
        %1393 = vmatpush2.msra.mxu0 0.0
        %1394 = vmatprep.subr.mxu0 0.0
        %1395 = vmatpush2.msra.mxu0 0.0
        %1396 = vmatprep.mubr.f32.mxu0 0.0
        %1397 = vmatmul.mubr.f32.gmra.mxu0 %v1196
        %v1398 = vpop.f32.mrf.mxu0
        %v1399 = vadd.f32 %v1158, %v1398
        %v1400 = vpop.f32.mrf.mxu0
        %v1401 = vadd.f32 %v1158, %v1400
        %1402 = vmatprep.mubr.f32.mxu0 0.0
        %1403 = vmatmul.mubr.f32.gmra.mxu0 %v1199
        %v1404 = vpop.f32.mrf.mxu0
        %v1405 = vadd.f32 %v1163, %v1404
        %v1406 = vpop.f32.mrf.mxu0
        %v1407 = vadd.f32 %v1163, %v1406
        %1408 = vmatprep.mubr.f32.mxu0 0.0
        %1409 = vmatmul.mubr.f32.gmra.mxu0 %v1202
        %v1410 = vpop.f32.mrf.mxu0
        %v1411 = vadd.f32 %v1168, %v1410
        %v1412 = vpop.f32.mrf.mxu0
        %v1413 = vadd.f32 %v1168, %v1412
        %1414 = vmatprep.mubr.f32.mxu0 0.0
        %1415 = vmatmul.mubr.f32.gmra.mxu0 %v1205
        %v1416 = vpop.f32.mrf.mxu0
        %v1417 = vadd.f32 %v1173, %v1416
        %v1418 = vpop.f32.mrf.mxu0
        %v1419 = vadd.f32 %v1173, %v1418
        %1420 = vmatprep.mubr.f32.mxu0 0.0
        %1421 = vmatmul.mubr.f32.gmra.mxu0 %v1208
        %v1422 = vpop.f32.mrf.mxu0
        %v1423 = vadd.f32 %v1178, %v1422
        %v1424 = vpop.f32.mrf.mxu0
        %v1425 = vadd.f32 %v1178, %v1424
        %1426 = vmatprep.mubr.f32.mxu0 0.0
        %1427 = vmatmul.mubr.f32.gmra.mxu0 %v1211
        %v1428 = vpop.f32.mrf.mxu0
        %v1429 = vadd.f32 %v1183, %v1428
        %v1430 = vpop.f32.mrf.mxu0
        %v1431 = vadd.f32 %v1183, %v1430
        %1432 = vmatprep.mubr.f32.mxu0 0.0
        %1433 = vmatmul.mubr.f32.gmra.mxu0 %v1214
        %v1434 = vpop.f32.mrf.mxu0
        %v1435 = vadd.f32 %v1188, %v1434
        %v1436 = vpop.f32.mrf.mxu0
        %v1437 = vadd.f32 %v1188, %v1436
        %1438 = vmatprep.mubr.f32.mxu0 0.0
        %1439 = vmatmul.mubr.f32.gmra.mxu0 %v1217
        %v1440 = vpop.f32.mrf.mxu0
        %v1441 = vadd.f32 %v1193, %v1440
        %v1442 = vpop.f32.mrf.mxu0
        %v1443 = vadd.f32 %v1193, %v1442
        %1444 = vdwg.mxu0
        %v1445 = vmax.f32 %v1286, 0.0
        %v1446 = vmax.f32 %v1288, 0.0
        %v1447 = vmax.f32 %v1399, 0.0
        %v1448 = vmax.f32 %v1401, 0.0
        %v1449 = vmax.f32 %v1292, 0.0
        %v1450 = vmax.f32 %v1294, 0.0
        %v1451 = vmax.f32 %v1405, 0.0
        %v1452 = vmax.f32 %v1407, 0.0
        %v1453 = vmax.f32 %v1298, 0.0
        %v1454 = vmax.f32 %v1300, 0.0
        %v1455 = vmax.f32 %v1411, 0.0
        %v1456 = vmax.f32 %v1413, 0.0
        %v1457 = vmax.f32 %v1304, 0.0
        %v1458 = vmax.f32 %v1306, 0.0
        %v1459 = vmax.f32 %v1417, 0.0
        %v1460 = vmax.f32 %v1419, 0.0
        %v1461 = vmax.f32 %v1310, 0.0
        %v1462 = vmax.f32 %v1312, 0.0
        %v1463 = vmax.f32 %v1423, 0.0
        %v1464 = vmax.f32 %v1425, 0.0
        %v1465 = vmax.f32 %v1316, 0.0
        %v1466 = vmax.f32 %v1318, 0.0
        %v1467 = vmax.f32 %v1429, 0.0
        %v1468 = vmax.f32 %v1431, 0.0
        %v1469 = vmax.f32 %v1322, 0.0
        %v1470 = vmax.f32 %v1324, 0.0
        %v1471 = vmax.f32 %v1435, 0.0
        %v1472 = vmax.f32 %v1437, 0.0
        %v1473 = vmax.f32 %v1328, 0.0
        %v1474 = vmax.f32 %v1330, 0.0
        %v1475 = vmax.f32 %v1441, 0.0
        %v1476 = vmax.f32 %v1443, 0.0
        %v1477 = vld [vmem:[%s8] sm:$0xff]
        %v1478 = vld [vmem:[%s8 + $0x8] sm:$0xff]
        %v1479 = vld [vmem:[%s8 + $0x10] sm:$0xff]
        %v1480 = vld [vmem:[%s8 + $0x18] sm:$0xff]
        %v1481 = vld [vmem:[%s8 + $0x20] sm:$0xff]
        %v1482 = vld [vmem:[%s8 + $0x28] sm:$0xff]
        %v1483 = vld [vmem:[%s8 + $0x30] sm:$0xff]
        %v1484 = vld [vmem:[%s8 + $0x38] sm:$0xff]
        %v1485 = vld [vmem:[%s9] sm:$0xff]
        %v1486 = vld [vmem:[%s9 + $0x8] sm:$0xff]
        %v1487 = vld [vmem:[%s9 + $0x10] sm:$0xff]
        %v1488 = vld [vmem:[%s9 + $0x18] sm:$0xff]
        %v1489 = vld [vmem:[%s9 + $0x20] sm:$0xff]
        %v1490 = vld [vmem:[%s9 + $0x28] sm:$0xff]
        %v1491 = vld [vmem:[%s9 + $0x30] sm:$0xff]
        %v1492 = vld [vmem:[%s9 + $0x38] sm:$0xff]
        %1494 = vset.pattern.permute.xlu0 0
        %1495 = vperm.xlu0 %1494, %v1485
        %v1496 = vpop.permute.xlu0 %1495
        %1499 = vset.pattern.permute.xlu0 0
        %1500 = vperm.xlu0 %1499, %v1486
        %v1501 = vpop.permute.xlu0 %1500
        %1504 = vset.pattern.permute.xlu0 0
        %1505 = vperm.xlu0 %1504, %v1487
        %v1506 = vpop.permute.xlu0 %1505
        %1509 = vset.pattern.permute.xlu0 0
        %1510 = vperm.xlu0 %1509, %v1488
        %v1511 = vpop.permute.xlu0 %1510
        %1514 = vset.pattern.permute.xlu0 0
        %1515 = vperm.xlu0 %1514, %v1489
        %v1516 = vpop.permute.xlu0 %1515
        %1519 = vset.pattern.permute.xlu0 0
        %1520 = vperm.xlu0 %1519, %v1490
        %v1521 = vpop.permute.xlu0 %1520
        %1524 = vset.pattern.permute.xlu0 0
        %1525 = vperm.xlu0 %1524, %v1491
        %v1526 = vpop.permute.xlu0 %1525
        %1529 = vset.pattern.permute.xlu0 0
        %1530 = vperm.xlu0 %1529, %v1492
        %v1531 = vpop.permute.xlu0 %1530
        %v1534 = vsel %vm856, %v1477, 0
        %v1537 = vsel %vm856, %v1478, 0
        %v1540 = vsel %vm856, %v1479, 0
        %v1543 = vsel %vm856, %v1480, 0
        %v1546 = vsel %vm856, %v1481, 0
        %v1549 = vsel %vm856, %v1482, 0
        %v1552 = vsel %vm856, %v1483, 0
        %v1555 = vsel %vm856, %v1484, 0
        %1557 = vmatprep.subr.mxu0 0.0
        %1558 = vmatpush1.msra.mxu0 0.0
        %1559 = vmatprep.subr.mxu0 0.0
        %1560 = vmatpush1.msra.mxu0 0.0
        %1561 = vmatprep.subr.mxu0 0.0
        %1562 = vmatpush1.msra.mxu0 0.0
        %1563 = vmatprep.subr.mxu0 0.0
        %1564 = vmatpush1.msra.mxu0 0.0
        %1565 = vmatprep.subr.mxu0 0.0
        %1566 = vmatpush1.msra.mxu0 0.0
        %1567 = vmatprep.subr.mxu0 0.0
        %1568 = vmatpush1.msra.mxu0 0.0
        %1569 = vmatprep.subr.mxu0 0.0
        %1570 = vmatpush1.msra.mxu0 0.0
        %1571 = vmatprep.subr.mxu0 0.0
        %1572 = vmatpush1.msra.mxu0 0.0
        %1573 = vmatprep.subr.mxu0 %v1474
        %1574 = vmatpush1.msra.mxu0 %v1473
        %1575 = vmatprep.subr.mxu0 %v1470
        %1576 = vmatpush1.msra.mxu0 %v1469
        %1577 = vmatprep.subr.mxu0 %v1466
        %1578 = vmatpush1.msra.mxu0 %v1465
        %1579 = vmatprep.subr.mxu0 %v1462
        %1580 = vmatpush1.msra.mxu0 %v1461
        %1581 = vmatprep.subr.mxu0 %v1458
        %1582 = vmatpush1.msra.mxu0 %v1457
        %1583 = vmatprep.subr.mxu0 %v1454
        %1584 = vmatpush1.msra.mxu0 %v1453
        %1585 = vmatprep.subr.mxu0 %v1450
        %1586 = vmatpush1.msra.mxu0 %v1449
        %1587 = vmatprep.subr.mxu0 %v1446
        %1588 = vmatpush1.msra.mxu0 %v1445
        %1589 = vmatprep.subr.mxu0 0.0
        %1590 = vmatpush2.msra.mxu0 0.0
        %1591 = vmatprep.subr.mxu0 0.0
        %1592 = vmatpush2.msra.mxu0 0.0
        %1593 = vmatprep.subr.mxu0 0.0
        %1594 = vmatpush2.msra.mxu0 0.0
        %1595 = vmatprep.subr.mxu0 0.0
        %1596 = vmatpush2.msra.mxu0 0.0
        %1597 = vmatprep.subr.mxu0 0.0
        %1598 = vmatpush2.msra.mxu0 0.0
        %1599 = vmatprep.subr.mxu0 0.0
        %1600 = vmatpush2.msra.mxu0 0.0
        %1601 = vmatprep.subr.mxu0 0.0
        %1602 = vmatpush2.msra.mxu0 0.0
        %1603 = vmatprep.subr.mxu0 0.0
        %1604 = vmatpush2.msra.mxu0 0.0
        %1605 = vmatprep.subr.mxu0 0.0
        %1606 = vmatpush2.msra.mxu0 0.0
        %1607 = vmatprep.subr.mxu0 0.0
        %1608 = vmatpush2.msra.mxu0 0.0
        %1609 = vmatprep.subr.mxu0 0.0
        %1610 = vmatpush2.msra.mxu0 0.0
        %1611 = vmatprep.subr.mxu0 0.0
        %1612 = vmatpush2.msra.mxu0 0.0
        %1613 = vmatprep.subr.mxu0 0.0
        %1614 = vmatpush2.msra.mxu0 0.0
        %1615 = vmatprep.subr.mxu0 0.0
        %1616 = vmatpush2.msra.mxu0 0.0
        %1617 = vmatprep.subr.mxu0 0.0
        %1618 = vmatpush2.msra.mxu0 0.0
        %1619 = vmatprep.subr.mxu0 0.0
        %1620 = vmatpush2.msra.mxu0 0.0
        %1621 = vmatprep.mubr.f32.mxu0 0.0
        %1622 = vmatmul.mubr.f32.gmra.mxu0 %v1534
        %v1623 = vpop.f32.mrf.mxu0
        %v1624 = vadd.f32 %v1496, %v1623
        %v1625 = vpop.f32.mrf.mxu0
        %v1626 = vadd.f32 %v1496, %v1625
        %1627 = vmatprep.mubr.f32.mxu0 0.0
        %1628 = vmatmul.mubr.f32.gmra.mxu0 %v1537
        %v1629 = vpop.f32.mrf.mxu0
        %v1630 = vadd.f32 %v1501, %v1629
        %v1631 = vpop.f32.mrf.mxu0
        %v1632 = vadd.f32 %v1501, %v1631
        %1633 = vmatprep.mubr.f32.mxu0 0.0
        %1634 = vmatmul.mubr.f32.gmra.mxu0 %v1540
        %v1635 = vpop.f32.mrf.mxu0
        %v1636 = vadd.f32 %v1506, %v1635
        %v1637 = vpop.f32.mrf.mxu0
        %v1638 = vadd.f32 %v1506, %v1637
        %1639 = vmatprep.mubr.f32.mxu0 0.0
        %1640 = vmatmul.mubr.f32.gmra.mxu0 %v1543
        %v1641 = vpop.f32.mrf.mxu0
        %v1642 = vadd.f32 %v1511, %v1641
        %v1643 = vpop.f32.mrf.mxu0
        %v1644 = vadd.f32 %v1511, %v1643
        %1645 = vmatprep.mubr.f32.mxu0 0.0
        %1646 = vmatmul.mubr.f32.gmra.mxu0 %v1546
        %v1647 = vpop.f32.mrf.mxu0
        %v1648 = vadd.f32 %v1516, %v1647
        %v1649 = vpop.f32.mrf.mxu0
        %v1650 = vadd.f32 %v1516, %v1649
        %1651 = vmatprep.mubr.f32.mxu0 0.0
        %1652 = vmatmul.mubr.f32.gmra.mxu0 %v1549
        %v1653 = vpop.f32.mrf.mxu0
        %v1654 = vadd.f32 %v1521, %v1653
        %v1655 = vpop.f32.mrf.mxu0
        %v1656 = vadd.f32 %v1521, %v1655
        %1657 = vmatprep.mubr.f32.mxu0 0.0
        %1658 = vmatmul.mubr.f32.gmra.mxu0 %v1552
        %v1659 = vpop.f32.mrf.mxu0
        %v1660 = vadd.f32 %v1526, %v1659
        %v1661 = vpop.f32.mrf.mxu0
        %v1662 = vadd.f32 %v1526, %v1661
        %1663 = vmatprep.mubr.f32.mxu0 0.0
        %1664 = vmatmul.mubr.f32.gmra.mxu0 %v1555
        %v1665 = vpop.f32.mrf.mxu0
        %v1666 = vadd.f32 %v1531, %v1665
        %v1667 = vpop.f32.mrf.mxu0
        %v1668 = vadd.f32 %v1531, %v1667
        %1669 = vdwg.mxu0
        %1670 = vmatprep.subr.mxu0 0.0
        %1671 = vmatpush1.msra.mxu0 0.0
        %1672 = vmatprep.subr.mxu0 0.0
        %1673 = vmatpush1.msra.mxu0 0.0
        %1674 = vmatprep.subr.mxu0 0.0
        %1675 = vmatpush1.msra.mxu0 0.0
        %1676 = vmatprep.subr.mxu0 0.0
        %1677 = vmatpush1.msra.mxu0 0.0
        %1678 = vmatprep.subr.mxu0 0.0
        %1679 = vmatpush1.msra.mxu0 0.0
        %1680 = vmatprep.subr.mxu0 0.0
        %1681 = vmatpush1.msra.mxu0 0.0
        %1682 = vmatprep.subr.mxu0 0.0
        %1683 = vmatpush1.msra.mxu0 0.0
        %1684 = vmatprep.subr.mxu0 0.0
        %1685 = vmatpush1.msra.mxu0 0.0
        %1686 = vmatprep.subr.mxu0 %v1476
        %1687 = vmatpush1.msra.mxu0 %v1475
        %1688 = vmatprep.subr.mxu0 %v1472
        %1689 = vmatpush1.msra.mxu0 %v1471
        %1690 = vmatprep.subr.mxu0 %v1468
        %1691 = vmatpush1.msra.mxu0 %v1467
        %1692 = vmatprep.subr.mxu0 %v1464
        %1693 = vmatpush1.msra.mxu0 %v1463
        %1694 = vmatprep.subr.mxu0 %v1460
        %1695 = vmatpush1.msra.mxu0 %v1459
        %1696 = vmatprep.subr.mxu0 %v1456
        %1697 = vmatpush1.msra.mxu0 %v1455
        %1698 = vmatprep.subr.mxu0 %v1452
        %1699 = vmatpush1.msra.mxu0 %v1451
        %1700 = vmatprep.subr.mxu0 %v1448
        %1701 = vmatpush1.msra.mxu0 %v1447
        %1702 = vmatprep.subr.mxu0 0.0
        %1703 = vmatpush2.msra.mxu0 0.0
        %1704 = vmatprep.subr.mxu0 0.0
        %1705 = vmatpush2.msra.mxu0 0.0
        %1706 = vmatprep.subr.mxu0 0.0
        %1707 = vmatpush2.msra.mxu0 0.0
        %1708 = vmatprep.subr.mxu0 0.0
        %1709 = vmatpush2.msra.mxu0 0.0
        %1710 = vmatprep.subr.mxu0 0.0
        %1711 = vmatpush2.msra.mxu0 0.0
        %1712 = vmatprep.subr.mxu0 0.0
        %1713 = vmatpush2.msra.mxu0 0.0
        %1714 = vmatprep.subr.mxu0 0.0
        %1715 = vmatpush2.msra.mxu0 0.0
        %1716 = vmatprep.subr.mxu0 0.0
        %1717 = vmatpush2.msra.mxu0 0.0
        %1718 = vmatprep.subr.mxu0 0.0
        %1719 = vmatpush2.msra.mxu0 0.0
        %1720 = vmatprep.subr.mxu0 0.0
        %1721 = vmatpush2.msra.mxu0 0.0
        %1722 = vmatprep.subr.mxu0 0.0
        %1723 = vmatpush2.msra.mxu0 0.0
        %1724 = vmatprep.subr.mxu0 0.0
        %1725 = vmatpush2.msra.mxu0 0.0
        %1726 = vmatprep.subr.mxu0 0.0
        %1727 = vmatpush2.msra.mxu0 0.0
        %1728 = vmatprep.subr.mxu0 0.0
        %1729 = vmatpush2.msra.mxu0 0.0
        %1730 = vmatprep.subr.mxu0 0.0
        %1731 = vmatpush2.msra.mxu0 0.0
        %1732 = vmatprep.subr.mxu0 0.0
        %1733 = vmatpush2.msra.mxu0 0.0
        %1734 = vmatprep.mubr.f32.mxu0 0.0
        %1735 = vmatmul.mubr.f32.gmra.mxu0 %v1534
        %v1736 = vpop.f32.mrf.mxu0
        %v1737 = vadd.f32 %v1496, %v1736
        %v1738 = vpop.f32.mrf.mxu0
        %v1739 = vadd.f32 %v1496, %v1738
        %1740 = vmatprep.mubr.f32.mxu0 0.0
        %1741 = vmatmul.mubr.f32.gmra.mxu0 %v1537
        %v1742 = vpop.f32.mrf.mxu0
        %v1743 = vadd.f32 %v1501, %v1742
        %v1744 = vpop.f32.mrf.mxu0
        %v1745 = vadd.f32 %v1501, %v1744
        %1746 = vmatprep.mubr.f32.mxu0 0.0
        %1747 = vmatmul.mubr.f32.gmra.mxu0 %v1540
        %v1748 = vpop.f32.mrf.mxu0
        %v1749 = vadd.f32 %v1506, %v1748
        %v1750 = vpop.f32.mrf.mxu0
        %v1751 = vadd.f32 %v1506, %v1750
        %1752 = vmatprep.mubr.f32.mxu0 0.0
        %1753 = vmatmul.mubr.f32.gmra.mxu0 %v1543
        %v1754 = vpop.f32.mrf.mxu0
        %v1755 = vadd.f32 %v1511, %v1754
        %v1756 = vpop.f32.mrf.mxu0
        %v1757 = vadd.f32 %v1511, %v1756
        %1758 = vmatprep.mubr.f32.mxu0 0.0
        %1759 = vmatmul.mubr.f32.gmra.mxu0 %v1546
        %v1760 = vpop.f32.mrf.mxu0
        %v1761 = vadd.f32 %v1516, %v1760
        %v1762 = vpop.f32.mrf.mxu0
        %v1763 = vadd.f32 %v1516, %v1762
        %1764 = vmatprep.mubr.f32.mxu0 0.0
        %1765 = vmatmul.mubr.f32.gmra.mxu0 %v1549
        %v1766 = vpop.f32.mrf.mxu0
        %v1767 = vadd.f32 %v1521, %v1766
        %v1768 = vpop.f32.mrf.mxu0
        %v1769 = vadd.f32 %v1521, %v1768
        %1770 = vmatprep.mubr.f32.mxu0 0.0
        %1771 = vmatmul.mubr.f32.gmra.mxu0 %v1552
        %v1772 = vpop.f32.mrf.mxu0
        %v1773 = vadd.f32 %v1526, %v1772
        %v1774 = vpop.f32.mrf.mxu0
        %v1775 = vadd.f32 %v1526, %v1774
        %1776 = vmatprep.mubr.f32.mxu0 0.0
        %1777 = vmatmul.mubr.f32.gmra.mxu0 %v1555
        %v1778 = vpop.f32.mrf.mxu0
        %v1779 = vadd.f32 %v1531, %v1778
        %v1780 = vpop.f32.mrf.mxu0
        %v1781 = vadd.f32 %v1531, %v1780
        %1782 = vdwg.mxu0
        %v1783 = vadd.f32 %v1107, %v1624
        %v1784 = vadd.f32 %v1108, %v1626
        %v1785 = vadd.f32 %v1109, %v1737
        %v1786 = vadd.f32 %v1110, %v1739
        %v1787 = vadd.f32 %v1111, %v1630
        %v1788 = vadd.f32 %v1112, %v1632
        %v1789 = vadd.f32 %v1113, %v1743
        %v1790 = vadd.f32 %v1114, %v1745
        %v1791 = vadd.f32 %v1115, %v1636
        %v1792 = vadd.f32 %v1116, %v1638
        %v1793 = vadd.f32 %v1117, %v1749
        %v1794 = vadd.f32 %v1118, %v1751
        %v1795 = vadd.f32 %v1119, %v1642
        %v1796 = vadd.f32 %v1120, %v1644
        %v1797 = vadd.f32 %v1121, %v1755
        %v1798 = vadd.f32 %v1122, %v1757
        %v1799 = vadd.f32 %v1123, %v1648
        %v1800 = vadd.f32 %v1124, %v1650
        %v1801 = vadd.f32 %v1125, %v1761
        %v1802 = vadd.f32 %v1126, %v1763
        %v1803 = vadd.f32 %v1127, %v1654
        %v1804 = vadd.f32 %v1128, %v1656
        %v1805 = vadd.f32 %v1129, %v1767
        %v1806 = vadd.f32 %v1130, %v1769
        %v1807 = vadd.f32 %v1131, %v1660
        %v1808 = vadd.f32 %v1132, %v1662
        %v1809 = vadd.f32 %v1133, %v1773
        %v1810 = vadd.f32 %v1134, %v1775
        %v1811 = vadd.f32 %v1135, %v1666
        %v1812 = vadd.f32 %v1136, %v1668
        %v1813 = vadd.f32 %v1137, %v1779
        %v1814 = vadd.f32 %v1138, %v1781
        %v1815 = vmax.f32 %v1783, 0.0
        %v1816 = vmax.f32 %v1784, 0.0
        %v1817 = vmax.f32 %v1785, 0.0
        %v1818 = vmax.f32 %v1786, 0.0
        %v1819 = vmax.f32 %v1787, 0.0
        %v1820 = vmax.f32 %v1788, 0.0
        %v1821 = vmax.f32 %v1789, 0.0
        %v1822 = vmax.f32 %v1790, 0.0
        %v1823 = vmax.f32 %v1791, 0.0
        %v1824 = vmax.f32 %v1792, 0.0
        %v1825 = vmax.f32 %v1793, 0.0
        %v1826 = vmax.f32 %v1794, 0.0
        %v1827 = vmax.f32 %v1795, 0.0
        %v1828 = vmax.f32 %v1796, 0.0
        %v1829 = vmax.f32 %v1797, 0.0
        %v1830 = vmax.f32 %v1798, 0.0
        %v1831 = vmax.f32 %v1799, 0.0
        %v1832 = vmax.f32 %v1800, 0.0
        %v1833 = vmax.f32 %v1801, 0.0
        %v1834 = vmax.f32 %v1802, 0.0
        %v1835 = vmax.f32 %v1803, 0.0
        %v1836 = vmax.f32 %v1804, 0.0
        %v1837 = vmax.f32 %v1805, 0.0
        %v1838 = vmax.f32 %v1806, 0.0
        %v1839 = vmax.f32 %v1807, 0.0
        %v1840 = vmax.f32 %v1808, 0.0
        %v1841 = vmax.f32 %v1809, 0.0
        %v1842 = vmax.f32 %v1810, 0.0
        %v1843 = vmax.f32 %v1811, 0.0
        %v1844 = vmax.f32 %v1812, 0.0
        %v1845 = vmax.f32 %v1813, 0.0
        %v1846 = vmax.f32 %v1814, 0.0
        %s1847 = scalar_lea.vmem %s5, 64
        %v1848 = vld [vmem:[%s1847] sm:$0xff]
        %v1849 = vld [vmem:[%s1847 + $0x8] sm:$0xff]
        %v1850 = vld [vmem:[%s1847 + $0x10] sm:$0xff]
        %v1851 = vld [vmem:[%s1847 + $0x18] sm:$0xff]
        %v1852 = vld [vmem:[%s1847 + $0x20] sm:$0xff]
        %v1853 = vld [vmem:[%s1847 + $0x28] sm:$0xff]
        %v1854 = vld [vmem:[%s1847 + $0x30] sm:$0xff]
        %v1855 = vld [vmem:[%s1847 + $0x38] sm:$0xff]
        %1857 = vset.pattern.permute.xlu0 0
        %1858 = vperm.xlu0 %1857, %v800
        %v1859 = vpop.permute.xlu0 %1858
        %1862 = vset.pattern.permute.xlu0 0
        %1863 = vperm.xlu0 %1862, %v801
        %v1864 = vpop.permute.xlu0 %1863
        %1867 = vset.pattern.permute.xlu0 0
        %1868 = vperm.xlu0 %1867, %v802
        %v1869 = vpop.permute.xlu0 %1868
        %1872 = vset.pattern.permute.xlu0 0
        %1873 = vperm.xlu0 %1872, %v803
        %v1874 = vpop.permute.xlu0 %1873
        %1877 = vset.pattern.permute.xlu0 0
        %1878 = vperm.xlu0 %1877, %v804
        %v1879 = vpop.permute.xlu0 %1878
        %1882 = vset.pattern.permute.xlu0 0
        %1883 = vperm.xlu0 %1882, %v805
        %v1884 = vpop.permute.xlu0 %1883
        %1887 = vset.pattern.permute.xlu0 0
        %1888 = vperm.xlu0 %1887, %v806
        %v1889 = vpop.permute.xlu0 %1888
        %1892 = vset.pattern.permute.xlu0 0
        %1893 = vperm.xlu0 %1892, %v807
        %v1894 = vpop.permute.xlu0 %1893
        %v1897 = vsel %vm856, %v1848, 0
        %v1900 = vsel %vm856, %v1849, 0
        %v1903 = vsel %vm856, %v1850, 0
        %v1906 = vsel %vm856, %v1851, 0
        %v1909 = vsel %vm856, %v1852, 0
        %v1912 = vsel %vm856, %v1853, 0
        %v1915 = vsel %vm856, %v1854, 0
        %v1918 = vsel %vm856, %v1855, 0
        %1920 = vmatprep.subr.mxu0 0.0
        %1921 = vmatpush1.msra.mxu0 0.0
        %1922 = vmatprep.subr.mxu0 0.0
        %1923 = vmatpush1.msra.mxu0 0.0
        %1924 = vmatprep.subr.mxu0 0.0
        %1925 = vmatpush1.msra.mxu0 0.0
        %1926 = vmatprep.subr.mxu0 0.0
        %1927 = vmatpush1.msra.mxu0 0.0
        %1928 = vmatprep.subr.mxu0 0.0
        %1929 = vmatpush1.msra.mxu0 0.0
        %1930 = vmatprep.subr.mxu0 0.0
        %1931 = vmatpush1.msra.mxu0 0.0
        %1932 = vmatprep.subr.mxu0 0.0
        %1933 = vmatpush1.msra.mxu0 0.0
        %1934 = vmatprep.subr.mxu0 0.0
        %1935 = vmatpush1.msra.mxu0 0.0
        %1936 = vmatprep.subr.mxu0 %v1844
        %1937 = vmatpush1.msra.mxu0 %v1843
        %1938 = vmatprep.subr.mxu0 %v1840
        %1939 = vmatpush1.msra.mxu0 %v1839
        %1940 = vmatprep.subr.mxu0 %v1836
        %1941 = vmatpush1.msra.mxu0 %v1835
        %1942 = vmatprep.subr.mxu0 %v1832
        %1943 = vmatpush1.msra.mxu0 %v1831
        %1944 = vmatprep.subr.mxu0 %v1828
        %1945 = vmatpush1.msra.mxu0 %v1827
        %1946 = vmatprep.subr.mxu0 %v1824
        %1947 = vmatpush1.msra.mxu0 %v1823
        %1948 = vmatprep.subr.mxu0 %v1820
        %1949 = vmatpush1.msra.mxu0 %v1819
        %1950 = vmatprep.subr.mxu0 %v1816
        %1951 = vmatpush1.msra.mxu0 %v1815
        %1952 = vmatprep.subr.mxu0 0.0
        %1953 = vmatpush2.msra.mxu0 0.0
        %1954 = vmatprep.subr.mxu0 0.0
        %1955 = vmatpush2.msra.mxu0 0.0
        %1956 = vmatprep.subr.mxu0 0.0
        %1957 = vmatpush2.msra.mxu0 0.0
        %1958 = vmatprep.subr.mxu0 0.0
        %1959 = vmatpush2.msra.mxu0 0.0
        %1960 = vmatprep.subr.mxu0 0.0
        %1961 = vmatpush2.msra.mxu0 0.0
        %1962 = vmatprep.subr.mxu0 0.0
        %1963 = vmatpush2.msra.mxu0 0.0
        %1964 = vmatprep.subr.mxu0 0.0
        %1965 = vmatpush2.msra.mxu0 0.0
        %1966 = vmatprep.subr.mxu0 0.0
        %1967 = vmatpush2.msra.mxu0 0.0
        %1968 = vmatprep.subr.mxu0 0.0
        %1969 = vmatpush2.msra.mxu0 0.0
        %1970 = vmatprep.subr.mxu0 0.0
        %1971 = vmatpush2.msra.mxu0 0.0
        %1972 = vmatprep.subr.mxu0 0.0
        %1973 = vmatpush2.msra.mxu0 0.0
        %1974 = vmatprep.subr.mxu0 0.0
        %1975 = vmatpush2.msra.mxu0 0.0
        %1976 = vmatprep.subr.mxu0 0.0
        %1977 = vmatpush2.msra.mxu0 0.0
        %1978 = vmatprep.subr.mxu0 0.0
        %1979 = vmatpush2.msra.mxu0 0.0
        %1980 = vmatprep.subr.mxu0 0.0
        %1981 = vmatpush2.msra.mxu0 0.0
        %1982 = vmatprep.subr.mxu0 0.0
        %1983 = vmatpush2.msra.mxu0 0.0
        %1984 = vmatprep.mubr.f32.mxu0 0.0
        %1985 = vmatmul.mubr.f32.gmra.mxu0 %v1897
        %v1986 = vpop.f32.mrf.mxu0
        %v1987 = vadd.f32 %v1859, %v1986
        %v1988 = vpop.f32.mrf.mxu0
        %v1989 = vadd.f32 %v1859, %v1988
        %1990 = vmatprep.mubr.f32.mxu0 0.0
        %1991 = vmatmul.mubr.f32.gmra.mxu0 %v1900
        %v1992 = vpop.f32.mrf.mxu0
        %v1993 = vadd.f32 %v1864, %v1992
        %v1994 = vpop.f32.mrf.mxu0
        %v1995 = vadd.f32 %v1864, %v1994
        %1996 = vmatprep.mubr.f32.mxu0 0.0
        %1997 = vmatmul.mubr.f32.gmra.mxu0 %v1903
        %v1998 = vpop.f32.mrf.mxu0
        %v1999 = vadd.f32 %v1869, %v1998
        %v2000 = vpop.f32.mrf.mxu0
        %v2001 = vadd.f32 %v1869, %v2000
        %2002 = vmatprep.mubr.f32.mxu0 0.0
        %2003 = vmatmul.mubr.f32.gmra.mxu0 %v1906
        %v2004 = vpop.f32.mrf.mxu0
        %v2005 = vadd.f32 %v1874, %v2004
        %v2006 = vpop.f32.mrf.mxu0
        %v2007 = vadd.f32 %v1874, %v2006
        %2008 = vmatprep.mubr.f32.mxu0 0.0
        %2009 = vmatmul.mubr.f32.gmra.mxu0 %v1909
        %v2010 = vpop.f32.mrf.mxu0
        %v2011 = vadd.f32 %v1879, %v2010
        %v2012 = vpop.f32.mrf.mxu0
        %v2013 = vadd.f32 %v1879, %v2012
        %2014 = vmatprep.mubr.f32.mxu0 0.0
        %2015 = vmatmul.mubr.f32.gmra.mxu0 %v1912
        %v2016 = vpop.f32.mrf.mxu0
        %v2017 = vadd.f32 %v1884, %v2016
        %v2018 = vpop.f32.mrf.mxu0
        %v2019 = vadd.f32 %v1884, %v2018
        %2020 = vmatprep.mubr.f32.mxu0 0.0
        %2021 = vmatmul.mubr.f32.gmra.mxu0 %v1915
        %v2022 = vpop.f32.mrf.mxu0
        %v2023 = vadd.f32 %v1889, %v2022
        %v2024 = vpop.f32.mrf.mxu0
        %v2025 = vadd.f32 %v1889, %v2024
        %2026 = vmatprep.mubr.f32.mxu0 0.0
        %2027 = vmatmul.mubr.f32.gmra.mxu0 %v1918
        %v2028 = vpop.f32.mrf.mxu0
        %v2029 = vadd.f32 %v1894, %v2028
        %v2030 = vpop.f32.mrf.mxu0
        %v2031 = vadd.f32 %v1894, %v2030
        %2032 = vdwg.mxu0
        %2033 = vmatprep.subr.mxu0 0.0
        %2034 = vmatpush1.msra.mxu0 0.0
        %2035 = vmatprep.subr.mxu0 0.0
        %2036 = vmatpush1.msra.mxu0 0.0
        %2037 = vmatprep.subr.mxu0 0.0
        %2038 = vmatpush1.msra.mxu0 0.0
        %2039 = vmatprep.subr.mxu0 0.0
        %2040 = vmatpush1.msra.mxu0 0.0
        %2041 = vmatprep.subr.mxu0 0.0
        %2042 = vmatpush1.msra.mxu0 0.0
        %2043 = vmatprep.subr.mxu0 0.0
        %2044 = vmatpush1.msra.mxu0 0.0
        %2045 = vmatprep.subr.mxu0 0.0
        %2046 = vmatpush1.msra.mxu0 0.0
        %2047 = vmatprep.subr.mxu0 0.0
        %2048 = vmatpush1.msra.mxu0 0.0
        %2049 = vmatprep.subr.mxu0 %v1846
        %2050 = vmatpush1.msra.mxu0 %v1845
        %2051 = vmatprep.subr.mxu0 %v1842
        %2052 = vmatpush1.msra.mxu0 %v1841
        %2053 = vmatprep.subr.mxu0 %v1838
        %2054 = vmatpush1.msra.mxu0 %v1837
        %2055 = vmatprep.subr.mxu0 %v1834
        %2056 = vmatpush1.msra.mxu0 %v1833
        %2057 = vmatprep.subr.mxu0 %v1830
        %2058 = vmatpush1.msra.mxu0 %v1829
        %2059 = vmatprep.subr.mxu0 %v1826
        %2060 = vmatpush1.msra.mxu0 %v1825
        %2061 = vmatprep.subr.mxu0 %v1822
        %2062 = vmatpush1.msra.mxu0 %v1821
        %2063 = vmatprep.subr.mxu0 %v1818
        %2064 = vmatpush1.msra.mxu0 %v1817
        %2065 = vmatprep.subr.mxu0 0.0
        %2066 = vmatpush2.msra.mxu0 0.0
        %2067 = vmatprep.subr.mxu0 0.0
        %2068 = vmatpush2.msra.mxu0 0.0
        %2069 = vmatprep.subr.mxu0 0.0
        %2070 = vmatpush2.msra.mxu0 0.0
        %2071 = vmatprep.subr.mxu0 0.0
        %2072 = vmatpush2.msra.mxu0 0.0
        %2073 = vmatprep.subr.mxu0 0.0
        %2074 = vmatpush2.msra.mxu0 0.0
        %2075 = vmatprep.subr.mxu0 0.0
        %2076 = vmatpush2.msra.mxu0 0.0
        %2077 = vmatprep.subr.mxu0 0.0
        %2078 = vmatpush2.msra.mxu0 0.0
        %2079 = vmatprep.subr.mxu0 0.0
        %2080 = vmatpush2.msra.mxu0 0.0
        %2081 = vmatprep.subr.mxu0 0.0
        %2082 = vmatpush2.msra.mxu0 0.0
        %2083 = vmatprep.subr.mxu0 0.0
        %2084 = vmatpush2.msra.mxu0 0.0
        %2085 = vmatprep.subr.mxu0 0.0
        %2086 = vmatpush2.msra.mxu0 0.0
        %2087 = vmatprep.subr.mxu0 0.0
        %2088 = vmatpush2.msra.mxu0 0.0
        %2089 = vmatprep.subr.mxu0 0.0
        %2090 = vmatpush2.msra.mxu0 0.0
        %2091 = vmatprep.subr.mxu0 0.0
        %2092 = vmatpush2.msra.mxu0 0.0
        %2093 = vmatprep.subr.mxu0 0.0
        %2094 = vmatpush2.msra.mxu0 0.0
        %2095 = vmatprep.subr.mxu0 0.0
        %2096 = vmatpush2.msra.mxu0 0.0
        %2097 = vmatprep.mubr.f32.mxu0 0.0
        %2098 = vmatmul.mubr.f32.gmra.mxu0 %v1897
        %v2099 = vpop.f32.mrf.mxu0
        %v2100 = vadd.f32 %v1859, %v2099
        %v2101 = vpop.f32.mrf.mxu0
        %v2102 = vadd.f32 %v1859, %v2101
        %2103 = vmatprep.mubr.f32.mxu0 0.0
        %2104 = vmatmul.mubr.f32.gmra.mxu0 %v1900
        %v2105 = vpop.f32.mrf.mxu0
        %v2106 = vadd.f32 %v1864, %v2105
        %v2107 = vpop.f32.mrf.mxu0
        %v2108 = vadd.f32 %v1864, %v2107
        %2109 = vmatprep.mubr.f32.mxu0 0.0
        %2110 = vmatmul.mubr.f32.gmra.mxu0 %v1903
        %v2111 = vpop.f32.mrf.mxu0
        %v2112 = vadd.f32 %v1869, %v2111
        %v2113 = vpop.f32.mrf.mxu0
        %v2114 = vadd.f32 %v1869, %v2113
        %2115 = vmatprep.mubr.f32.mxu0 0.0
        %2116 = vmatmul.mubr.f32.gmra.mxu0 %v1906
        %v2117 = vpop.f32.mrf.mxu0
        %v2118 = vadd.f32 %v1874, %v2117
        %v2119 = vpop.f32.mrf.mxu0
        %v2120 = vadd.f32 %v1874, %v2119
        %2121 = vmatprep.mubr.f32.mxu0 0.0
        %2122 = vmatmul.mubr.f32.gmra.mxu0 %v1909
        %v2123 = vpop.f32.mrf.mxu0
        %v2124 = vadd.f32 %v1879, %v2123
        %v2125 = vpop.f32.mrf.mxu0
        %v2126 = vadd.f32 %v1879, %v2125
        %2127 = vmatprep.mubr.f32.mxu0 0.0
        %2128 = vmatmul.mubr.f32.gmra.mxu0 %v1912
        %v2129 = vpop.f32.mrf.mxu0
        %v2130 = vadd.f32 %v1884, %v2129
        %v2131 = vpop.f32.mrf.mxu0
        %v2132 = vadd.f32 %v1884, %v2131
        %2133 = vmatprep.mubr.f32.mxu0 0.0
        %2134 = vmatmul.mubr.f32.gmra.mxu0 %v1915
        %v2135 = vpop.f32.mrf.mxu0
        %v2136 = vadd.f32 %v1889, %v2135
        %v2137 = vpop.f32.mrf.mxu0
        %v2138 = vadd.f32 %v1889, %v2137
        %2139 = vmatprep.mubr.f32.mxu0 0.0
        %2140 = vmatmul.mubr.f32.gmra.mxu0 %v1918
        %v2141 = vpop.f32.mrf.mxu0
        %v2142 = vadd.f32 %v1894, %v2141
        %v2143 = vpop.f32.mrf.mxu0
        %v2144 = vadd.f32 %v1894, %v2143
        %2145 = vdwg.mxu0
        %v2146 = vmax.f32 %v1987, 0.0
        %v2147 = vmax.f32 %v1989, 0.0
        %v2148 = vmax.f32 %v2100, 0.0
        %v2149 = vmax.f32 %v2102, 0.0
        %v2150 = vmax.f32 %v1993, 0.0
        %v2151 = vmax.f32 %v1995, 0.0
        %v2152 = vmax.f32 %v2106, 0.0
        %v2153 = vmax.f32 %v2108, 0.0
        %v2154 = vmax.f32 %v1999, 0.0
        %v2155 = vmax.f32 %v2001, 0.0
        %v2156 = vmax.f32 %v2112, 0.0
        %v2157 = vmax.f32 %v2114, 0.0
        %v2158 = vmax.f32 %v2005, 0.0
        %v2159 = vmax.f32 %v2007, 0.0
        %v2160 = vmax.f32 %v2118, 0.0
        %v2161 = vmax.f32 %v2120, 0.0
        %v2162 = vmax.f32 %v2011, 0.0
        %v2163 = vmax.f32 %v2013, 0.0
        %v2164 = vmax.f32 %v2124, 0.0
        %v2165 = vmax.f32 %v2126, 0.0
        %v2166 = vmax.f32 %v2017, 0.0
        %v2167 = vmax.f32 %v2019, 0.0
        %v2168 = vmax.f32 %v2130, 0.0
        %v2169 = vmax.f32 %v2132, 0.0
        %v2170 = vmax.f32 %v2023, 0.0
        %v2171 = vmax.f32 %v2025, 0.0
        %v2172 = vmax.f32 %v2136, 0.0
        %v2173 = vmax.f32 %v2138, 0.0
        %v2174 = vmax.f32 %v2029, 0.0
        %v2175 = vmax.f32 %v2031, 0.0
        %v2176 = vmax.f32 %v2142, 0.0
        %v2177 = vmax.f32 %v2144, 0.0
        %s2178 = scalar_lea.vmem %s6, 64
        %v2179 = vld [vmem:[%s2178] sm:$0xff]
        %v2180 = vld [vmem:[%s2178 + $0x8] sm:$0xff]
        %v2181 = vld [vmem:[%s2178 + $0x10] sm:$0xff]
        %v2182 = vld [vmem:[%s2178 + $0x18] sm:$0xff]
        %v2183 = vld [vmem:[%s2178 + $0x20] sm:$0xff]
        %v2184 = vld [vmem:[%s2178 + $0x28] sm:$0xff]
        %v2185 = vld [vmem:[%s2178 + $0x30] sm:$0xff]
        %v2186 = vld [vmem:[%s2178 + $0x38] sm:$0xff]
        %s2187 = scalar_lea.vmem %s7, 64
        %v2188 = vld [vmem:[%s2187] sm:$0xff]
        %v2189 = vld [vmem:[%s2187 + $0x8] sm:$0xff]
        %v2190 = vld [vmem:[%s2187 + $0x10] sm:$0xff]
        %v2191 = vld [vmem:[%s2187 + $0x18] sm:$0xff]
        %v2192 = vld [vmem:[%s2187 + $0x20] sm:$0xff]
        %v2193 = vld [vmem:[%s2187 + $0x28] sm:$0xff]
        %v2194 = vld [vmem:[%s2187 + $0x30] sm:$0xff]
        %v2195 = vld [vmem:[%s2187 + $0x38] sm:$0xff]
        %2197 = vset.pattern.permute.xlu0 0
        %2198 = vperm.xlu0 %2197, %v2188
        %v2199 = vpop.permute.xlu0 %2198
        %2202 = vset.pattern.permute.xlu0 0
        %2203 = vperm.xlu0 %2202, %v2189
        %v2204 = vpop.permute.xlu0 %2203
        %2207 = vset.pattern.permute.xlu0 0
        %2208 = vperm.xlu0 %2207, %v2190
        %v2209 = vpop.permute.xlu0 %2208
        %2212 = vset.pattern.permute.xlu0 0
        %2213 = vperm.xlu0 %2212, %v2191
        %v2214 = vpop.permute.xlu0 %2213
        %2217 = vset.pattern.permute.xlu0 0
        %2218 = vperm.xlu0 %2217, %v2192
        %v2219 = vpop.permute.xlu0 %2218
        %2222 = vset.pattern.permute.xlu0 0
        %2223 = vperm.xlu0 %2222, %v2193
        %v2224 = vpop.permute.xlu0 %2223
        %2227 = vset.pattern.permute.xlu0 0
        %2228 = vperm.xlu0 %2227, %v2194
        %v2229 = vpop.permute.xlu0 %2228
        %2232 = vset.pattern.permute.xlu0 0
        %2233 = vperm.xlu0 %2232, %v2195
        %v2234 = vpop.permute.xlu0 %2233
        %v2237 = vsel %vm856, %v2179, 0
        %v2240 = vsel %vm856, %v2180, 0
        %v2243 = vsel %vm856, %v2181, 0
        %v2246 = vsel %vm856, %v2182, 0
        %v2249 = vsel %vm856, %v2183, 0
        %v2252 = vsel %vm856, %v2184, 0
        %v2255 = vsel %vm856, %v2185, 0
        %v2258 = vsel %vm856, %v2186, 0
        %2260 = vmatprep.subr.mxu0 0.0
        %2261 = vmatpush1.msra.mxu0 0.0
        %2262 = vmatprep.subr.mxu0 0.0
        %2263 = vmatpush1.msra.mxu0 0.0
        %2264 = vmatprep.subr.mxu0 0.0
        %2265 = vmatpush1.msra.mxu0 0.0
        %2266 = vmatprep.subr.mxu0 0.0
        %2267 = vmatpush1.msra.mxu0 0.0
        %2268 = vmatprep.subr.mxu0 0.0
        %2269 = vmatpush1.msra.mxu0 0.0
        %2270 = vmatprep.subr.mxu0 0.0
        %2271 = vmatpush1.msra.mxu0 0.0
        %2272 = vmatprep.subr.mxu0 0.0
        %2273 = vmatpush1.msra.mxu0 0.0
        %2274 = vmatprep.subr.mxu0 0.0
        %2275 = vmatpush1.msra.mxu0 0.0
        %2276 = vmatprep.subr.mxu0 %v2175
        %2277 = vmatpush1.msra.mxu0 %v2174
        %2278 = vmatprep.subr.mxu0 %v2171
        %2279 = vmatpush1.msra.mxu0 %v2170
        %2280 = vmatprep.subr.mxu0 %v2167
        %2281 = vmatpush1.msra.mxu0 %v2166
        %2282 = vmatprep.subr.mxu0 %v2163
        %2283 = vmatpush1.msra.mxu0 %v2162
        %2284 = vmatprep.subr.mxu0 %v2159
        %2285 = vmatpush1.msra.mxu0 %v2158
        %2286 = vmatprep.subr.mxu0 %v2155
        %2287 = vmatpush1.msra.mxu0 %v2154
        %2288 = vmatprep.subr.mxu0 %v2151
        %2289 = vmatpush1.msra.mxu0 %v2150
        %2290 = vmatprep.subr.mxu0 %v2147
        %2291 = vmatpush1.msra.mxu0 %v2146
        %2292 = vmatprep.subr.mxu0 0.0
        %2293 = vmatpush2.msra.mxu0 0.0
        %2294 = vmatprep.subr.mxu0 0.0
        %2295 = vmatpush2.msra.mxu0 0.0
        %2296 = vmatprep.subr.mxu0 0.0
        %2297 = vmatpush2.msra.mxu0 0.0
        %2298 = vmatprep.subr.mxu0 0.0
        %2299 = vmatpush2.msra.mxu0 0.0
        %2300 = vmatprep.subr.mxu0 0.0
        %2301 = vmatpush2.msra.mxu0 0.0
        %2302 = vmatprep.subr.mxu0 0.0
        %2303 = vmatpush2.msra.mxu0 0.0
        %2304 = vmatprep.subr.mxu0 0.0
        %2305 = vmatpush2.msra.mxu0 0.0
        %2306 = vmatprep.subr.mxu0 0.0
        %2307 = vmatpush2.msra.mxu0 0.0
        %2308 = vmatprep.subr.mxu0 0.0
        %2309 = vmatpush2.msra.mxu0 0.0
        %2310 = vmatprep.subr.mxu0 0.0
        %2311 = vmatpush2.msra.mxu0 0.0
        %2312 = vmatprep.subr.mxu0 0.0
        %2313 = vmatpush2.msra.mxu0 0.0
        %2314 = vmatprep.subr.mxu0 0.0
        %2315 = vmatpush2.msra.mxu0 0.0
        %2316 = vmatprep.subr.mxu0 0.0
        %2317 = vmatpush2.msra.mxu0 0.0
        %2318 = vmatprep.subr.mxu0 0.0
        %2319 = vmatpush2.msra.mxu0 0.0
        %2320 = vmatprep.subr.mxu0 0.0
        %2321 = vmatpush2.msra.mxu0 0.0
        %2322 = vmatprep.subr.mxu0 0.0
        %2323 = vmatpush2.msra.mxu0 0.0
        %2324 = vmatprep.mubr.f32.mxu0 0.0
        %2325 = vmatmul.mubr.f32.gmra.mxu0 %v2237
        %v2326 = vpop.f32.mrf.mxu0
        %v2327 = vadd.f32 %v2199, %v2326
        %v2328 = vpop.f32.mrf.mxu0
        %v2329 = vadd.f32 %v2199, %v2328
        %2330 = vmatprep.mubr.f32.mxu0 0.0
        %2331 = vmatmul.mubr.f32.gmra.mxu0 %v2240
        %v2332 = vpop.f32.mrf.mxu0
        %v2333 = vadd.f32 %v2204, %v2332
        %v2334 = vpop.f32.mrf.mxu0
        %v2335 = vadd.f32 %v2204, %v2334
        %2336 = vmatprep.mubr.f32.mxu0 0.0
        %2337 = vmatmul.mubr.f32.gmra.mxu0 %v2243
        %v2338 = vpop.f32.mrf.mxu0
        %v2339 = vadd.f32 %v2209, %v2338
        %v2340 = vpop.f32.mrf.mxu0
        %v2341 = vadd.f32 %v2209, %v2340
        %2342 = vmatprep.mubr.f32.mxu0 0.0
        %2343 = vmatmul.mubr.f32.gmra.mxu0 %v2246
        %v2344 = vpop.f32.mrf.mxu0
        %v2345 = vadd.f32 %v2214, %v2344
        %v2346 = vpop.f32.mrf.mxu0
        %v2347 = vadd.f32 %v2214, %v2346
        %2348 = vmatprep.mubr.f32.mxu0 0.0
        %2349 = vmatmul.mubr.f32.gmra.mxu0 %v2249
        %v2350 = vpop.f32.mrf.mxu0
        %v2351 = vadd.f32 %v2219, %v2350
        %v2352 = vpop.f32.mrf.mxu0
        %v2353 = vadd.f32 %v2219, %v2352
        %2354 = vmatprep.mubr.f32.mxu0 0.0
        %2355 = vmatmul.mubr.f32.gmra.mxu0 %v2252
        %v2356 = vpop.f32.mrf.mxu0
        %v2357 = vadd.f32 %v2224, %v2356
        %v2358 = vpop.f32.mrf.mxu0
        %v2359 = vadd.f32 %v2224, %v2358
        %2360 = vmatprep.mubr.f32.mxu0 0.0
        %2361 = vmatmul.mubr.f32.gmra.mxu0 %v2255
        %v2362 = vpop.f32.mrf.mxu0
        %v2363 = vadd.f32 %v2229, %v2362
        %v2364 = vpop.f32.mrf.mxu0
        %v2365 = vadd.f32 %v2229, %v2364
        %2366 = vmatprep.mubr.f32.mxu0 0.0
        %2367 = vmatmul.mubr.f32.gmra.mxu0 %v2258
        %v2368 = vpop.f32.mrf.mxu0
        %v2369 = vadd.f32 %v2234, %v2368
        %v2370 = vpop.f32.mrf.mxu0
        %v2371 = vadd.f32 %v2234, %v2370
        %2372 = vdwg.mxu0
        %2373 = vmatprep.subr.mxu0 0.0
        %2374 = vmatpush1.msra.mxu0 0.0
        %2375 = vmatprep.subr.mxu0 0.0
        %2376 = vmatpush1.msra.mxu0 0.0
        %2377 = vmatprep.subr.mxu0 0.0
        %2378 = vmatpush1.msra.mxu0 0.0
        %2379 = vmatprep.subr.mxu0 0.0
        %2380 = vmatpush1.msra.mxu0 0.0
        %2381 = vmatprep.subr.mxu0 0.0
        %2382 = vmatpush1.msra.mxu0 0.0
        %2383 = vmatprep.subr.mxu0 0.0
        %2384 = vmatpush1.msra.mxu0 0.0
        %2385 = vmatprep.subr.mxu0 0.0
        %2386 = vmatpush1.msra.mxu0 0.0
        %2387 = vmatprep.subr.mxu0 0.0
        %2388 = vmatpush1.msra.mxu0 0.0
        %2389 = vmatprep.subr.mxu0 %v2177
        %2390 = vmatpush1.msra.mxu0 %v2176
        %2391 = vmatprep.subr.mxu0 %v2173
        %2392 = vmatpush1.msra.mxu0 %v2172
        %2393 = vmatprep.subr.mxu0 %v2169
        %2394 = vmatpush1.msra.mxu0 %v2168
        %2395 = vmatprep.subr.mxu0 %v2165
        %2396 = vmatpush1.msra.mxu0 %v2164
        %2397 = vmatprep.subr.mxu0 %v2161
        %2398 = vmatpush1.msra.mxu0 %v2160
        %2399 = vmatprep.subr.mxu0 %v2157
        %2400 = vmatpush1.msra.mxu0 %v2156
        %2401 = vmatprep.subr.mxu0 %v2153
        %2402 = vmatpush1.msra.mxu0 %v2152
        %2403 = vmatprep.subr.mxu0 %v2149
        %2404 = vmatpush1.msra.mxu0 %v2148
        %2405 = vmatprep.subr.mxu0 0.0
        %2406 = vmatpush2.msra.mxu0 0.0
        %2407 = vmatprep.subr.mxu0 0.0
        %2408 = vmatpush2.msra.mxu0 0.0
        %2409 = vmatprep.subr.mxu0 0.0
        %2410 = vmatpush2.msra.mxu0 0.0
        %2411 = vmatprep.subr.mxu0 0.0
        %2412 = vmatpush2.msra.mxu0 0.0
        %2413 = vmatprep.subr.mxu0 0.0
        %2414 = vmatpush2.msra.mxu0 0.0
        %2415 = vmatprep.subr.mxu0 0.0
        %2416 = vmatpush2.msra.mxu0 0.0
        %2417 = vmatprep.subr.mxu0 0.0
        %2418 = vmatpush2.msra.mxu0 0.0
        %2419 = vmatprep.subr.mxu0 0.0
        %2420 = vmatpush2.msra.mxu0 0.0
        %2421 = vmatprep.subr.mxu0 0.0
        %2422 = vmatpush2.msra.mxu0 0.0
        %2423 = vmatprep.subr.mxu0 0.0
        %2424 = vmatpush2.msra.mxu0 0.0
        %2425 = vmatprep.subr.mxu0 0.0
        %2426 = vmatpush2.msra.mxu0 0.0
        %2427 = vmatprep.subr.mxu0 0.0
        %2428 = vmatpush2.msra.mxu0 0.0
        %2429 = vmatprep.subr.mxu0 0.0
        %2430 = vmatpush2.msra.mxu0 0.0
        %2431 = vmatprep.subr.mxu0 0.0
        %2432 = vmatpush2.msra.mxu0 0.0
        %2433 = vmatprep.subr.mxu0 0.0
        %2434 = vmatpush2.msra.mxu0 0.0
        %2435 = vmatprep.subr.mxu0 0.0
        %2436 = vmatpush2.msra.mxu0 0.0
        %2437 = vmatprep.mubr.f32.mxu0 0.0
        %2438 = vmatmul.mubr.f32.gmra.mxu0 %v2237
        %v2439 = vpop.f32.mrf.mxu0
        %v2440 = vadd.f32 %v2199, %v2439
        %v2441 = vpop.f32.mrf.mxu0
        %v2442 = vadd.f32 %v2199, %v2441
        %2443 = vmatprep.mubr.f32.mxu0 0.0
        %2444 = vmatmul.mubr.f32.gmra.mxu0 %v2240
        %v2445 = vpop.f32.mrf.mxu0
        %v2446 = vadd.f32 %v2204, %v2445
        %v2447 = vpop.f32.mrf.mxu0
        %v2448 = vadd.f32 %v2204, %v2447
        %2449 = vmatprep.mubr.f32.mxu0 0.0
        %2450 = vmatmul.mubr.f32.gmra.mxu0 %v2243
        %v2451 = vpop.f32.mrf.mxu0
        %v2452 = vadd.f32 %v2209, %v2451
        %v2453 = vpop.f32.mrf.mxu0
        %v2454 = vadd.f32 %v2209, %v2453
        %2455 = vmatprep.mubr.f32.mxu0 0.0
        %2456 = vmatmul.mubr.f32.gmra.mxu0 %v2246
        %v2457 = vpop.f32.mrf.mxu0
        %v2458 = vadd.f32 %v2214, %v2457
        %v2459 = vpop.f32.mrf.mxu0
        %v2460 = vadd.f32 %v2214, %v2459
        %2461 = vmatprep.mubr.f32.mxu0 0.0
        %2462 = vmatmul.mubr.f32.gmra.mxu0 %v2249
        %v2463 = vpop.f32.mrf.mxu0
        %v2464 = vadd.f32 %v2219, %v2463
        %v2465 = vpop.f32.mrf.mxu0
        %v2466 = vadd.f32 %v2219, %v2465
        %2467 = vmatprep.mubr.f32.mxu0 0.0
        %2468 = vmatmul.mubr.f32.gmra.mxu0 %v2252
        %v2469 = vpop.f32.mrf.mxu0
        %v2470 = vadd.f32 %v2224, %v2469
        %v2471 = vpop.f32.mrf.mxu0
        %v2472 = vadd.f32 %v2224, %v2471
        %2473 = vmatprep.mubr.f32.mxu0 0.0
        %2474 = vmatmul.mubr.f32.gmra.mxu0 %v2255
        %v2475 = vpop.f32.mrf.mxu0
        %v2476 = vadd.f32 %v2229, %v2475
        %v2477 = vpop.f32.mrf.mxu0
        %v2478 = vadd.f32 %v2229, %v2477
        %2479 = vmatprep.mubr.f32.mxu0 0.0
        %2480 = vmatmul.mubr.f32.gmra.mxu0 %v2258
        %v2481 = vpop.f32.mrf.mxu0
        %v2482 = vadd.f32 %v2234, %v2481
        %v2483 = vpop.f32.mrf.mxu0
        %v2484 = vadd.f32 %v2234, %v2483
        %2485 = vdwg.mxu0
        %v2486 = vmax.f32 %v2327, 0.0
        %v2487 = vmax.f32 %v2329, 0.0
        %v2488 = vmax.f32 %v2440, 0.0
        %v2489 = vmax.f32 %v2442, 0.0
        %v2490 = vmax.f32 %v2333, 0.0
        %v2491 = vmax.f32 %v2335, 0.0
        %v2492 = vmax.f32 %v2446, 0.0
        %v2493 = vmax.f32 %v2448, 0.0
        %v2494 = vmax.f32 %v2339, 0.0
        %v2495 = vmax.f32 %v2341, 0.0
        %v2496 = vmax.f32 %v2452, 0.0
        %v2497 = vmax.f32 %v2454, 0.0
        %v2498 = vmax.f32 %v2345, 0.0
        %v2499 = vmax.f32 %v2347, 0.0
        %v2500 = vmax.f32 %v2458, 0.0
        %v2501 = vmax.f32 %v2460, 0.0
        %v2502 = vmax.f32 %v2351, 0.0
        %v2503 = vmax.f32 %v2353, 0.0
        %v2504 = vmax.f32 %v2464, 0.0
        %v2505 = vmax.f32 %v2466, 0.0
        %v2506 = vmax.f32 %v2357, 0.0
        %v2507 = vmax.f32 %v2359, 0.0
        %v2508 = vmax.f32 %v2470, 0.0
        %v2509 = vmax.f32 %v2472, 0.0
        %v2510 = vmax.f32 %v2363, 0.0
        %v2511 = vmax.f32 %v2365, 0.0
        %v2512 = vmax.f32 %v2476, 0.0
        %v2513 = vmax.f32 %v2478, 0.0
        %v2514 = vmax.f32 %v2369, 0.0
        %v2515 = vmax.f32 %v2371, 0.0
        %v2516 = vmax.f32 %v2482, 0.0
        %v2517 = vmax.f32 %v2484, 0.0
        %s2518 = scalar_lea.vmem %s8, 64
        %v2519 = vld [vmem:[%s2518] sm:$0xff]
        %v2520 = vld [vmem:[%s2518 + $0x8] sm:$0xff]
        %v2521 = vld [vmem:[%s2518 + $0x10] sm:$0xff]
        %v2522 = vld [vmem:[%s2518 + $0x18] sm:$0xff]
        %v2523 = vld [vmem:[%s2518 + $0x20] sm:$0xff]
        %v2524 = vld [vmem:[%s2518 + $0x28] sm:$0xff]
        %v2525 = vld [vmem:[%s2518 + $0x30] sm:$0xff]
        %v2526 = vld [vmem:[%s2518 + $0x38] sm:$0xff]
        %s2527 = scalar_lea.vmem %s9, 64
        %v2528 = vld [vmem:[%s2527] sm:$0xff]
        %v2529 = vld [vmem:[%s2527 + $0x8] sm:$0xff]
        %v2530 = vld [vmem:[%s2527 + $0x10] sm:$0xff]
        %v2531 = vld [vmem:[%s2527 + $0x18] sm:$0xff]
        %v2532 = vld [vmem:[%s2527 + $0x20] sm:$0xff]
        %v2533 = vld [vmem:[%s2527 + $0x28] sm:$0xff]
        %v2534 = vld [vmem:[%s2527 + $0x30] sm:$0xff]
        %v2535 = vld [vmem:[%s2527 + $0x38] sm:$0xff]
        %2537 = vset.pattern.permute.xlu0 0
        %2538 = vperm.xlu0 %2537, %v2528
        %v2539 = vpop.permute.xlu0 %2538
        %2542 = vset.pattern.permute.xlu0 0
        %2543 = vperm.xlu0 %2542, %v2529
        %v2544 = vpop.permute.xlu0 %2543
        %2547 = vset.pattern.permute.xlu0 0
        %2548 = vperm.xlu0 %2547, %v2530
        %v2549 = vpop.permute.xlu0 %2548
        %2552 = vset.pattern.permute.xlu0 0
        %2553 = vperm.xlu0 %2552, %v2531
        %v2554 = vpop.permute.xlu0 %2553
        %2557 = vset.pattern.permute.xlu0 0
        %2558 = vperm.xlu0 %2557, %v2532
        %v2559 = vpop.permute.xlu0 %2558
        %2562 = vset.pattern.permute.xlu0 0
        %2563 = vperm.xlu0 %2562, %v2533
        %v2564 = vpop.permute.xlu0 %2563
        %2567 = vset.pattern.permute.xlu0 0
        %2568 = vperm.xlu0 %2567, %v2534
        %v2569 = vpop.permute.xlu0 %2568
        %2572 = vset.pattern.permute.xlu0 0
        %2573 = vperm.xlu0 %2572, %v2535
        %v2574 = vpop.permute.xlu0 %2573
        %v2577 = vsel %vm856, %v2519, 0
        %v2580 = vsel %vm856, %v2520, 0
        %v2583 = vsel %vm856, %v2521, 0
        %v2586 = vsel %vm856, %v2522, 0
        %v2589 = vsel %vm856, %v2523, 0
        %v2592 = vsel %vm856, %v2524, 0
        %v2595 = vsel %vm856, %v2525, 0
        %v2598 = vsel %vm856, %v2526, 0
        %2600 = vmatprep.subr.mxu0 0.0
        %2601 = vmatpush1.msra.mxu0 0.0
        %2602 = vmatprep.subr.mxu0 0.0
        %2603 = vmatpush1.msra.mxu0 0.0
        %2604 = vmatprep.subr.mxu0 0.0
        %2605 = vmatpush1.msra.mxu0 0.0
        %2606 = vmatprep.subr.mxu0 0.0
        %2607 = vmatpush1.msra.mxu0 0.0
        %2608 = vmatprep.subr.mxu0 0.0
        %2609 = vmatpush1.msra.mxu0 0.0
        %2610 = vmatprep.subr.mxu0 0.0
        %2611 = vmatpush1.msra.mxu0 0.0
        %2612 = vmatprep.subr.mxu0 0.0
        %2613 = vmatpush1.msra.mxu0 0.0
        %2614 = vmatprep.subr.mxu0 0.0
        %2615 = vmatpush1.msra.mxu0 0.0
        %2616 = vmatprep.subr.mxu0 %v2515
        %2617 = vmatpush1.msra.mxu0 %v2514
        %2618 = vmatprep.subr.mxu0 %v2511
        %2619 = vmatpush1.msra.mxu0 %v2510
        %2620 = vmatprep.subr.mxu0 %v2507
        %2621 = vmatpush1.msra.mxu0 %v2506
        %2622 = vmatprep.subr.mxu0 %v2503
        %2623 = vmatpush1.msra.mxu0 %v2502
        %2624 = vmatprep.subr.mxu0 %v2499
        %2625 = vmatpush1.msra.mxu0 %v2498
        %2626 = vmatprep.subr.mxu0 %v2495
        %2627 = vmatpush1.msra.mxu0 %v2494
        %2628 = vmatprep.subr.mxu0 %v2491
        %2629 = vmatpush1.msra.mxu0 %v2490
        %2630 = vmatprep.subr.mxu0 %v2487
        %2631 = vmatpush1.msra.mxu0 %v2486
        %2632 = vmatprep.subr.mxu0 0.0
        %2633 = vmatpush2.msra.mxu0 0.0
        %2634 = vmatprep.subr.mxu0 0.0
        %2635 = vmatpush2.msra.mxu0 0.0
        %2636 = vmatprep.subr.mxu0 0.0
        %2637 = vmatpush2.msra.mxu0 0.0
        %2638 = vmatprep.subr.mxu0 0.0
        %2639 = vmatpush2.msra.mxu0 0.0
        %2640 = vmatprep.subr.mxu0 0.0
        %2641 = vmatpush2.msra.mxu0 0.0
        %2642 = vmatprep.subr.mxu0 0.0
        %2643 = vmatpush2.msra.mxu0 0.0
        %2644 = vmatprep.subr.mxu0 0.0
        %2645 = vmatpush2.msra.mxu0 0.0
        %2646 = vmatprep.subr.mxu0 0.0
        %2647 = vmatpush2.msra.mxu0 0.0
        %2648 = vmatprep.subr.mxu0 0.0
        %2649 = vmatpush2.msra.mxu0 0.0
        %2650 = vmatprep.subr.mxu0 0.0
        %2651 = vmatpush2.msra.mxu0 0.0
        %2652 = vmatprep.subr.mxu0 0.0
        %2653 = vmatpush2.msra.mxu0 0.0
        %2654 = vmatprep.subr.mxu0 0.0
        %2655 = vmatpush2.msra.mxu0 0.0
        %2656 = vmatprep.subr.mxu0 0.0
        %2657 = vmatpush2.msra.mxu0 0.0
        %2658 = vmatprep.subr.mxu0 0.0
        %2659 = vmatpush2.msra.mxu0 0.0
        %2660 = vmatprep.subr.mxu0 0.0
        %2661 = vmatpush2.msra.mxu0 0.0
        %2662 = vmatprep.subr.mxu0 0.0
        %2663 = vmatpush2.msra.mxu0 0.0
        %2664 = vmatprep.mubr.f32.mxu0 0.0
        %2665 = vmatmul.mubr.f32.gmra.mxu0 %v2577
        %v2666 = vpop.f32.mrf.mxu0
        %v2667 = vadd.f32 %v2539, %v2666
        %v2668 = vpop.f32.mrf.mxu0
        %v2669 = vadd.f32 %v2539, %v2668
        %2670 = vmatprep.mubr.f32.mxu0 0.0
        %2671 = vmatmul.mubr.f32.gmra.mxu0 %v2580
        %v2672 = vpop.f32.mrf.mxu0
        %v2673 = vadd.f32 %v2544, %v2672
        %v2674 = vpop.f32.mrf.mxu0
        %v2675 = vadd.f32 %v2544, %v2674
        %2676 = vmatprep.mubr.f32.mxu0 0.0
        %2677 = vmatmul.mubr.f32.gmra.mxu0 %v2583
        %v2678 = vpop.f32.mrf.mxu0
        %v2679 = vadd.f32 %v2549, %v2678
        %v2680 = vpop.f32.mrf.mxu0
        %v2681 = vadd.f32 %v2549, %v2680
        %2682 = vmatprep.mubr.f32.mxu0 0.0
        %2683 = vmatmul.mubr.f32.gmra.mxu0 %v2586
        %v2684 = vpop.f32.mrf.mxu0
        %v2685 = vadd.f32 %v2554, %v2684
        %v2686 = vpop.f32.mrf.mxu0
        %v2687 = vadd.f32 %v2554, %v2686
        %2688 = vmatprep.mubr.f32.mxu0 0.0
        %2689 = vmatmul.mubr.f32.gmra.mxu0 %v2589
        %v2690 = vpop.f32.mrf.mxu0
        %v2691 = vadd.f32 %v2559, %v2690
        %v2692 = vpop.f32.mrf.mxu0
        %v2693 = vadd.f32 %v2559, %v2692
        %2694 = vmatprep.mubr.f32.mxu0 0.0
        %2695 = vmatmul.mubr.f32.gmra.mxu0 %v2592
        %v2696 = vpop.f32.mrf.mxu0
        %v2697 = vadd.f32 %v2564, %v2696
        %v2698 = vpop.f32.mrf.mxu0
        %v2699 = vadd.f32 %v2564, %v2698
        %2700 = vmatprep.mubr.f32.mxu0 0.0
        %2701 = vmatmul.mubr.f32.gmra.mxu0 %v2595
        %v2702 = vpop.f32.mrf.mxu0
        %v2703 = vadd.f32 %v2569, %v2702
        %v2704 = vpop.f32.mrf.mxu0
        %v2705 = vadd.f32 %v2569, %v2704
        %2706 = vmatprep.mubr.f32.mxu0 0.0
        %2707 = vmatmul.mubr.f32.gmra.mxu0 %v2598
        %v2708 = vpop.f32.mrf.mxu0
        %v2709 = vadd.f32 %v2574, %v2708
        %v2710 = vpop.f32.mrf.mxu0
        %v2711 = vadd.f32 %v2574, %v2710
        %2712 = vdwg.mxu0
        %2713 = vmatprep.subr.mxu0 0.0
        %2714 = vmatpush1.msra.mxu0 0.0
        %2715 = vmatprep.subr.mxu0 0.0
        %2716 = vmatpush1.msra.mxu0 0.0
        %2717 = vmatprep.subr.mxu0 0.0
        %2718 = vmatpush1.msra.mxu0 0.0
        %2719 = vmatprep.subr.mxu0 0.0
        %2720 = vmatpush1.msra.mxu0 0.0
        %2721 = vmatprep.subr.mxu0 0.0
        %2722 = vmatpush1.msra.mxu0 0.0
        %2723 = vmatprep.subr.mxu0 0.0
        %2724 = vmatpush1.msra.mxu0 0.0
        %2725 = vmatprep.subr.mxu0 0.0
        %2726 = vmatpush1.msra.mxu0 0.0
        %2727 = vmatprep.subr.mxu0 0.0
        %2728 = vmatpush1.msra.mxu0 0.0
        %2729 = vmatprep.subr.mxu0 %v2517
        %2730 = vmatpush1.msra.mxu0 %v2516
        %2731 = vmatprep.subr.mxu0 %v2513
        %2732 = vmatpush1.msra.mxu0 %v2512
        %2733 = vmatprep.subr.mxu0 %v2509
        %2734 = vmatpush1.msra.mxu0 %v2508
        %2735 = vmatprep.subr.mxu0 %v2505
        %2736 = vmatpush1.msra.mxu0 %v2504
        %2737 = vmatprep.subr.mxu0 %v2501
        %2738 = vmatpush1.msra.mxu0 %v2500
        %2739 = vmatprep.subr.mxu0 %v2497
        %2740 = vmatpush1.msra.mxu0 %v2496
        %2741 = vmatprep.subr.mxu0 %v2493
        %2742 = vmatpush1.msra.mxu0 %v2492
        %2743 = vmatprep.subr.mxu0 %v2489
        %2744 = vmatpush1.msra.mxu0 %v2488
        %2745 = vmatprep.subr.mxu0 0.0
        %2746 = vmatpush2.msra.mxu0 0.0
        %2747 = vmatprep.subr.mxu0 0.0
        %2748 = vmatpush2.msra.mxu0 0.0
        %2749 = vmatprep.subr.mxu0 0.0
        %2750 = vmatpush2.msra.mxu0 0.0
        %2751 = vmatprep.subr.mxu0 0.0
        %2752 = vmatpush2.msra.mxu0 0.0
        %2753 = vmatprep.subr.mxu0 0.0
        %2754 = vmatpush2.msra.mxu0 0.0
        %2755 = vmatprep.subr.mxu0 0.0
        %2756 = vmatpush2.msra.mxu0 0.0
        %2757 = vmatprep.subr.mxu0 0.0
        %2758 = vmatpush2.msra.mxu0 0.0
        %2759 = vmatprep.subr.mxu0 0.0
        %2760 = vmatpush2.msra.mxu0 0.0
        %2761 = vmatprep.subr.mxu0 0.0
        %2762 = vmatpush2.msra.mxu0 0.0
        %2763 = vmatprep.subr.mxu0 0.0
        %2764 = vmatpush2.msra.mxu0 0.0
        %2765 = vmatprep.subr.mxu0 0.0
        %2766 = vmatpush2.msra.mxu0 0.0
        %2767 = vmatprep.subr.mxu0 0.0
        %2768 = vmatpush2.msra.mxu0 0.0
        %2769 = vmatprep.subr.mxu0 0.0
        %2770 = vmatpush2.msra.mxu0 0.0
        %2771 = vmatprep.subr.mxu0 0.0
        %2772 = vmatpush2.msra.mxu0 0.0
        %2773 = vmatprep.subr.mxu0 0.0
        %2774 = vmatpush2.msra.mxu0 0.0
        %2775 = vmatprep.subr.mxu0 0.0
        %2776 = vmatpush2.msra.mxu0 0.0
        %2777 = vmatprep.mubr.f32.mxu0 0.0
        %2778 = vmatmul.mubr.f32.gmra.mxu0 %v2577
        %v2779 = vpop.f32.mrf.mxu0
        %v2780 = vadd.f32 %v2539, %v2779
        %v2781 = vpop.f32.mrf.mxu0
        %v2782 = vadd.f32 %v2539, %v2781
        %2783 = vmatprep.mubr.f32.mxu0 0.0
        %2784 = vmatmul.mubr.f32.gmra.mxu0 %v2580
        %v2785 = vpop.f32.mrf.mxu0
        %v2786 = vadd.f32 %v2544, %v2785
        %v2787 = vpop.f32.mrf.mxu0
        %v2788 = vadd.f32 %v2544, %v2787
        %2789 = vmatprep.mubr.f32.mxu0 0.0
        %2790 = vmatmul.mubr.f32.gmra.mxu0 %v2583
        %v2791 = vpop.f32.mrf.mxu0
        %v2792 = vadd.f32 %v2549, %v2791
        %v2793 = vpop.f32.mrf.mxu0
        %v2794 = vadd.f32 %v2549, %v2793
        %2795 = vmatprep.mubr.f32.mxu0 0.0
        %2796 = vmatmul.mubr.f32.gmra.mxu0 %v2586
        %v2797 = vpop.f32.mrf.mxu0
        %v2798 = vadd.f32 %v2554, %v2797
        %v2799 = vpop.f32.mrf.mxu0
        %v2800 = vadd.f32 %v2554, %v2799
        %2801 = vmatprep.mubr.f32.mxu0 0.0
        %2802 = vmatmul.mubr.f32.gmra.mxu0 %v2589
        %v2803 = vpop.f32.mrf.mxu0
        %v2804 = vadd.f32 %v2559, %v2803
        %v2805 = vpop.f32.mrf.mxu0
        %v2806 = vadd.f32 %v2559, %v2805
        %2807 = vmatprep.mubr.f32.mxu0 0.0
        %2808 = vmatmul.mubr.f32.gmra.mxu0 %v2592
        %v2809 = vpop.f32.mrf.mxu0
        %v2810 = vadd.f32 %v2564, %v2809
        %v2811 = vpop.f32.mrf.mxu0
        %v2812 = vadd.f32 %v2564, %v2811
        %2813 = vmatprep.mubr.f32.mxu0 0.0
        %2814 = vmatmul.mubr.f32.gmra.mxu0 %v2595
        %v2815 = vpop.f32.mrf.mxu0
        %v2816 = vadd.f32 %v2569, %v2815
        %v2817 = vpop.f32.mrf.mxu0
        %v2818 = vadd.f32 %v2569, %v2817
        %2819 = vmatprep.mubr.f32.mxu0 0.0
        %2820 = vmatmul.mubr.f32.gmra.mxu0 %v2598
        %v2821 = vpop.f32.mrf.mxu0
        %v2822 = vadd.f32 %v2574, %v2821
        %v2823 = vpop.f32.mrf.mxu0
        %v2824 = vadd.f32 %v2574, %v2823
        %2825 = vdwg.mxu0
        %v2826 = vadd.f32 %v2146, %v2667
        %v2827 = vadd.f32 %v2147, %v2669
        %v2828 = vadd.f32 %v2148, %v2780
        %v2829 = vadd.f32 %v2149, %v2782
        %v2830 = vadd.f32 %v2150, %v2673
        %v2831 = vadd.f32 %v2151, %v2675
        %v2832 = vadd.f32 %v2152, %v2786
        %v2833 = vadd.f32 %v2153, %v2788
        %v2834 = vadd.f32 %v2154, %v2679
        %v2835 = vadd.f32 %v2155, %v2681
        %v2836 = vadd.f32 %v2156, %v2792
        %v2837 = vadd.f32 %v2157, %v2794
        %v2838 = vadd.f32 %v2158, %v2685
        %v2839 = vadd.f32 %v2159, %v2687
        %v2840 = vadd.f32 %v2160, %v2798
        %v2841 = vadd.f32 %v2161, %v2800
        %v2842 = vadd.f32 %v2162, %v2691
        %v2843 = vadd.f32 %v2163, %v2693
        %v2844 = vadd.f32 %v2164, %v2804
        %v2845 = vadd.f32 %v2165, %v2806
        %v2846 = vadd.f32 %v2166, %v2697
        %v2847 = vadd.f32 %v2167, %v2699
        %v2848 = vadd.f32 %v2168, %v2810
        %v2849 = vadd.f32 %v2169, %v2812
        %v2850 = vadd.f32 %v2170, %v2703
        %v2851 = vadd.f32 %v2171, %v2705
        %v2852 = vadd.f32 %v2172, %v2816
        %v2853 = vadd.f32 %v2173, %v2818
        %v2854 = vadd.f32 %v2174, %v2709
        %v2855 = vadd.f32 %v2175, %v2711
        %v2856 = vadd.f32 %v2176, %v2822
        %v2857 = vadd.f32 %v2177, %v2824
        %v2858 = vmax.f32 %v2826, 0.0
        %v2859 = vmax.f32 %v2827, 0.0
        %v2860 = vmax.f32 %v2828, 0.0
        %v2861 = vmax.f32 %v2829, 0.0
        %v2862 = vmax.f32 %v2830, 0.0
        %v2863 = vmax.f32 %v2831, 0.0
        %v2864 = vmax.f32 %v2832, 0.0
        %v2865 = vmax.f32 %v2833, 0.0
        %v2866 = vmax.f32 %v2834, 0.0
        %v2867 = vmax.f32 %v2835, 0.0
        %v2868 = vmax.f32 %v2836, 0.0
        %v2869 = vmax.f32 %v2837, 0.0
        %v2870 = vmax.f32 %v2838, 0.0
        %v2871 = vmax.f32 %v2839, 0.0
        %v2872 = vmax.f32 %v2840, 0.0
        %v2873 = vmax.f32 %v2841, 0.0
        %v2874 = vmax.f32 %v2842, 0.0
        %v2875 = vmax.f32 %v2843, 0.0
        %v2876 = vmax.f32 %v2844, 0.0
        %v2877 = vmax.f32 %v2845, 0.0
        %v2878 = vmax.f32 %v2846, 0.0
        %v2879 = vmax.f32 %v2847, 0.0
        %v2880 = vmax.f32 %v2848, 0.0
        %v2881 = vmax.f32 %v2849, 0.0
        %v2882 = vmax.f32 %v2850, 0.0
        %v2883 = vmax.f32 %v2851, 0.0
        %v2884 = vmax.f32 %v2852, 0.0
        %v2885 = vmax.f32 %v2853, 0.0
        %v2886 = vmax.f32 %v2854, 0.0
        %v2887 = vmax.f32 %v2855, 0.0
        %v2888 = vmax.f32 %v2856, 0.0
        %v2889 = vmax.f32 %v2857, 0.0
        %v2890 = vld [vmem:[%s10] sm:$0x1]
        %v2891 = vld [vmem:[%s468] sm:$0x1]
        %2893 = vset.pattern.permute.xlu0 0
        %2894 = vperm.xlu0 %2893, %v2891
        %v2895 = vpop.permute.xlu0 %2894
        %v2897 = vlaneseq
        %v2898 = vshrl.u32 %v2897, 7
        %v2899 = vsub.s32 0, %v2898
        %v2900 = vrot.slane %v2895, %v2899
        %v2902 = vsel %vm856, %v2890, 0
        %2904 = vmatprep.subr.mxu0 0.0
        %2905 = vmatpush1.msra.mxu0 0.0
        %2906 = vmatprep.subr.mxu0 0.0
        %2907 = vmatpush1.msra.mxu0 0.0
        %2908 = vmatprep.subr.mxu0 0.0
        %2909 = vmatpush1.msra.mxu0 0.0
        %2910 = vmatprep.subr.mxu0 0.0
        %2911 = vmatpush1.msra.mxu0 0.0
        %2912 = vmatprep.subr.mxu0 0.0
        %2913 = vmatpush1.msra.mxu0 0.0
        %2914 = vmatprep.subr.mxu0 0.0
        %2915 = vmatpush1.msra.mxu0 0.0
        %2916 = vmatprep.subr.mxu0 0.0
        %2917 = vmatpush1.msra.mxu0 0.0
        %2918 = vmatprep.subr.mxu0 0.0
        %2919 = vmatpush1.msra.mxu0 0.0
        %2920 = vmatprep.subr.mxu0 %v2887
        %2921 = vmatpush1.msra.mxu0 %v2886
        %2922 = vmatprep.subr.mxu0 %v2883
        %2923 = vmatpush1.msra.mxu0 %v2882
        %2924 = vmatprep.subr.mxu0 %v2879
        %2925 = vmatpush1.msra.mxu0 %v2878
        %2926 = vmatprep.subr.mxu0 %v2875
        %2927 = vmatpush1.msra.mxu0 %v2874
        %2928 = vmatprep.subr.mxu0 %v2871
        %2929 = vmatpush1.msra.mxu0 %v2870
        %2930 = vmatprep.subr.mxu0 %v2867
        %2931 = vmatpush1.msra.mxu0 %v2866
        %2932 = vmatprep.subr.mxu0 %v2863
        %2933 = vmatpush1.msra.mxu0 %v2862
        %2934 = vmatprep.subr.mxu0 %v2859
        %2935 = vmatpush1.msra.mxu0 %v2858
        %2936 = vmatprep.subr.mxu0 0.0
        %2937 = vmatpush2.msra.mxu0 0.0
        %2938 = vmatprep.subr.mxu0 0.0
        %2939 = vmatpush2.msra.mxu0 0.0
        %2940 = vmatprep.subr.mxu0 0.0
        %2941 = vmatpush2.msra.mxu0 0.0
        %2942 = vmatprep.subr.mxu0 0.0
        %2943 = vmatpush2.msra.mxu0 0.0
        %2944 = vmatprep.subr.mxu0 0.0
        %2945 = vmatpush2.msra.mxu0 0.0
        %2946 = vmatprep.subr.mxu0 0.0
        %2947 = vmatpush2.msra.mxu0 0.0
        %2948 = vmatprep.subr.mxu0 0.0
        %2949 = vmatpush2.msra.mxu0 0.0
        %2950 = vmatprep.subr.mxu0 0.0
        %2951 = vmatpush2.msra.mxu0 0.0
        %2952 = vmatprep.subr.mxu0 0.0
        %2953 = vmatpush2.msra.mxu0 0.0
        %2954 = vmatprep.subr.mxu0 0.0
        %2955 = vmatpush2.msra.mxu0 0.0
        %2956 = vmatprep.subr.mxu0 0.0
        %2957 = vmatpush2.msra.mxu0 0.0
        %2958 = vmatprep.subr.mxu0 0.0
        %2959 = vmatpush2.msra.mxu0 0.0
        %2960 = vmatprep.subr.mxu0 0.0
        %2961 = vmatpush2.msra.mxu0 0.0
        %2962 = vmatprep.subr.mxu0 0.0
        %2963 = vmatpush2.msra.mxu0 0.0
        %2964 = vmatprep.subr.mxu0 0.0
        %2965 = vmatpush2.msra.mxu0 0.0
        %2966 = vmatprep.subr.mxu0 0.0
        %2967 = vmatpush2.msra.mxu0 0.0
        %2968 = vmatprep.mubr.f32.mxu0 0.0
        %2969 = vmatmul.mubr.f32.gmra.mxu0 %v2902
        %v2970 = vpop.f32.mrf.mxu0
        %v2971 = vadd.f32 %v2900, %v2970
        %v2972 = vpop.f32.mrf.mxu0
        %v2973 = vadd.f32 %v2900, %v2972
        %2974 = vdwg.mxu0
        %2975 = vmatprep.subr.mxu0 0.0
        %2976 = vmatpush1.msra.mxu0 0.0
        %2977 = vmatprep.subr.mxu0 0.0
        %2978 = vmatpush1.msra.mxu0 0.0
        %2979 = vmatprep.subr.mxu0 0.0
        %2980 = vmatpush1.msra.mxu0 0.0
        %2981 = vmatprep.subr.mxu0 0.0
        %2982 = vmatpush1.msra.mxu0 0.0
        %2983 = vmatprep.subr.mxu0 0.0
        %2984 = vmatpush1.msra.mxu0 0.0
        %2985 = vmatprep.subr.mxu0 0.0
        %2986 = vmatpush1.msra.mxu0 0.0
        %2987 = vmatprep.subr.mxu0 0.0
        %2988 = vmatpush1.msra.mxu0 0.0
        %2989 = vmatprep.subr.mxu0 0.0
        %2990 = vmatpush1.msra.mxu0 0.0
        %2991 = vmatprep.subr.mxu0 %v2889
        %2992 = vmatpush1.msra.mxu0 %v2888
        %2993 = vmatprep.subr.mxu0 %v2885
        %2994 = vmatpush1.msra.mxu0 %v2884
        %2995 = vmatprep.subr.mxu0 %v2881
        %2996 = vmatpush1.msra.mxu0 %v2880
        %2997 = vmatprep.subr.mxu0 %v2877
        %2998 = vmatpush1.msra.mxu0 %v2876
        %2999 = vmatprep.subr.mxu0 %v2873
        %3000 = vmatpush1.msra.mxu0 %v2872
        %3001 = vmatprep.subr.mxu0 %v2869
        %3002 = vmatpush1.msra.mxu0 %v2868
        %3003 = vmatprep.subr.mxu0 %v2865
        %3004 = vmatpush1.msra.mxu0 %v2864
        %3005 = vmatprep.subr.mxu0 %v2861
        %3006 = vmatpush1.msra.mxu0 %v2860
        %3007 = vmatprep.subr.mxu0 0.0
        %3008 = vmatpush2.msra.mxu0 0.0
        %3009 = vmatprep.subr.mxu0 0.0
        %3010 = vmatpush2.msra.mxu0 0.0
        %3011 = vmatprep.subr.mxu0 0.0
        %3012 = vmatpush2.msra.mxu0 0.0
        %3013 = vmatprep.subr.mxu0 0.0
        %3014 = vmatpush2.msra.mxu0 0.0
        %3015 = vmatprep.subr.mxu0 0.0
        %3016 = vmatpush2.msra.mxu0 0.0
        %3017 = vmatprep.subr.mxu0 0.0
        %3018 = vmatpush2.msra.mxu0 0.0
        %3019 = vmatprep.subr.mxu0 0.0
        %3020 = vmatpush2.msra.mxu0 0.0
        %3021 = vmatprep.subr.mxu0 0.0
        %3022 = vmatpush2.msra.mxu0 0.0
        %3023 = vmatprep.subr.mxu0 0.0
        %3024 = vmatpush2.msra.mxu0 0.0
        %3025 = vmatprep.subr.mxu0 0.0
        %3026 = vmatpush2.msra.mxu0 0.0
        %3027 = vmatprep.subr.mxu0 0.0
        %3028 = vmatpush2.msra.mxu0 0.0
        %3029 = vmatprep.subr.mxu0 0.0
        %3030 = vmatpush2.msra.mxu0 0.0
        %3031 = vmatprep.subr.mxu0 0.0
        %3032 = vmatpush2.msra.mxu0 0.0
        %3033 = vmatprep.subr.mxu0 0.0
        %3034 = vmatpush2.msra.mxu0 0.0
        %3035 = vmatprep.subr.mxu0 0.0
        %3036 = vmatpush2.msra.mxu0 0.0
        %3037 = vmatprep.subr.mxu0 0.0
        %3038 = vmatpush2.msra.mxu0 0.0
        %3039 = vmatprep.mubr.f32.mxu0 0.0
        %3040 = vmatmul.mubr.f32.gmra.mxu0 %v2902
        %v3041 = vpop.f32.mrf.mxu0
        %v3042 = vadd.f32 %v2900, %v3041
        %v3043 = vpop.f32.mrf.mxu0
        %v3044 = vadd.f32 %v2900, %v3043
        %3045 = vdwg.mxu0
        %v3050 = vcombine.low %v2971, %v2973
        %v3051 = vcombine.low %v3042, %v3044
        %v3053 = vunpack.c.l.s4 1966171168
        %v3054 = vunpack.c.0.s8 %v3053
        %v3055 = vlaneseq
        %v3056 = vshrl.u32 %v3055, 7
        %v3057 = vsub.s32 %v3054, %v3056
        %v3058 = vrot.slane %v3050, %v3057
        %v3060 = vunpack.c.l.s4 1966171168
        %v3061 = vunpack.c.0.s8 %v3060
        %v3062 = vlaneseq
        %v3063 = vshrl.u32 %v3062, 7
        %v3064 = vsub.s32 %v3061, %v3063
        %v3065 = vrot.slane %v3051, %v3064
        %v3066 = vcombine.low %v3058, %v3065
        %v3068 = vunpack.c.l.s4 1966171168
        %v3069 = vunpack.c.0.s8 %v3068
        %v3070 = vlaneseq
        %v3071 = vshrl.u32 %v3070, 7
        %v3072 = vsub.s32 %v3069, %v3071
        %v3073 = vrot.slane %v3066, %v3072
        %v3075 = vlaneseq
        %vm3076 = vcmp.ge.s32.totalorder %v3075, 0
        %vm3077 = vcmp.lt.s32.totalorder %v3075, 512
        %vm3078 = vmand %vm3076, %vm3077
        %3079 = vst.msk [vmem:[%s445] sm:$0xf] %vm3078, %v3073
        %s3080 = sand.u32 %s300, 1
        %s3081 = scalar_lea.sflag [#allocation3], %s3080
        %s3082 = sand.u32 %s300, 1
        %s3083 = smul.addr %s3082, 4
        %s3084 = scalar_lea.vmem [#allocation2], %s3083
        // Predicated region
        $region65: #{tpu_custom_call.1} parent=63 // pred_check
          %p3085 = pneg %p310
        $region66: #{tpu_custom_call.1} parent=63 // pred_check_branch
          %3087 = sbr.rel (%p3085) target = $region68
        $region67: #{tpu_custom_call.1} parent=63 // pred_region
          %s3088 = smul.u32 4, %s30
          %s3090 = ssub.s32 64, 64
          %3091 = vsyncadd %s3081, %s3090
          %s3092 = smul.addr %s29, 8
          %s3093 = sadd.s32 %s3088, %s3092
          %s3094 = smul.addr %s3093, 16
          %s3095 = scalar_lea.hbm %s11, %s3094
          %s3097 = sshll.u32 %s3084, 4
          %s3098 = int_to_ptr.vmem [resolvable:$true] %s3097
          %3100 = dma.vmem_to_hbm [thread:$0]  %s3098, 64, %s3095, %s3081
        $region68: #{tpu_custom_call.1} parent=63 // pred_fallthru
          _
      $region64: #{tpu_custom_call.1} parent=5 // pred_fallthru
        _
      %p3101 = scmp.le.s32.totalorder 2, %s20
      // Predicated region
      $region69: #{tpu_custom_call.1} parent=5 // pred_check
        %p3102 = pneg %p3101
      $region70: #{tpu_custom_call.1} parent=5 // pred_check_branch
        %3104 = sbr.rel (%p3102) target = $region72
      $region71: #{tpu_custom_call.1} parent=5 // pred_region
        %s3105 = ssub.s32 %s20, 2
        // Predicated region
        $region73: #{tpu_custom_call.1} parent=71 // pred_check
          %p3106 = pneg %p316
        $region74: #{tpu_custom_call.1} parent=71 // pred_check_branch
          %3108 = sbr.rel (%p3106) target = $region76
        $region75: #{tpu_custom_call.1} parent=71 // pred_region
          %s3109 = sand.u32 %s301, 1
          %s3110 = scalar_lea.sflag [#allocation3], %s3109
          %s3111 = sand.u32 %s301, 1
          %s3112 = smul.addr %s3111, 4
          %s3113 = scalar_lea.vmem [#allocation2], %s3112
          %3114 = dma.done %s3110, 64
        $region76: #{tpu_custom_call.1} parent=71 // pred_fallthru
          _
      $region72: #{tpu_custom_call.1} parent=5 // pred_fallthru
        _
    $region6: #{tpu_custom_call.1} parent=1 // loop_footer
      %s24 = sadd.s32 1, %s20
    $region7: #{tpu_custom_call.1} parent=1 // loop_footer_branch
      %19 = sbr.rel target = $region3
    $region8: #{tpu_custom_call.1} parent=1 // loop_exit
      _
    %3115 = vsyncpa [#allocation3], 1
    %s3116 = scalar_lea.sflag [#allocation3], 1
    %3117 = vsyncpa %s3116, 1

</llo_original>
